<compile_context>
chip_gen: v5e
topology: v5e:2x2
jax: 0.10.0
libtpu: 0.0.40
codegen_flags: <defaults>
</compile_context>

<pallas_src>
import functools

import numpy as np
import jax
import jax.numpy as jnp
from jax.experimental import pallas as pl
from jax.experimental.pallas import tpu as pltpu

LANE = 128


def _round_up(n, m=LANE):
    return ((n + m - 1) // m) * m


# ---------------------------------------------------------------------------
# Pallas kernel: in-kernel im2col (tap accumulation) + bias + ReLU
# ---------------------------------------------------------------------------
def _conv_relu_kernel(x_ref, w_ref, b_ref, o_ref, acc_ref, *, ksize, H, W):
    # x_ref:  (1, H+2p, W+2p, CP)   spatially padded, channel-padded NHWC tile
    # w_ref:  (ksize*ksize, CP, CoutP)
    # b_ref:  (1, CoutP)
    # o_ref:  (1, H, W, CoutP)
    # acc_ref: (H*W, CoutP) f32 scratch accumulator
    CP = x_ref.shape[-1]
    acc_ref[...] = jnp.zeros_like(acc_ref)
    for kh in range(ksize):                     # static unroll: ksize^2 MXU taps
        for kw in range(ksize):
            xs = x_ref[0, kh:kh + H, kw:kw + W, :].reshape(H * W, CP)
            acc_ref[...] += jnp.dot(
                xs, w_ref[kh * ksize + kw],
                preferred_element_type=jnp.float32)
    out = jnp.maximum(acc_ref[...] + b_ref[...], 0.0)
    o_ref[...] = out.reshape(o_ref.shape).astype(o_ref.dtype)


def conv2d_relu_pallas(x_nhwc, wmat, bias_row, ksize):
    """Conv2d(stride=1, padding=ksize//2) + bias + ReLU.

    x_nhwc:   (B, H, W, CP)        channel-padded NHWC activation
    wmat:     (ksize*ksize, CP, CoutP)
    bias_row: (1, CoutP)
    returns   (B, H, W, CoutP)
    """
    B, H, W, CP = x_nhwc.shape
    CoutP = wmat.shape[-1]
    pad = ksize // 2
    xp = jnp.pad(x_nhwc, ((0, 0), (pad, pad), (pad, pad), (0, 0)))
    Hp, Wp = H + 2 * pad, W + 2 * pad

    kernel = functools.partial(_conv_relu_kernel, ksize=ksize, H=H, W=W)
    flops = 2 * B * H * W * ksize * ksize * CP * CoutP
    bytes_accessed = 4 * (B * Hp * Wp * CP
                          + ksize * ksize * CP * CoutP
                          + CoutP
                          + B * H * W * CoutP)

    return pl.pallas_call(
        kernel,
        out_shape=jax.ShapeDtypeStruct((B, H, W, CoutP), x_nhwc.dtype),
        grid=(B,),
        in_specs=[
            pl.BlockSpec((1, Hp, Wp, CP), lambda b: (b, 0, 0, 0)),
            pl.BlockSpec((ksize * ksize, CP, CoutP), lambda b: (0, 0, 0)),
            pl.BlockSpec((1, CoutP), lambda b: (0, 0)),
        ],
        out_specs=pl.BlockSpec((1, H, W, CoutP), lambda b: (b, 0, 0, 0)),
        scratch_shapes=[pltpu.VMEM((H * W, CoutP), jnp.float32)],
        compiler_params=pltpu.CompilerParams(
            dimension_semantics=("parallel",)),
        cost_estimate=pl.CostEstimate(
            flops=flops, transcendentals=0, bytes_accessed=bytes_accessed),
    )(xp, wmat, bias_row)


# ---------------------------------------------------------------------------
# Whole per-choice forward chain under one jit (NHWC + padded channels inside)
# ---------------------------------------------------------------------------
@functools.partial(jax.jit, static_argnums=(2, 3))
def _spos_forward_jit(x_nchw, params, ksizes, couts):
    B, C, H, W = x_nchw.shape
    CP = params[0][0].shape[1]                     # padded Cin of first layer
    x = jnp.transpose(x_nchw, (0, 2, 3, 1))        # NCHW -> NHWC, once
    x = jnp.pad(x, ((0, 0), (0, 0), (0, 0), (0, CP - C)))
    outs = []
    cur = x
    for (wmat, brow), ks, cout in zip(params, ksizes, couts):
        cur = conv2d_relu_pallas(cur, wmat, brow, ks)
        # per-layer returned output: slice off channel padding, back to NCHW
        outs.append(jnp.transpose(cur[..., :cout], (0, 3, 1, 2)))
    return tuple(outs)


# ---------------------------------------------------------------------------
# SPOS supernet (forward-pass semantics of the PyTorch module)
# ---------------------------------------------------------------------------
class SPOSPallas:
    def __init__(self, task):
        # task: list (layers) of lists (candidates) of (weight_OIHW, bias)
        self._task_candidate_len = [len(t) for t in task]
        self._layers = []
        for layer in task:
            cands = []
            for (w, b) in layer:
                cout, cin, kh, kw = w.shape
                assert kh == kw, "square kernels only"
                ks = int(kh)
                CP, CoutP = _round_up(cin), _round_up(cout)
                # [Cout,Cin,KH,KW] -> [KH,KW,Cin,Cout] -> [ks*ks, Cin, Cout], pad to lanes
                wmat = jnp.transpose(w, (2, 3, 1, 0)).reshape(ks * ks, cin, cout)
                wmat = jnp.pad(wmat, ((0, 0), (0, CP - cin), (0, CoutP - cout)))
                brow = jnp.pad(b, (0, CoutP - cout)).reshape(1, CoutP)
                cands.append((wmat, brow, ks, int(cout)))
            self._layers.append(cands)

    @staticmethod
    def _random_index(task_candidate_len):
        return [int(np.random.randint(i)) for i in task_candidate_len]

    def forward(self, x, choice=None):
        if choice is None:
            choice = self._random_index(self._task_candidate_len)
        params = tuple((self._layers[i][c][0], self._layers[i][c][1])
                       for i, c in enumerate(choice))
        ksizes = tuple(self._layers[i][c][2] for i, c in enumerate(choice))
        couts = tuple(self._layers[i][c][3] for i, c in enumerate(choice))
        outs = _spos_forward_jit(x, params, ksizes, couts)
        return list(outs), choice

    __call__ = forward

    # TODO(synk): fit() (training loop, early stopping, checkpoint IO, logging)
    # is host-side orchestration with no Pallas equivalent; only forward() is
    # implemented here.


# ---------------------------------------------------------------------------
# main
# ---------------------------------------------------------------------------
if __name__ == "__main__":
    key = jax.random.PRNGKey(0)
    B, C, H, W = 2, 4, 16, 16

    # Deterministic supernet: 2 layers, each with [conv3x3, conv1x1] choice
    # blocks, all C->C channels.
    ksizes_per_layer = [[3, 1], [3, 1]]
    task = []
    for layer_ks in ksizes_per_layer:
        layer = []
        for k in layer_ks:
            key, kw_key, kb_key = jax.random.split(key, 3)
            w = 0.1 * jax.random.normal(kw_key, (C, C, k, k), dtype=jnp.float32)
            b = 0.1 * jax.random.normal(kb_key, (C,), dtype=jnp.float32)
            layer.append((w, b))
        task.append(layer)

    model = SPOSPallas(task)

    key, xk = jax.random.split(key)
    x = jax.random.normal(xk, (B, C, H, W), dtype=jnp.float32)

    # deterministic architecture choice (one candidate index per layer)
    choice = [0, 1]
    outputs, used_choice = model(x, choice=choice)
    for o in outputs:
        jax.block_until_ready(o)

    # correctness check vs plain-XLA conv reference
    def ref_forward(x, task, choice):
        outs, cur = [], x
        for layer_num, idx in enumerate(choice):
            w, b = task[layer_num][idx]
            k = w.shape[-1]
            pad = k // 2
            y = jax.lax.conv_general_dilated(
                cur, w, window_strides=(1, 1),
                padding=((pad, pad), (pad, pad)),
                dimension_numbers=("NCHW", "OIHW", "NCHW"))
            y = jax.nn.relu(y + b.reshape(1, -1, 1, 1))
            outs.append(y)
            cur = y
        return outs

    refs = ref_forward(x, task, choice)
    for o, r in zip(outputs, refs):
        np.testing.assert_allclose(np.asarray(o), np.asarray(r),
                                   atol=2e-5, rtol=2e-5)

    assert used_choice == choice
    assert all(o.shape == (B, C, H, W) for o in outputs)
    print("KERNEL_OK")
</pallas_src>

<mosaic_0001>
module attributes {stable_mosaic.version = 11 : i64} {
  func.func @_conv_relu_kernel(%arg0: i32, %arg1: memref<1x18x18x128xf32, #tpu.memory_space<vmem>>, %arg2: memref<9x128x128xf32, #tpu.memory_space<vmem>>, %arg3: memref<1x128xf32, #tpu.memory_space<vmem>>, %arg4: memref<1x16x16x128xf32, #tpu.memory_space<vmem>>, %arg5: memref<256x128xf32, #tpu.memory_space<vmem>>) attributes {dimension_semantics = [#tpu.dimension_semantics<parallel>], iteration_bounds = array<i64: 2>, scalar_prefetch = 0 : i64, scratch_operands = 1 : i64, tpu.core_type = #tpu.core_type<tc>, window_params = [{transform_indices = @transform_0, window_bounds = array<i64: 1, 18, 18, 128>}, {pipeline_mode = #tpu.pipeline_mode<synchronous>, transform_indices = @transform_1, window_bounds = array<i64: 9, 128, 128>}, {pipeline_mode = #tpu.pipeline_mode<synchronous>, transform_indices = @transform_2, window_bounds = array<i64: 1, 128>}, {transform_indices = @transform_3, window_bounds = array<i64: 1, 16, 16, 128>}]} {
    %cst = arith.constant 0.000000e+00 : f32
    %0 = vector.broadcast %cst : f32 to vector<256x128xf32>
    %c0 = arith.constant 0 : index
    %c0_0 = arith.constant 0 : index
    %1 = vector.load %arg5[%c0, %c0_0] : memref<256x128xf32, #tpu.memory_space<vmem>>, vector<256x128xf32>
    tpu.vector_store %arg5[%c0, %c0_0], %0 {strides = array<i32>} : memref<256x128xf32, #tpu.memory_space<vmem>>, vector<256x128xf32>,
    %c0_1 = arith.constant 0 : index
    %c0_2 = arith.constant 0 : index
    %c0_3 = arith.constant 0 : index
    %c0_4 = arith.constant 0 : index
    %2 = vector.load %arg1[%c0_1, %c0_2, %c0_3, %c0_4] : memref<1x18x18x128xf32, #tpu.memory_space<vmem>>, vector<1x16x16x128xf32>
    %3 = vector.shape_cast %2 : vector<1x16x16x128xf32> to vector<16x16x128xf32>
    %4 = vector.shape_cast %3 : vector<16x16x128xf32> to vector<256x128xf32>
    %c0_5 = arith.constant 0 : index
    %c0_6 = arith.constant 0 : index
    %5 = vector.load %arg5[%c0_5, %c0_6] : memref<256x128xf32, #tpu.memory_space<vmem>>, vector<256x128xf32>
    %c0_7 = arith.constant 0 : index
    %c0_8 = arith.constant 0 : index
    %c0_9 = arith.constant 0 : index
    %6 = vector.load %arg2[%c0_7, %c0_8, %c0_9] : memref<9x128x128xf32, #tpu.memory_space<vmem>>, vector<1x128x128xf32>
    %7 = vector.shape_cast %6 : vector<1x128x128xf32> to vector<128x128xf32>
    %cst_10 = arith.constant dense<0.000000e+00> : vector<256x128xf32>
    %8 = tpu.matmul %4, %7, %cst_10 {dimension_numbers = #tpu.dot_dimension_numbers<[1], [0], [0], [1], [0, 0, 1, 1], [], []>} : vector<256x128xf32>, vector<128x128xf32>, vector<256x128xf32> -> vector<256x128xf32>
    %9 = arith.addf %5, %8 : vector<256x128xf32>
    %c0_11 = arith.constant 0 : index
    %c0_12 = arith.constant 0 : index
    %10 = vector.load %arg5[%c0_11, %c0_12] : memref<256x128xf32, #tpu.memory_space<vmem>>, vector<256x128xf32>
    tpu.vector_store %arg5[%c0_11, %c0_12], %9 {strides = array<i32>} : memref<256x128xf32, #tpu.memory_space<vmem>>, vector<256x128xf32>,
    %c0_13 = arith.constant 0 : index
    %c0_14 = arith.constant 0 : index
    %c1 = arith.constant 1 : index
    %c0_15 = arith.constant 0 : index
    %11 = vector.load %arg1[%c0_13, %c0_14, %c1, %c0_15] : memref<1x18x18x128xf32, #tpu.memory_space<vmem>>, vector<1x16x16x128xf32>
    %12 = vector.shape_cast %11 : vector<1x16x16x128xf32> to vector<16x16x128xf32>
    %13 = vector.shape_cast %12 : vector<16x16x128xf32> to vector<256x128xf32>
    %c0_16 = arith.constant 0 : index
    %c0_17 = arith.constant 0 : index
    %14 = vector.load %arg5[%c0_16, %c0_17] : memref<256x128xf32, #tpu.memory_space<vmem>>, vector<256x128xf32>
    %c1_18 = arith.constant 1 : index
    %c0_19 = arith.constant 0 : index
    %c0_20 = arith.constant 0 : index
    %15 = vector.load %arg2[%c1_18, %c0_19, %c0_20] : memref<9x128x128xf32, #tpu.memory_space<vmem>>, vector<1x128x128xf32>
    %16 = vector.shape_cast %15 : vector<1x128x128xf32> to vector<128x128xf32>
    %cst_21 = arith.constant dense<0.000000e+00> : vector<256x128xf32>
    %17 = tpu.matmul %13, %16, %cst_21 {dimension_numbers = #tpu.dot_dimension_numbers<[1], [0], [0], [1], [0, 0, 1, 1], [], []>} : vector<256x128xf32>, vector<128x128xf32>, vector<256x128xf32> -> vector<256x128xf32>
    %18 = arith.addf %14, %17 : vector<256x128xf32>
    %c0_22 = arith.constant 0 : index
    %c0_23 = arith.constant 0 : index
    %19 = vector.load %arg5[%c0_22, %c0_23] : memref<256x128xf32, #tpu.memory_space<vmem>>, vector<256x128xf32>
    tpu.vector_store %arg5[%c0_22, %c0_23], %18 {strides = array<i32>} : memref<256x128xf32, #tpu.memory_space<vmem>>, vector<256x128xf32>,
    %c0_24 = arith.constant 0 : index
    %c0_25 = arith.constant 0 : index
    %c2 = arith.constant 2 : index
    %c0_26 = arith.constant 0 : index
    %20 = vector.load %arg1[%c0_24, %c0_25, %c2, %c0_26] : memref<1x18x18x128xf32, #tpu.memory_space<vmem>>, vector<1x16x16x128xf32>
    %21 = vector.shape_cast %20 : vector<1x16x16x128xf32> to vector<16x16x128xf32>
    %22 = vector.shape_cast %21 : vector<16x16x128xf32> to vector<256x128xf32>
    %c0_27 = arith.constant 0 : index
    %c0_28 = arith.constant 0 : index
    %23 = vector.load %arg5[%c0_27, %c0_28] : memref<256x128xf32, #tpu.memory_space<vmem>>, vector<256x128xf32>
    %c2_29 = arith.constant 2 : index
    %c0_30 = arith.constant 0 : index
    %c0_31 = arith.constant 0 : index
    %24 = vector.load %arg2[%c2_29, %c0_30, %c0_31] : memref<9x128x128xf32, #tpu.memory_space<vmem>>, vector<1x128x128xf32>
    %25 = vector.shape_cast %24 : vector<1x128x128xf32> to vector<128x128xf32>
    %cst_32 = arith.constant dense<0.000000e+00> : vector<256x128xf32>
    %26 = tpu.matmul %22, %25, %cst_32 {dimension_numbers = #tpu.dot_dimension_numbers<[1], [0], [0], [1], [0, 0, 1, 1], [], []>} : vector<256x128xf32>, vector<128x128xf32>, vector<256x128xf32> -> vector<256x128xf32>
    %27 = arith.addf %23, %26 : vector<256x128xf32>
    %c0_33 = arith.constant 0 : index
    %c0_34 = arith.constant 0 : index
    %28 = vector.load %arg5[%c0_33, %c0_34] : memref<256x128xf32, #tpu.memory_space<vmem>>, vector<256x128xf32>
    tpu.vector_store %arg5[%c0_33, %c0_34], %27 {strides = array<i32>} : memref<256x128xf32, #tpu.memory_space<vmem>>, vector<256x128xf32>,
    %c0_35 = arith.constant 0 : index
    %c1_36 = arith.constant 1 : index
    %c0_37 = arith.constant 0 : index
    %c0_38 = arith.constant 0 : index
    %29 = vector.load %arg1[%c0_35, %c1_36, %c0_37, %c0_38] : memref<1x18x18x128xf32, #tpu.memory_space<vmem>>, vector<1x16x16x128xf32>
    %30 = vector.shape_cast %29 : vector<1x16x16x128xf32> to vector<16x16x128xf32>
    %31 = vector.shape_cast %30 : vector<16x16x128xf32> to vector<256x128xf32>
    %c0_39 = arith.constant 0 : index
    %c0_40 = arith.constant 0 : index
    %32 = vector.load %arg5[%c0_39, %c0_40] : memref<256x128xf32, #tpu.memory_space<vmem>>, vector<256x128xf32>
    %c3 = arith.constant 3 : index
    %c0_41 = arith.constant 0 : index
    %c0_42 = arith.constant 0 : index
    %33 = vector.load %arg2[%c3, %c0_41, %c0_42] : memref<9x128x128xf32, #tpu.memory_space<vmem>>, vector<1x128x128xf32>
    %34 = vector.shape_cast %33 : vector<1x128x128xf32> to vector<128x128xf32>
    %cst_43 = arith.constant dense<0.000000e+00> : vector<256x128xf32>
    %35 = tpu.matmul %31, %34, %cst_43 {dimension_numbers = #tpu.dot_dimension_numbers<[1], [0], [0], [1], [0, 0, 1, 1], [], []>} : vector<256x128xf32>, vector<128x128xf32>, vector<256x128xf32> -> vector<256x128xf32>
    %36 = arith.addf %32, %35 : vector<256x128xf32>
    %c0_44 = arith.constant 0 : index
    %c0_45 = arith.constant 0 : index
    %37 = vector.load %arg5[%c0_44, %c0_45] : memref<256x128xf32, #tpu.memory_space<vmem>>, vector<256x128xf32>
    tpu.vector_store %arg5[%c0_44, %c0_45], %36 {strides = array<i32>} : memref<256x128xf32, #tpu.memory_space<vmem>>, vector<256x128xf32>,
    %c0_46 = arith.constant 0 : index
    %c1_47 = arith.constant 1 : index
    %c1_48 = arith.constant 1 : index
    %c0_49 = arith.constant 0 : index
    %38 = vector.load %arg1[%c0_46, %c1_47, %c1_48, %c0_49] : memref<1x18x18x128xf32, #tpu.memory_space<vmem>>, vector<1x16x16x128xf32>
    %39 = vector.shape_cast %38 : vector<1x16x16x128xf32> to vector<16x16x128xf32>
    %40 = vector.shape_cast %39 : vector<16x16x128xf32> to vector<256x128xf32>
    %c0_50 = arith.constant 0 : index
    %c0_51 = arith.constant 0 : index
    %41 = vector.load %arg5[%c0_50, %c0_51] : memref<256x128xf32, #tpu.memory_space<vmem>>, vector<256x128xf32>
    %c4 = arith.constant 4 : index
    %c0_52 = arith.constant 0 : index
    %c0_53 = arith.constant 0 : index
    %42 = vector.load %arg2[%c4, %c0_52, %c0_53] : memref<9x128x128xf32, #tpu.memory_space<vmem>>, vector<1x128x128xf32>
    %43 = vector.shape_cast %42 : vector<1x128x128xf32> to vector<128x128xf32>
    %cst_54 = arith.constant dense<0.000000e+00> : vector<256x128xf32>
    %44 = tpu.matmul %40, %43, %cst_54 {dimension_numbers = #tpu.dot_dimension_numbers<[1], [0], [0], [1], [0, 0, 1, 1], [], []>} : vector<256x128xf32>, vector<128x128xf32>, vector<256x128xf32> -> vector<256x128xf32>
    %45 = arith.addf %41, %44 : vector<256x128xf32>
    %c0_55 = arith.constant 0 : index
    %c0_56 = arith.constant 0 : index
    %46 = vector.load %arg5[%c0_55, %c0_56] : memref<256x128xf32, #tpu.memory_space<vmem>>, vector<256x128xf32>
    tpu.vector_store %arg5[%c0_55, %c0_56], %45 {strides = array<i32>} : memref<256x128xf32, #tpu.memory_space<vmem>>, vector<256x128xf32>,
    %c0_57 = arith.constant 0 : index
    %c1_58 = arith.constant 1 : index
    %c2_59 = arith.constant 2 : index
    %c0_60 = arith.constant 0 : index
    %47 = vector.load %arg1[%c0_57, %c1_58, %c2_59, %c0_60] : memref<1x18x18x128xf32, #tpu.memory_space<vmem>>, vector<1x16x16x128xf32>
    %48 = vector.shape_cast %47 : vector<1x16x16x128xf32> to vector<16x16x128xf32>
    %49 = vector.shape_cast %48 : vector<16x16x128xf32> to vector<256x128xf32>
    %c0_61 = arith.constant 0 : index
    %c0_62 = arith.constant 0 : index
    %50 = vector.load %arg5[%c0_61, %c0_62] : memref<256x128xf32, #tpu.memory_space<vmem>>, vector<256x128xf32>
    %c5 = arith.constant 5 : index
    %c0_63 = arith.constant 0 : index
    %c0_64 = arith.constant 0 : index
    %51 = vector.load %arg2[%c5, %c0_63, %c0_64] : memref<9x128x128xf32, #tpu.memory_space<vmem>>, vector<1x128x128xf32>
    %52 = vector.shape_cast %51 : vector<1x128x128xf32> to vector<128x128xf32>
    %cst_65 = arith.constant dense<0.000000e+00> : vector<256x128xf32>
    %53 = tpu.matmul %49, %52, %cst_65 {dimension_numbers = #tpu.dot_dimension_numbers<[1], [0], [0], [1], [0, 0, 1, 1], [], []>} : vector<256x128xf32>, vector<128x128xf32>, vector<256x128xf32> -> vector<256x128xf32>
    %54 = arith.addf %50, %53 : vector<256x128xf32>
    %c0_66 = arith.constant 0 : index
    %c0_67 = arith.constant 0 : index
    %55 = vector.load %arg5[%c0_66, %c0_67] : memref<256x128xf32, #tpu.memory_space<vmem>>, vector<256x128xf32>
    tpu.vector_store %arg5[%c0_66, %c0_67], %54 {strides = array<i32>} : memref<256x128xf32, #tpu.memory_space<vmem>>, vector<256x128xf32>,
    %c0_68 = arith.constant 0 : index
    %c2_69 = arith.constant 2 : index
    %c0_70 = arith.constant 0 : index
    %c0_71 = arith.constant 0 : index
    %56 = vector.load %arg1[%c0_68, %c2_69, %c0_70, %c0_71] : memref<1x18x18x128xf32, #tpu.memory_space<vmem>>, vector<1x16x16x128xf32>
    %57 = vector.shape_cast %56 : vector<1x16x16x128xf32> to vector<16x16x128xf32>
    %58 = vector.shape_cast %57 : vector<16x16x128xf32> to vector<256x128xf32>
    %c0_72 = arith.constant 0 : index
    %c0_73 = arith.constant 0 : index
    %59 = vector.load %arg5[%c0_72, %c0_73] : memref<256x128xf32, #tpu.memory_space<vmem>>, vector<256x128xf32>
    %c6 = arith.constant 6 : index
    %c0_74 = arith.constant 0 : index
    %c0_75 = arith.constant 0 : index
    %60 = vector.load %arg2[%c6, %c0_74, %c0_75] : memref<9x128x128xf32, #tpu.memory_space<vmem>>, vector<1x128x128xf32>
    %61 = vector.shape_cast %60 : vector<1x128x128xf32> to vector<128x128xf32>
    %cst_76 = arith.constant dense<0.000000e+00> : vector<256x128xf32>
    %62 = tpu.matmul %58, %61, %cst_76 {dimension_numbers = #tpu.dot_dimension_numbers<[1], [0], [0], [1], [0, 0, 1, 1], [], []>} : vector<256x128xf32>, vector<128x128xf32>, vector<256x128xf32> -> vector<256x128xf32>
    %63 = arith.addf %59, %62 : vector<256x128xf32>
    %c0_77 = arith.constant 0 : index
    %c0_78 = arith.constant 0 : index
    %64 = vector.load %arg5[%c0_77, %c0_78] : memref<256x128xf32, #tpu.memory_space<vmem>>, vector<256x128xf32>
    tpu.vector_store %arg5[%c0_77, %c0_78], %63 {strides = array<i32>} : memref<256x128xf32, #tpu.memory_space<vmem>>, vector<256x128xf32>,
    %c0_79 = arith.constant 0 : index
    %c2_80 = arith.constant 2 : index
    %c1_81 = arith.constant 1 : index
    %c0_82 = arith.constant 0 : index
    %65 = vector.load %arg1[%c0_79, %c2_80, %c1_81, %c0_82] : memref<1x18x18x128xf32, #tpu.memory_space<vmem>>, vector<1x16x16x128xf32>
    %66 = vector.shape_cast %65 : vector<1x16x16x128xf32> to vector<16x16x128xf32>
    %67 = vector.shape_cast %66 : vector<16x16x128xf32> to vector<256x128xf32>
    %c0_83 = arith.constant 0 : index
    %c0_84 = arith.constant 0 : index
    %68 = vector.load %arg5[%c0_83, %c0_84] : memref<256x128xf32, #tpu.memory_space<vmem>>, vector<256x128xf32>
    %c7 = arith.constant 7 : index
    %c0_85 = arith.constant 0 : index
    %c0_86 = arith.constant 0 : index
    %69 = vector.load %arg2[%c7, %c0_85, %c0_86] : memref<9x128x128xf32, #tpu.memory_space<vmem>>, vector<1x128x128xf32>
    %70 = vector.shape_cast %69 : vector<1x128x128xf32> to vector<128x128xf32>
    %cst_87 = arith.constant dense<0.000000e+00> : vector<256x128xf32>
    %71 = tpu.matmul %67, %70, %cst_87 {dimension_numbers = #tpu.dot_dimension_numbers<[1], [0], [0], [1], [0, 0, 1, 1], [], []>} : vector<256x128xf32>, vector<128x128xf32>, vector<256x128xf32> -> vector<256x128xf32>
    %72 = arith.addf %68, %71 : vector<256x128xf32>
    %c0_88 = arith.constant 0 : index
    %c0_89 = arith.constant 0 : index
    %73 = vector.load %arg5[%c0_88, %c0_89] : memref<256x128xf32, #tpu.memory_space<vmem>>, vector<256x128xf32>
    tpu.vector_store %arg5[%c0_88, %c0_89], %72 {strides = array<i32>} : memref<256x128xf32, #tpu.memory_space<vmem>>, vector<256x128xf32>,
    %c0_90 = arith.constant 0 : index
    %c2_91 = arith.constant 2 : index
    %c2_92 = arith.constant 2 : index
    %c0_93 = arith.constant 0 : index
    %74 = vector.load %arg1[%c0_90, %c2_91, %c2_92, %c0_93] : memref<1x18x18x128xf32, #tpu.memory_space<vmem>>, vector<1x16x16x128xf32>
    %75 = vector.shape_cast %74 : vector<1x16x16x128xf32> to vector<16x16x128xf32>
    %76 = vector.shape_cast %75 : vector<16x16x128xf32> to vector<256x128xf32>
    %c0_94 = arith.constant 0 : index
    %c0_95 = arith.constant 0 : index
    %77 = vector.load %arg5[%c0_94, %c0_95] : memref<256x128xf32, #tpu.memory_space<vmem>>, vector<256x128xf32>
    %c8 = arith.constant 8 : index
    %c0_96 = arith.constant 0 : index
    %c0_97 = arith.constant 0 : index
    %78 = vector.load %arg2[%c8, %c0_96, %c0_97] : memref<9x128x128xf32, #tpu.memory_space<vmem>>, vector<1x128x128xf32>
    %79 = vector.shape_cast %78 : vector<1x128x128xf32> to vector<128x128xf32>
    %cst_98 = arith.constant dense<0.000000e+00> : vector<256x128xf32>
    %80 = tpu.matmul %76, %79, %cst_98 {dimension_numbers = #tpu.dot_dimension_numbers<[1], [0], [0], [1], [0, 0, 1, 1], [], []>} : vector<256x128xf32>, vector<128x128xf32>, vector<256x128xf32> -> vector<256x128xf32>
    %81 = arith.addf %77, %80 : vector<256x128xf32>
    %c0_99 = arith.constant 0 : index
    %c0_100 = arith.constant 0 : index
    %82 = vector.load %arg5[%c0_99, %c0_100] : memref<256x128xf32, #tpu.memory_space<vmem>>, vector<256x128xf32>
    tpu.vector_store %arg5[%c0_99, %c0_100], %81 {strides = array<i32>} : memref<256x128xf32, #tpu.memory_space<vmem>>, vector<256x128xf32>,
    %c0_101 = arith.constant 0 : index
    %c0_102 = arith.constant 0 : index
    %83 = vector.load %arg5[%c0_101, %c0_102] : memref<256x128xf32, #tpu.memory_space<vmem>>, vector<256x128xf32>
    %c0_103 = arith.constant 0 : index
    %c0_104 = arith.constant 0 : index
    %84 = vector.load %arg3[%c0_103, %c0_104] : memref<1x128xf32, #tpu.memory_space<vmem>>, vector<1x128xf32>
    %85 = vector.broadcast %84 : vector<1x128xf32> to vector<256x128xf32>
    %86 = arith.addf %83, %85 : vector<256x128xf32>
    %cst_105 = arith.constant 0.000000e+00 : f32
    %87 = vector.broadcast %cst_105 : f32 to vector<256x128xf32>
    %88 = arith.maximumf %86, %87 : vector<256x128xf32>
    %89 = vector.shape_cast %88 : vector<256x128xf32> to vector<1x16x16x128xf32>
    %c0_106 = arith.constant 0 : index
    %c0_107 = arith.constant 0 : index
    %c0_108 = arith.constant 0 : index
    %c0_109 = arith.constant 0 : index
    %90 = vector.load %arg4[%c0_106, %c0_107, %c0_108, %c0_109] : memref<1x16x16x128xf32, #tpu.memory_space<vmem>>, vector<1x16x16x128xf32>
    tpu.vector_store %arg4[%c0_106, %c0_107, %c0_108, %c0_109], %89 {strides = array<i32>} : memref<1x16x16x128xf32, #tpu.memory_space<vmem>>, vector<1x16x16x128xf32>,
    return
  }
  func.func @transform_0(%arg0: i32) -> (i32, i32, i32, i32) {
    %c0_i32 = arith.constant 0 : i32
    %c0_i32_0 = arith.constant 0 : i32
    %c0_i32_1 = arith.constant 0 : i32
    %c0_i32_2 = arith.constant 0 : i32
    return %arg0, %c0_i32, %c0_i32_0, %c0_i32_1 : i32, i32, i32, i32
  }
  func.func @transform_1(%arg0: i32) -> (i32, i32, i32) {
    %c0_i32 = arith.constant 0 : i32
    %c0_i32_0 = arith.constant 0 : i32
    %c0_i32_1 = arith.constant 0 : i32
    %c0_i32_2 = arith.constant 0 : i32
    return %c0_i32, %c0_i32_0, %c0_i32_1 : i32, i32, i32
  }
  func.func @transform_2(%arg0: i32) -> (i32, i32) {
    %c0_i32 = arith.constant 0 : i32
    %c0_i32_0 = arith.constant 0 : i32
    %c0_i32_1 = arith.constant 0 : i32
    return %c0_i32, %c0_i32_0 : i32, i32
  }
  func.func @transform_3(%arg0: i32) -> (i32, i32, i32, i32) {
    %c0_i32 = arith.constant 0 : i32
    %c0_i32_0 = arith.constant 0 : i32
    %c0_i32_1 = arith.constant 0 : i32
    %c0_i32_2 = arith.constant 0 : i32
    return %arg0, %c0_i32, %c0_i32_0, %c0_i32_1 : i32, i32, i32, i32
  }
}

module attributes {stable_mosaic.version = 11 : i64} {
  func.func @_conv_relu_kernel(%arg0: i32, %arg1: memref<1x16x16x128xf32, #tpu.memory_space<vmem>>, %arg2: memref<1x128x128xf32, #tpu.memory_space<vmem>>, %arg3: memref<1x128xf32, #tpu.memory_space<vmem>>, %arg4: memref<1x16x16x128xf32, #tpu.memory_space<vmem>>, %arg5: memref<256x128xf32, #tpu.memory_space<vmem>>) attributes {dimension_semantics = [#tpu.dimension_semantics<parallel>], iteration_bounds = array<i64: 2>, scalar_prefetch = 0 : i64, scratch_operands = 1 : i64, tpu.core_type = #tpu.core_type<tc>, window_params = [{transform_indices = @transform_0, window_bounds = array<i64: 1, 16, 16, 128>}, {pipeline_mode = #tpu.pipeline_mode<synchronous>, transform_indices = @transform_1, window_bounds = array<i64: 1, 128, 128>}, {pipeline_mode = #tpu.pipeline_mode<synchronous>, transform_indices = @transform_2, window_bounds = array<i64: 1, 128>}, {transform_indices = @transform_3, window_bounds = array<i64: 1, 16, 16, 128>}]} {
    %cst = arith.constant 0.000000e+00 : f32
    %0 = vector.broadcast %cst : f32 to vector<256x128xf32>
    %c0 = arith.constant 0 : index
    %c0_0 = arith.constant 0 : index
    %1 = vector.load %arg5[%c0, %c0_0] : memref<256x128xf32, #tpu.memory_space<vmem>>, vector<256x128xf32>
    tpu.vector_store %arg5[%c0, %c0_0], %0 {strides = array<i32>} : memref<256x128xf32, #tpu.memory_space<vmem>>, vector<256x128xf32>,
    %c0_1 = arith.constant 0 : index
    %c0_2 = arith.constant 0 : index
    %c0_3 = arith.constant 0 : index
    %c0_4 = arith.constant 0 : index
    %2 = vector.load %arg1[%c0_1, %c0_2, %c0_3, %c0_4] : memref<1x16x16x128xf32, #tpu.memory_space<vmem>>, vector<1x16x16x128xf32>
    %3 = vector.shape_cast %2 : vector<1x16x16x128xf32> to vector<16x16x128xf32>
    %4 = vector.shape_cast %3 : vector<16x16x128xf32> to vector<256x128xf32>
    %c0_5 = arith.constant 0 : index
    %c0_6 = arith.constant 0 : index
    %5 = vector.load %arg5[%c0_5, %c0_6] : memref<256x128xf32, #tpu.memory_space<vmem>>, vector<256x128xf32>
    %c0_7 = arith.constant 0 : index
    %c0_8 = arith.constant 0 : index
    %c0_9 = arith.constant 0 : index
    %6 = vector.load %arg2[%c0_7, %c0_8, %c0_9] : memref<1x128x128xf32, #tpu.memory_space<vmem>>, vector<1x128x128xf32>
    %7 = vector.shape_cast %6 : vector<1x128x128xf32> to vector<128x128xf32>
    %cst_10 = arith.constant dense<0.000000e+00> : vector<256x128xf32>
    %8 = tpu.matmul %4, %7, %cst_10 {dimension_numbers = #tpu.dot_dimension_numbers<[1], [0], [0], [1], [0, 0, 1, 1], [], []>} : vector<256x128xf32>, vector<128x128xf32>, vector<256x128xf32> -> vector<256x128xf32>
    %9 = arith.addf %5, %8 : vector<256x128xf32>
    %c0_11 = arith.constant 0 : index
    %c0_12 = arith.constant 0 : index
    %10 = vector.load %arg5[%c0_11, %c0_12] : memref<256x128xf32, #tpu.memory_space<vmem>>, vector<256x128xf32>
    tpu.vector_store %arg5[%c0_11, %c0_12], %9 {strides = array<i32>} : memref<256x128xf32, #tpu.memory_space<vmem>>, vector<256x128xf32>,
    %c0_13 = arith.constant 0 : index
    %c0_14 = arith.constant 0 : index
    %11 = vector.load %arg5[%c0_13, %c0_14] : memref<256x128xf32, #tpu.memory_space<vmem>>, vector<256x128xf32>
    %c0_15 = arith.constant 0 : index
    %c0_16 = arith.constant 0 : index
    %12 = vector.load %arg3[%c0_15, %c0_16] : memref<1x128xf32, #tpu.memory_space<vmem>>, vector<1x128xf32>
    %13 = vector.broadcast %12 : vector<1x128xf32> to vector<256x128xf32>
    %14 = arith.addf %11, %13 : vector<256x128xf32>
    %cst_17 = arith.constant 0.000000e+00 : f32
    %15 = vector.broadcast %cst_17 : f32 to vector<256x128xf32>
    %16 = arith.maximumf %14, %15 : vector<256x128xf32>
    %17 = vector.shape_cast %16 : vector<256x128xf32> to vector<1x16x16x128xf32>
    %c0_18 = arith.constant 0 : index
    %c0_19 = arith.constant 0 : index
    %c0_20 = arith.constant 0 : index
    %c0_21 = arith.constant 0 : index
    %18 = vector.load %arg4[%c0_18, %c0_19, %c0_20, %c0_21] : memref<1x16x16x128xf32, #tpu.memory_space<vmem>>, vector<1x16x16x128xf32>
    tpu.vector_store %arg4[%c0_18, %c0_19, %c0_20, %c0_21], %17 {strides = array<i32>} : memref<1x16x16x128xf32, #tpu.memory_space<vmem>>, vector<1x16x16x128xf32>,
    return
  }
  func.func @transform_0(%arg0: i32) -> (i32, i32, i32, i32) {
    %c0_i32 = arith.constant 0 : i32
    %c0_i32_0 = arith.constant 0 : i32
    %c0_i32_1 = arith.constant 0 : i32
    %c0_i32_2 = arith.constant 0 : i32
    return %arg0, %c0_i32, %c0_i32_0, %c0_i32_1 : i32, i32, i32, i32
  }
  func.func @transform_1(%arg0: i32) -> (i32, i32, i32) {
    %c0_i32 = arith.constant 0 : i32
    %c0_i32_0 = arith.constant 0 : i32
    %c0_i32_1 = arith.constant 0 : i32
    %c0_i32_2 = arith.constant 0 : i32
    return %c0_i32, %c0_i32_0, %c0_i32_1 : i32, i32, i32
  }
  func.func @transform_2(%arg0: i32) -> (i32, i32) {
    %c0_i32 = arith.constant 0 : i32
    %c0_i32_0 = arith.constant 0 : i32
    %c0_i32_1 = arith.constant 0 : i32
    return %c0_i32, %c0_i32_0 : i32, i32
  }
  func.func @transform_3(%arg0: i32) -> (i32, i32, i32, i32) {
    %c0_i32 = arith.constant 0 : i32
    %c0_i32_0 = arith.constant 0 : i32
    %c0_i32_1 = arith.constant 0 : i32
    %c0_i32_2 = arith.constant 0 : i32
    return %arg0, %c0_i32, %c0_i32_0, %c0_i32_1 : i32, i32, i32, i32
  }
}

</mosaic_0001>

<llo_original>
// kernel: _spos_forward_jit.3
$region0: #{_spos_forward_jit.3}
  #allocation0 [shape = 'u32[]', space=smem, size = 0x4, offset = 0x4, fixed_abs, tag = 'smem constant byte address 0x4 - core index']
  #allocation1 [shape = 'u32[72,128]{1,0:T(1,128)}', space=vmem, size = 0x9000, scoped, tag = 'internal scratch']
  #allocation2 [shape = 'f32[256,128]{1,0:T(8,128)}', space=vmem, size = 0x20000, scoped, tag = 'scratch operand']
  %s0 = inlined_call_operand.vmem [shape: f32[2,16,16,128], index: 0, kind: input, shape index: {}]
  %s1 = inlined_call_operand.vmem [shape: f32[1,128,128], index: 1, kind: input, shape index: {}]
  %s2 = inlined_call_operand.vmem [shape: f32[1,128], index: 2, kind: input, shape index: {}]
  %s3 = inlined_call_operand.vmem [shape: f32[2,16,16,128], index: 3, kind: output, shape index: {}]
  %s4 = sld [smem:[#allocation0]]
  $region45: #{_spos_forward_jit.3} parent=0
    _
  %s6 = ssub.s32 1, %s4
  %s7 = scalar_select 0, %s6, %s4
  loop: start=0, step=1, limit=4
  $region2: #{_spos_forward_jit.3} parent=0 // loop_pre_header
    _
  $region3: #{_spos_forward_jit.3} parent=0 // loop_header
    %s9 = sphi 0, %s13
    %p10 = scmp.ge.s32.totalorder %s9, 4
    %s19 = sphi 0, %s21
    %s22 = sphi 0, %s19
    %s23 = sphi 0, %s22
    %s39 = sphi 0, %s23
    %s43 = sphi 0, %s43
    %s45 = sphi 0, %s43
    %s46 = sphi 0, %s45
    %s60 = sphi 0, %s46
    %s64 = sphi 0, %s64
    %s66 = sphi 0, %s64
    %s67 = sphi 0, %s66
    %s81 = sphi 0, %s67
    %s87 = sphi 0, %s89
    %s90 = sphi 0, %s87
    %s91 = sphi 0, %s90
    %s107 = sphi 0, %s91
  $region4: #{_spos_forward_jit.3} parent=0 // loop_header_branch
    %12 = sbr.rel (%p10) target = $region8
  $region5: #{_spos_forward_jit.3} parent=0 // loop_body
    %s14 = ssub.s32 %s9, 1
    %s15 = ssub.s32 %s9, 2
    %s16 = sadd.s32 %s9, 1
    %s17 = ssub.s32 %s9, %s16
    %p18 = scmp.eq.s32.totalorder %s17, 0
    %s20 = sadd.s32 %s19, 1
    %s21 = scalar_select %p18, %s19, %s20
    %p24 = pneg %p18
    %p25 = scmp.eq.s32.totalorder %s9, 1
    %p26 = por %p24, %p25
    %p27 = scmp.ne.s32.totalorder %s19, %s22
    %p28 = scmp.eq.s32.totalorder %s9, 0
    %p29 = por %p27, %p28
    %p30 = scmp.ne.s32.totalorder %s19, %s22
    %p31 = scmp.eq.s32.totalorder %s14, 1
    %p32 = por %p30, %p31
    %p33 = scmp.ne.s32.totalorder %s22, %s23
    %p34 = scmp.eq.s32.totalorder %s14, 0
    %p35 = por %p33, %p34
    %p36 = scmp.ne.s32.totalorder %s22, %s23
    %p37 = scmp.eq.s32.totalorder %s15, 1
    %p38 = por %p36, %p37
    %p40 = scmp.ne.s32.totalorder %s23, %s39
    %p41 = scmp.eq.s32.totalorder %s15, 0
    %p42 = por %p40, %p41
    %s44 = sadd.s32 %s43, 1
    %p47 = scmp.eq.s32.totalorder %s9, 1
    %p48 = scmp.ne.s32.totalorder %s43, %s45
    %p49 = scmp.eq.s32.totalorder %s9, 0
    %p50 = por %p48, %p49
    %p51 = scmp.ne.s32.totalorder %s43, %s45
    %p52 = scmp.eq.s32.totalorder %s14, 1
    %p53 = por %p51, %p52
    %p54 = scmp.ne.s32.totalorder %s45, %s46
    %p55 = scmp.eq.s32.totalorder %s14, 0
    %p56 = por %p54, %p55
    %p57 = scmp.ne.s32.totalorder %s45, %s46
    %p58 = scmp.eq.s32.totalorder %s15, 1
    %p59 = por %p57, %p58
    %p61 = scmp.ne.s32.totalorder %s46, %s60
    %p62 = scmp.eq.s32.totalorder %s15, 0
    %p63 = por %p61, %p62
    %s65 = sadd.s32 %s64, 1
    %p68 = scmp.eq.s32.totalorder %s9, 1
    %p69 = scmp.ne.s32.totalorder %s64, %s66
    %p70 = scmp.eq.s32.totalorder %s9, 0
    %p71 = por %p69, %p70
    %p72 = scmp.ne.s32.totalorder %s64, %s66
    %p73 = scmp.eq.s32.totalorder %s14, 1
    %p74 = por %p72, %p73
    %p75 = scmp.ne.s32.totalorder %s66, %s67
    %p76 = scmp.eq.s32.totalorder %s14, 0
    %p77 = por %p75, %p76
    %p78 = scmp.ne.s32.totalorder %s66, %s67
    %p79 = scmp.eq.s32.totalorder %s15, 1
    %p80 = por %p78, %p79
    %p82 = scmp.ne.s32.totalorder %s67, %s81
    %p83 = scmp.eq.s32.totalorder %s15, 0
    %p84 = por %p82, %p83
    %s85 = ssub.s32 %s9, %s16
    %p86 = scmp.eq.s32.totalorder %s85, 0
    %s88 = sadd.s32 %s87, 1
    %s89 = scalar_select %p86, %s87, %s88
    %p92 = pneg %p86
    %p93 = scmp.eq.s32.totalorder %s9, 1
    %p94 = por %p92, %p93
    %p95 = scmp.ne.s32.totalorder %s87, %s90
    %p96 = scmp.eq.s32.totalorder %s9, 0
    %p97 = por %p95, %p96
    %p98 = scmp.ne.s32.totalorder %s87, %s90
    %p99 = scmp.eq.s32.totalorder %s14, 1
    %p100 = por %p98, %p99
    %p101 = scmp.ne.s32.totalorder %s90, %s91
    %p102 = scmp.eq.s32.totalorder %s14, 0
    %p103 = por %p101, %p102
    %p104 = scmp.ne.s32.totalorder %s90, %s91
    %p105 = scmp.eq.s32.totalorder %s15, 1
    %p106 = por %p104, %p105
    %p108 = scmp.ne.s32.totalorder %s91, %s107
    %p109 = scmp.eq.s32.totalorder %s15, 0
    %p110 = por %p108, %p109
    %p111 = scmp.le.s32.totalorder 1, %s9
    %p112 = scmp.lt.s32.totalorder %s9, 3
    %p113 = pnand %p111, %p112
    %p114 = pneg %p113
    // Predicated region
    $region9: #{_spos_forward_jit.3} parent=5 // pred_check
      _
    $region10: #{_spos_forward_jit.3} parent=5 // pred_check_branch
      %116 = sbr.rel (%p113) target = $region12
    $region11: #{_spos_forward_jit.3} parent=5 // pred_region
      %s117 = ssub.s32 %s9, 1
      // Predicated region
      $region13: #{_spos_forward_jit.3} parent=11 // pred_check
        %p118 = pneg %p56
      $region14: #{_spos_forward_jit.3} parent=11 // pred_check_branch
        %120 = sbr.rel (%p118) target = $region16
      $region15: #{_spos_forward_jit.3} parent=11 // pred_region
        _
      $region16: #{_spos_forward_jit.3} parent=11 // pred_fallthru
        _
      // Predicated region
      $region17: #{_spos_forward_jit.3} parent=11 // pred_check
        %p121 = pneg %p77
      $region18: #{_spos_forward_jit.3} parent=11 // pred_check_branch
        %123 = sbr.rel (%p121) target = $region20
      $region19: #{_spos_forward_jit.3} parent=11 // pred_region
        _
      $region20: #{_spos_forward_jit.3} parent=11 // pred_fallthru
        _
    $region12: #{_spos_forward_jit.3} parent=5 // pred_fallthru
      _
    %p124 = scmp.lt.s32.totalorder %s9, 2
    // Predicated region
    $region21: #{_spos_forward_jit.3} parent=5 // pred_check
      %p125 = pneg %p124
    $region22: #{_spos_forward_jit.3} parent=5 // pred_check_branch
      %127 = sbr.rel (%p125) target = $region24
    $region23: #{_spos_forward_jit.3} parent=5 // pred_region
      // Predicated region
      $region25: #{_spos_forward_jit.3} parent=23 // pred_check
        %p128 = pneg %p29
      $region26: #{_spos_forward_jit.3} parent=23 // pred_check_branch
        %130 = sbr.rel (%p128) target = $region28
      $region27: #{_spos_forward_jit.3} parent=23 // pred_region
        %p131 = scmp.lt.s32.totalorder %s9, 1
        %s132 = scalar_select %p131, %s9, 1
        %s133 = smul.addr %s132, 32
        %s134 = smul.addr %s133, 8
        %s135 = scalar_lea.vmem %s0, %s134
      $region28: #{_spos_forward_jit.3} parent=23 // pred_fallthru
        _
    $region24: #{_spos_forward_jit.3} parent=5 // pred_fallthru
      _
    %p136 = scmp.le.s32.totalorder 1, %s9
    %p137 = scmp.lt.s32.totalorder %s9, 3
    %p138 = pnand %p136, %p137
    %p139 = pneg %p138
    // Predicated region
    $region29: #{_spos_forward_jit.3} parent=5 // pred_check
      _
    $region30: #{_spos_forward_jit.3} parent=5 // pred_check_branch
      %141 = sbr.rel (%p138) target = $region32
    $region31: #{_spos_forward_jit.3} parent=5 // pred_region
      %s142 = ssub.s32 %s9, 1
      %p143 = scmp.lt.s32.totalorder %s14, 1
      %s144 = scalar_select %p143, %s14, 1
      %s145 = smul.addr %s144, 32
      %s146 = smul.addr %s145, 8
      %s147 = scalar_lea.vmem %s0, %s146
      %p148 = pneg %p35
      %p149 = pneg %p32
      %p150 = pneg %p56
      %p151 = pneg %p53
      %p152 = pneg %p77
      %p153 = pneg %p74
      %p154 = pneg %p103
      %p155 = pneg %p100
      %p156 = scmp.lt.s32.totalorder %s14, 1
      %s157 = scalar_select %p156, %s14, 1
      %s158 = smul.addr %s157, 32
      %s159 = smul.addr %s158, 8
      %s160 = scalar_lea.vmem %s3, %s159
      %p161 = scmp.lt.s32.totalorder %s14, 1
      %s162 = scalar_select %p161, %s14, 1
      %s163 = smul.addr %s162, 32
      %s164 = smul.addr %s163, 8
      %s165 = scalar_lea.vmem %s0, %s164
      %p166 = scmp.lt.s32.totalorder %s14, 1
      %s167 = scalar_select %p166, %s14, 1
      %s168 = smul.addr %s167, 32
      %s169 = smul.addr %s168, 8
      %s170 = scalar_lea.vmem %s3, %s169
      %171 = vst [vmem:[#allocation2] sm:$0xff] 0.0
      %172 = vst [vmem:[#allocation2 + $0x8] sm:$0xff] 0.0
      %173 = vst [vmem:[#allocation2 + $0x10] sm:$0xff] 0.0
      %174 = vst [vmem:[#allocation2 + $0x18] sm:$0xff] 0.0
      %175 = vst [vmem:[#allocation2 + $0x20] sm:$0xff] 0.0
      %176 = vst [vmem:[#allocation2 + $0x28] sm:$0xff] 0.0
      %177 = vst [vmem:[#allocation2 + $0x30] sm:$0xff] 0.0
      %178 = vst [vmem:[#allocation2 + $0x38] sm:$0xff] 0.0
      %179 = vst [vmem:[#allocation2 + $0x40] sm:$0xff] 0.0
      %180 = vst [vmem:[#allocation2 + $0x48] sm:$0xff] 0.0
      %181 = vst [vmem:[#allocation2 + $0x50] sm:$0xff] 0.0
      %182 = vst [vmem:[#allocation2 + $0x58] sm:$0xff] 0.0
      %183 = vst [vmem:[#allocation2 + $0x60] sm:$0xff] 0.0
      %184 = vst [vmem:[#allocation2 + $0x68] sm:$0xff] 0.0
      %185 = vst [vmem:[#allocation2 + $0x70] sm:$0xff] 0.0
      %186 = vst [vmem:[#allocation2 + $0x78] sm:$0xff] 0.0
      %187 = vst [vmem:[#allocation2 + $0x80] sm:$0xff] 0.0
      %188 = vst [vmem:[#allocation2 + $0x88] sm:$0xff] 0.0
      %189 = vst [vmem:[#allocation2 + $0x90] sm:$0xff] 0.0
      %190 = vst [vmem:[#allocation2 + $0x98] sm:$0xff] 0.0
      %191 = vst [vmem:[#allocation2 + $0xa0] sm:$0xff] 0.0
      %192 = vst [vmem:[#allocation2 + $0xa8] sm:$0xff] 0.0
      %193 = vst [vmem:[#allocation2 + $0xb0] sm:$0xff] 0.0
      %194 = vst [vmem:[#allocation2 + $0xb8] sm:$0xff] 0.0
      %195 = vst [vmem:[#allocation2 + $0xc0] sm:$0xff] 0.0
      %196 = vst [vmem:[#allocation2 + $0xc8] sm:$0xff] 0.0
      %197 = vst [vmem:[#allocation2 + $0xd0] sm:$0xff] 0.0
      %198 = vst [vmem:[#allocation2 + $0xd8] sm:$0xff] 0.0
      %199 = vst [vmem:[#allocation2 + $0xe0] sm:$0xff] 0.0
      %200 = vst [vmem:[#allocation2 + $0xe8] sm:$0xff] 0.0
      %201 = vst [vmem:[#allocation2 + $0xf0] sm:$0xff] 0.0
      %202 = vst [vmem:[#allocation2 + $0xf8] sm:$0xff] 0.0
      %v203 = vld [vmem:[%s165] sm:$0xff]
      %v204 = vld [vmem:[%s165 + $0x8] sm:$0xff]
      %v205 = vld [vmem:[%s165 + $0x10] sm:$0xff]
      %v206 = vld [vmem:[%s165 + $0x18] sm:$0xff]
      %v207 = vld [vmem:[%s165 + $0x20] sm:$0xff]
      %v208 = vld [vmem:[%s165 + $0x28] sm:$0xff]
      %v209 = vld [vmem:[%s165 + $0x30] sm:$0xff]
      %v210 = vld [vmem:[%s165 + $0x38] sm:$0xff]
      %v211 = vld [vmem:[%s165 + $0x40] sm:$0xff]
      %v212 = vld [vmem:[%s165 + $0x48] sm:$0xff]
      %v213 = vld [vmem:[%s165 + $0x50] sm:$0xff]
      %v214 = vld [vmem:[%s165 + $0x58] sm:$0xff]
      %v215 = vld [vmem:[%s165 + $0x60] sm:$0xff]
      %v216 = vld [vmem:[%s165 + $0x68] sm:$0xff]
      %v217 = vld [vmem:[%s165 + $0x70] sm:$0xff]
      %v218 = vld [vmem:[%s165 + $0x78] sm:$0xff]
      %v219 = vld [vmem:[%s165 + $0x80] sm:$0xff]
      %v220 = vld [vmem:[%s165 + $0x88] sm:$0xff]
      %v221 = vld [vmem:[%s165 + $0x90] sm:$0xff]
      %v222 = vld [vmem:[%s165 + $0x98] sm:$0xff]
      %v223 = vld [vmem:[%s165 + $0xa0] sm:$0xff]
      %v224 = vld [vmem:[%s165 + $0xa8] sm:$0xff]
      %v225 = vld [vmem:[%s165 + $0xb0] sm:$0xff]
      %v226 = vld [vmem:[%s165 + $0xb8] sm:$0xff]
      %v227 = vld [vmem:[%s165 + $0xc0] sm:$0xff]
      %v228 = vld [vmem:[%s165 + $0xc8] sm:$0xff]
      %v229 = vld [vmem:[%s165 + $0xd0] sm:$0xff]
      %v230 = vld [vmem:[%s165 + $0xd8] sm:$0xff]
      %v231 = vld [vmem:[%s165 + $0xe0] sm:$0xff]
      %v232 = vld [vmem:[%s165 + $0xe8] sm:$0xff]
      %v233 = vld [vmem:[%s165 + $0xf0] sm:$0xff]
      %v234 = vld [vmem:[%s165 + $0xf8] sm:$0xff]
      %v235 = vld [vmem:[#allocation2] sm:$0xff]
      %v236 = vld [vmem:[#allocation2 + $0x8] sm:$0xff]
      %v237 = vld [vmem:[#allocation2 + $0x10] sm:$0xff]
      %v238 = vld [vmem:[#allocation2 + $0x18] sm:$0xff]
      %v239 = vld [vmem:[#allocation2 + $0x20] sm:$0xff]
      %v240 = vld [vmem:[#allocation2 + $0x28] sm:$0xff]
      %v241 = vld [vmem:[#allocation2 + $0x30] sm:$0xff]
      %v242 = vld [vmem:[#allocation2 + $0x38] sm:$0xff]
      %v243 = vld [vmem:[#allocation2 + $0x40] sm:$0xff]
      %v244 = vld [vmem:[#allocation2 + $0x48] sm:$0xff]
      %v245 = vld [vmem:[#allocation2 + $0x50] sm:$0xff]
      %v246 = vld [vmem:[#allocation2 + $0x58] sm:$0xff]
      %v247 = vld [vmem:[#allocation2 + $0x60] sm:$0xff]
      %v248 = vld [vmem:[#allocation2 + $0x68] sm:$0xff]
      %v249 = vld [vmem:[#allocation2 + $0x70] sm:$0xff]
      %v250 = vld [vmem:[#allocation2 + $0x78] sm:$0xff]
      %v251 = vld [vmem:[#allocation2 + $0x80] sm:$0xff]
      %v252 = vld [vmem:[#allocation2 + $0x88] sm:$0xff]
      %v253 = vld [vmem:[#allocation2 + $0x90] sm:$0xff]
      %v254 = vld [vmem:[#allocation2 + $0x98] sm:$0xff]
      %v255 = vld [vmem:[#allocation2 + $0xa0] sm:$0xff]
      %v256 = vld [vmem:[#allocation2 + $0xa8] sm:$0xff]
      %v257 = vld [vmem:[#allocation2 + $0xb0] sm:$0xff]
      %v258 = vld [vmem:[#allocation2 + $0xb8] sm:$0xff]
      %v259 = vld [vmem:[#allocation2 + $0xc0] sm:$0xff]
      %v260 = vld [vmem:[#allocation2 + $0xc8] sm:$0xff]
      %v261 = vld [vmem:[#allocation2 + $0xd0] sm:$0xff]
      %v262 = vld [vmem:[#allocation2 + $0xd8] sm:$0xff]
      %v263 = vld [vmem:[#allocation2 + $0xe0] sm:$0xff]
      %v264 = vld [vmem:[#allocation2 + $0xe8] sm:$0xff]
      %v265 = vld [vmem:[#allocation2 + $0xf0] sm:$0xff]
      %v266 = vld [vmem:[#allocation2 + $0xf8] sm:$0xff]
      %v267 = vld [vmem:[%s1] sm:$0xff]
      %v268 = vld [vmem:[%s1 + $0x8] sm:$0xff]
      %v269 = vld [vmem:[%s1 + $0x10] sm:$0xff]
      %v270 = vld [vmem:[%s1 + $0x18] sm:$0xff]
      %v271 = vld [vmem:[%s1 + $0x20] sm:$0xff]
      %v272 = vld [vmem:[%s1 + $0x28] sm:$0xff]
      %v273 = vld [vmem:[%s1 + $0x30] sm:$0xff]
      %v274 = vld [vmem:[%s1 + $0x38] sm:$0xff]
      %v275 = vld [vmem:[%s1 + $0x40] sm:$0xff]
      %v276 = vld [vmem:[%s1 + $0x48] sm:$0xff]
      %v277 = vld [vmem:[%s1 + $0x50] sm:$0xff]
      %v278 = vld [vmem:[%s1 + $0x58] sm:$0xff]
      %v279 = vld [vmem:[%s1 + $0x60] sm:$0xff]
      %v280 = vld [vmem:[%s1 + $0x68] sm:$0xff]
      %v281 = vld [vmem:[%s1 + $0x70] sm:$0xff]
      %v282 = vld [vmem:[%s1 + $0x78] sm:$0xff]
      %283 = vmatpush.msra.mxu0 %v282
      %284 = vmatpush.msra.mxu0 %v281
      %285 = vmatpush.msra.mxu0 %v280
      %286 = vmatpush.msra.mxu0 %v279
      %287 = vmatpush.msra.mxu0 %v278
      %288 = vmatpush.msra.mxu0 %v277
      %289 = vmatpush.msra.mxu0 %v276
      %290 = vmatpush.msra.mxu0 %v275
      %291 = vmatpush.msra.mxu0 %v274
      %292 = vmatpush.msra.mxu0 %v273
      %293 = vmatpush.msra.mxu0 %v272
      %294 = vmatpush.msra.mxu0 %v271
      %295 = vmatpush.msra.mxu0 %v270
      %296 = vmatpush.msra.mxu0 %v269
      %297 = vmatpush.msra.mxu0 %v268
      %298 = vmatpush.msra.mxu0 %v267
      %299 = vmatmul.f32.gmra.mxu0 %v203
      %v300 = vpop.f32.mrf.mxu0
      %v301 = vadd.f32 0.0, %v300
      %302 = vmatmul.f32.gmra.mxu0 %v204
      %v303 = vpop.f32.mrf.mxu0
      %v304 = vadd.f32 0.0, %v303
      %305 = vmatmul.f32.gmra.mxu0 %v205
      %v306 = vpop.f32.mrf.mxu0
      %v307 = vadd.f32 0.0, %v306
      %308 = vmatmul.f32.gmra.mxu0 %v206
      %v309 = vpop.f32.mrf.mxu0
      %v310 = vadd.f32 0.0, %v309
      %311 = vmatmul.f32.gmra.mxu0 %v207
      %v312 = vpop.f32.mrf.mxu0
      %v313 = vadd.f32 0.0, %v312
      %314 = vmatmul.f32.gmra.mxu0 %v208
      %v315 = vpop.f32.mrf.mxu0
      %v316 = vadd.f32 0.0, %v315
      %317 = vmatmul.f32.gmra.mxu0 %v209
      %v318 = vpop.f32.mrf.mxu0
      %v319 = vadd.f32 0.0, %v318
      %320 = vmatmul.f32.gmra.mxu0 %v210
      %v321 = vpop.f32.mrf.mxu0
      %v322 = vadd.f32 0.0, %v321
      %323 = vmatmul.f32.gmra.mxu0 %v211
      %v324 = vpop.f32.mrf.mxu0
      %v325 = vadd.f32 0.0, %v324
      %326 = vmatmul.f32.gmra.mxu0 %v212
      %v327 = vpop.f32.mrf.mxu0
      %v328 = vadd.f32 0.0, %v327
      %329 = vmatmul.f32.gmra.mxu0 %v213
      %v330 = vpop.f32.mrf.mxu0
      %v331 = vadd.f32 0.0, %v330
      %332 = vmatmul.f32.gmra.mxu0 %v214
      %v333 = vpop.f32.mrf.mxu0
      %v334 = vadd.f32 0.0, %v333
      %335 = vmatmul.f32.gmra.mxu0 %v215
      %v336 = vpop.f32.mrf.mxu0
      %v337 = vadd.f32 0.0, %v336
      %338 = vmatmul.f32.gmra.mxu0 %v216
      %v339 = vpop.f32.mrf.mxu0
      %v340 = vadd.f32 0.0, %v339
      %341 = vmatmul.f32.gmra.mxu0 %v217
      %v342 = vpop.f32.mrf.mxu0
      %v343 = vadd.f32 0.0, %v342
      %344 = vmatmul.f32.gmra.mxu0 %v218
      %v345 = vpop.f32.mrf.mxu0
      %v346 = vadd.f32 0.0, %v345
      %347 = vmatmul.f32.gmra.mxu0 %v219
      %v348 = vpop.f32.mrf.mxu0
      %v349 = vadd.f32 0.0, %v348
      %350 = vmatmul.f32.gmra.mxu0 %v220
      %v351 = vpop.f32.mrf.mxu0
      %v352 = vadd.f32 0.0, %v351
      %353 = vmatmul.f32.gmra.mxu0 %v221
      %v354 = vpop.f32.mrf.mxu0
      %v355 = vadd.f32 0.0, %v354
      %356 = vmatmul.f32.gmra.mxu0 %v222
      %v357 = vpop.f32.mrf.mxu0
      %v358 = vadd.f32 0.0, %v357
      %359 = vmatmul.f32.gmra.mxu0 %v223
      %v360 = vpop.f32.mrf.mxu0
      %v361 = vadd.f32 0.0, %v360
      %362 = vmatmul.f32.gmra.mxu0 %v224
      %v363 = vpop.f32.mrf.mxu0
      %v364 = vadd.f32 0.0, %v363
      %365 = vmatmul.f32.gmra.mxu0 %v225
      %v366 = vpop.f32.mrf.mxu0
      %v367 = vadd.f32 0.0, %v366
      %368 = vmatmul.f32.gmra.mxu0 %v226
      %v369 = vpop.f32.mrf.mxu0
      %v370 = vadd.f32 0.0, %v369
      %371 = vmatmul.f32.gmra.mxu0 %v227
      %v372 = vpop.f32.mrf.mxu0
      %v373 = vadd.f32 0.0, %v372
      %374 = vmatmul.f32.gmra.mxu0 %v228
      %v375 = vpop.f32.mrf.mxu0
      %v376 = vadd.f32 0.0, %v375
      %377 = vmatmul.f32.gmra.mxu0 %v229
      %v378 = vpop.f32.mrf.mxu0
      %v379 = vadd.f32 0.0, %v378
      %380 = vmatmul.f32.gmra.mxu0 %v230
      %v381 = vpop.f32.mrf.mxu0
      %v382 = vadd.f32 0.0, %v381
      %383 = vmatmul.f32.gmra.mxu0 %v231
      %v384 = vpop.f32.mrf.mxu0
      %v385 = vadd.f32 0.0, %v384
      %386 = vmatmul.f32.gmra.mxu0 %v232
      %v387 = vpop.f32.mrf.mxu0
      %v388 = vadd.f32 0.0, %v387
      %389 = vmatmul.f32.gmra.mxu0 %v233
      %v390 = vpop.f32.mrf.mxu0
      %v391 = vadd.f32 0.0, %v390
      %392 = vmatmul.f32.gmra.mxu0 %v234
      %v393 = vpop.f32.mrf.mxu0
      %v394 = vadd.f32 0.0, %v393
      %395 = vdwg.mxu0
      %v396 = vadd.f32 %v235, %v301
      %v397 = vadd.f32 %v236, %v304
      %v398 = vadd.f32 %v237, %v307
      %v399 = vadd.f32 %v238, %v310
      %v400 = vadd.f32 %v239, %v313
      %v401 = vadd.f32 %v240, %v316
      %v402 = vadd.f32 %v241, %v319
      %v403 = vadd.f32 %v242, %v322
      %v404 = vadd.f32 %v243, %v325
      %v405 = vadd.f32 %v244, %v328
      %v406 = vadd.f32 %v245, %v331
      %v407 = vadd.f32 %v246, %v334
      %v408 = vadd.f32 %v247, %v337
      %v409 = vadd.f32 %v248, %v340
      %v410 = vadd.f32 %v249, %v343
      %v411 = vadd.f32 %v250, %v346
      %v412 = vadd.f32 %v251, %v349
      %v413 = vadd.f32 %v252, %v352
      %v414 = vadd.f32 %v253, %v355
      %v415 = vadd.f32 %v254, %v358
      %v416 = vadd.f32 %v255, %v361
      %v417 = vadd.f32 %v256, %v364
      %v418 = vadd.f32 %v257, %v367
      %v419 = vadd.f32 %v258, %v370
      %v420 = vadd.f32 %v259, %v373
      %v421 = vadd.f32 %v260, %v376
      %v422 = vadd.f32 %v261, %v379
      %v423 = vadd.f32 %v262, %v382
      %v424 = vadd.f32 %v263, %v385
      %v425 = vadd.f32 %v264, %v388
      %v426 = vadd.f32 %v265, %v391
      %v427 = vadd.f32 %v266, %v394
      %428 = vst [vmem:[#allocation2] sm:$0xff] %v396
      %429 = vst [vmem:[#allocation2 + $0x8] sm:$0xff] %v397
      %430 = vst [vmem:[#allocation2 + $0x10] sm:$0xff] %v398
      %431 = vst [vmem:[#allocation2 + $0x18] sm:$0xff] %v399
      %432 = vst [vmem:[#allocation2 + $0x20] sm:$0xff] %v400
      %433 = vst [vmem:[#allocation2 + $0x28] sm:$0xff] %v401
      %434 = vst [vmem:[#allocation2 + $0x30] sm:$0xff] %v402
      %435 = vst [vmem:[#allocation2 + $0x38] sm:$0xff] %v403
      %436 = vst [vmem:[#allocation2 + $0x40] sm:$0xff] %v404
      %437 = vst [vmem:[#allocation2 + $0x48] sm:$0xff] %v405
      %438 = vst [vmem:[#allocation2 + $0x50] sm:$0xff] %v406
      %439 = vst [vmem:[#allocation2 + $0x58] sm:$0xff] %v407
      %440 = vst [vmem:[#allocation2 + $0x60] sm:$0xff] %v408
      %441 = vst [vmem:[#allocation2 + $0x68] sm:$0xff] %v409
      %442 = vst [vmem:[#allocation2 + $0x70] sm:$0xff] %v410
      %443 = vst [vmem:[#allocation2 + $0x78] sm:$0xff] %v411
      %444 = vst [vmem:[#allocation2 + $0x80] sm:$0xff] %v412
      %445 = vst [vmem:[#allocation2 + $0x88] sm:$0xff] %v413
      %446 = vst [vmem:[#allocation2 + $0x90] sm:$0xff] %v414
      %447 = vst [vmem:[#allocation2 + $0x98] sm:$0xff] %v415
      %448 = vst [vmem:[#allocation2 + $0xa0] sm:$0xff] %v416
      %449 = vst [vmem:[#allocation2 + $0xa8] sm:$0xff] %v417
      %450 = vst [vmem:[#allocation2 + $0xb0] sm:$0xff] %v418
      %451 = vst [vmem:[#allocation2 + $0xb8] sm:$0xff] %v419
      %452 = vst [vmem:[#allocation2 + $0xc0] sm:$0xff] %v420
      %453 = vst [vmem:[#allocation2 + $0xc8] sm:$0xff] %v421
      %454 = vst [vmem:[#allocation2 + $0xd0] sm:$0xff] %v422
      %455 = vst [vmem:[#allocation2 + $0xd8] sm:$0xff] %v423
      %456 = vst [vmem:[#allocation2 + $0xe0] sm:$0xff] %v424
      %457 = vst [vmem:[#allocation2 + $0xe8] sm:$0xff] %v425
      %458 = vst [vmem:[#allocation2 + $0xf0] sm:$0xff] %v426
      %459 = vst [vmem:[#allocation2 + $0xf8] sm:$0xff] %v427
      %v460 = vld [vmem:[#allocation2] sm:$0xff]
      %v461 = vld [vmem:[#allocation2 + $0x8] sm:$0xff]
      %v462 = vld [vmem:[#allocation2 + $0x10] sm:$0xff]
      %v463 = vld [vmem:[#allocation2 + $0x18] sm:$0xff]
      %v464 = vld [vmem:[#allocation2 + $0x20] sm:$0xff]
      %v465 = vld [vmem:[#allocation2 + $0x28] sm:$0xff]
      %v466 = vld [vmem:[#allocation2 + $0x30] sm:$0xff]
      %v467 = vld [vmem:[#allocation2 + $0x38] sm:$0xff]
      %v468 = vld [vmem:[#allocation2 + $0x40] sm:$0xff]
      %v469 = vld [vmem:[#allocation2 + $0x48] sm:$0xff]
      %v470 = vld [vmem:[#allocation2 + $0x50] sm:$0xff]
      %v471 = vld [vmem:[#allocation2 + $0x58] sm:$0xff]
      %v472 = vld [vmem:[#allocation2 + $0x60] sm:$0xff]
      %v473 = vld [vmem:[#allocation2 + $0x68] sm:$0xff]
      %v474 = vld [vmem:[#allocation2 + $0x70] sm:$0xff]
      %v475 = vld [vmem:[#allocation2 + $0x78] sm:$0xff]
      %v476 = vld [vmem:[#allocation2 + $0x80] sm:$0xff]
      %v477 = vld [vmem:[#allocation2 + $0x88] sm:$0xff]
      %v478 = vld [vmem:[#allocation2 + $0x90] sm:$0xff]
      %v479 = vld [vmem:[#allocation2 + $0x98] sm:$0xff]
      %v480 = vld [vmem:[#allocation2 + $0xa0] sm:$0xff]
      %v481 = vld [vmem:[#allocation2 + $0xa8] sm:$0xff]
      %v482 = vld [vmem:[#allocation2 + $0xb0] sm:$0xff]
      %v483 = vld [vmem:[#allocation2 + $0xb8] sm:$0xff]
      %v484 = vld [vmem:[#allocation2 + $0xc0] sm:$0xff]
      %v485 = vld [vmem:[#allocation2 + $0xc8] sm:$0xff]
      %v486 = vld [vmem:[#allocation2 + $0xd0] sm:$0xff]
      %v487 = vld [vmem:[#allocation2 + $0xd8] sm:$0xff]
      %v488 = vld [vmem:[#allocation2 + $0xe0] sm:$0xff]
      %v489 = vld [vmem:[#allocation2 + $0xe8] sm:$0xff]
      %v490 = vld [vmem:[#allocation2 + $0xf0] sm:$0xff]
      %v491 = vld [vmem:[#allocation2 + $0xf8] sm:$0xff]
      %v492 = vld [vmem:[%s2] sm:$0x1]
      %v494 = vperm.slane %v492, 0
      %v496 = vadd.f32 %v460, %v494
      %v497 = vadd.f32 %v461, %v494
      %v498 = vadd.f32 %v462, %v494
      %v499 = vadd.f32 %v463, %v494
      %v500 = vadd.f32 %v464, %v494
      %v501 = vadd.f32 %v465, %v494
      %v502 = vadd.f32 %v466, %v494
      %v503 = vadd.f32 %v467, %v494
      %v504 = vadd.f32 %v468, %v494
      %v505 = vadd.f32 %v469, %v494
      %v506 = vadd.f32 %v470, %v494
      %v507 = vadd.f32 %v471, %v494
      %v508 = vadd.f32 %v472, %v494
      %v509 = vadd.f32 %v473, %v494
      %v510 = vadd.f32 %v474, %v494
      %v511 = vadd.f32 %v475, %v494
      %v512 = vadd.f32 %v476, %v494
      %v513 = vadd.f32 %v477, %v494
      %v514 = vadd.f32 %v478, %v494
      %v515 = vadd.f32 %v479, %v494
      %v516 = vadd.f32 %v480, %v494
      %v517 = vadd.f32 %v481, %v494
      %v518 = vadd.f32 %v482, %v494
      %v519 = vadd.f32 %v483, %v494
      %v520 = vadd.f32 %v484, %v494
      %v521 = vadd.f32 %v485, %v494
      %v522 = vadd.f32 %v486, %v494
      %v523 = vadd.f32 %v487, %v494
      %v524 = vadd.f32 %v488, %v494
      %v525 = vadd.f32 %v489, %v494
      %v526 = vadd.f32 %v490, %v494
      %v527 = vadd.f32 %v491, %v494
      %v528 = vmax.f32 %v496, 0.0
      %v529 = vmax.f32 %v497, 0.0
      %v530 = vmax.f32 %v498, 0.0
      %v531 = vmax.f32 %v499, 0.0
      %v532 = vmax.f32 %v500, 0.0
      %v533 = vmax.f32 %v501, 0.0
      %v534 = vmax.f32 %v502, 0.0
      %v535 = vmax.f32 %v503, 0.0
      %v536 = vmax.f32 %v504, 0.0
      %v537 = vmax.f32 %v505, 0.0
      %v538 = vmax.f32 %v506, 0.0
      %v539 = vmax.f32 %v507, 0.0
      %v540 = vmax.f32 %v508, 0.0
      %v541 = vmax.f32 %v509, 0.0
      %v542 = vmax.f32 %v510, 0.0
      %v543 = vmax.f32 %v511, 0.0
      %v544 = vmax.f32 %v512, 0.0
      %v545 = vmax.f32 %v513, 0.0
      %v546 = vmax.f32 %v514, 0.0
      %v547 = vmax.f32 %v515, 0.0
      %v548 = vmax.f32 %v516, 0.0
      %v549 = vmax.f32 %v517, 0.0
      %v550 = vmax.f32 %v518, 0.0
      %v551 = vmax.f32 %v519, 0.0
      %v552 = vmax.f32 %v520, 0.0
      %v553 = vmax.f32 %v521, 0.0
      %v554 = vmax.f32 %v522, 0.0
      %v555 = vmax.f32 %v523, 0.0
      %v556 = vmax.f32 %v524, 0.0
      %v557 = vmax.f32 %v525, 0.0
      %v558 = vmax.f32 %v526, 0.0
      %v559 = vmax.f32 %v527, 0.0
      %560 = vst [vmem:[%s170] sm:$0xff] %v528
      %561 = vst [vmem:[%s170 + $0x8] sm:$0xff] %v529
      %562 = vst [vmem:[%s170 + $0x10] sm:$0xff] %v530
      %563 = vst [vmem:[%s170 + $0x18] sm:$0xff] %v531
      %564 = vst [vmem:[%s170 + $0x20] sm:$0xff] %v532
      %565 = vst [vmem:[%s170 + $0x28] sm:$0xff] %v533
      %566 = vst [vmem:[%s170 + $0x30] sm:$0xff] %v534
      %567 = vst [vmem:[%s170 + $0x38] sm:$0xff] %v535
      %568 = vst [vmem:[%s170 + $0x40] sm:$0xff] %v536
      %569 = vst [vmem:[%s170 + $0x48] sm:$0xff] %v537
      %570 = vst [vmem:[%s170 + $0x50] sm:$0xff] %v538
      %571 = vst [vmem:[%s170 + $0x58] sm:$0xff] %v539
      %572 = vst [vmem:[%s170 + $0x60] sm:$0xff] %v540
      %573 = vst [vmem:[%s170 + $0x68] sm:$0xff] %v541
      %574 = vst [vmem:[%s170 + $0x70] sm:$0xff] %v542
      %575 = vst [vmem:[%s170 + $0x78] sm:$0xff] %v543
      %576 = vst [vmem:[%s170 + $0x80] sm:$0xff] %v544
      %577 = vst [vmem:[%s170 + $0x88] sm:$0xff] %v545
      %578 = vst [vmem:[%s170 + $0x90] sm:$0xff] %v546
      %579 = vst [vmem:[%s170 + $0x98] sm:$0xff] %v547
      %580 = vst [vmem:[%s170 + $0xa0] sm:$0xff] %v548
      %581 = vst [vmem:[%s170 + $0xa8] sm:$0xff] %v549
      %582 = vst [vmem:[%s170 + $0xb0] sm:$0xff] %v550
      %583 = vst [vmem:[%s170 + $0xb8] sm:$0xff] %v551
      %584 = vst [vmem:[%s170 + $0xc0] sm:$0xff] %v552
      %585 = vst [vmem:[%s170 + $0xc8] sm:$0xff] %v553
      %586 = vst [vmem:[%s170 + $0xd0] sm:$0xff] %v554
      %587 = vst [vmem:[%s170 + $0xd8] sm:$0xff] %v555
      %588 = vst [vmem:[%s170 + $0xe0] sm:$0xff] %v556
      %589 = vst [vmem:[%s170 + $0xe8] sm:$0xff] %v557
      %590 = vst [vmem:[%s170 + $0xf0] sm:$0xff] %v558
      %591 = vst [vmem:[%s170 + $0xf8] sm:$0xff] %v559
      %p592 = scmp.lt.s32.totalorder %s14, 1
      %s593 = scalar_select %p592, %s14, 1
      %s594 = smul.addr %s593, 32
      %s595 = smul.addr %s594, 8
      %s596 = scalar_lea.vmem %s3, %s595
      // Predicated region
      $region33: #{_spos_forward_jit.3} parent=31 // pred_check
        %p597 = pneg %p100
      $region34: #{_spos_forward_jit.3} parent=31 // pred_check_branch
        %599 = sbr.rel (%p597) target = $region36
      $region35: #{_spos_forward_jit.3} parent=31 // pred_region
        _
      $region36: #{_spos_forward_jit.3} parent=31 // pred_fallthru
        _
    $region32: #{_spos_forward_jit.3} parent=5 // pred_fallthru
      _
    %p600 = scmp.le.s32.totalorder 2, %s9
    // Predicated region
    $region37: #{_spos_forward_jit.3} parent=5 // pred_check
      %p601 = pneg %p600
    $region38: #{_spos_forward_jit.3} parent=5 // pred_check_branch
      %603 = sbr.rel (%p601) target = $region40
    $region39: #{_spos_forward_jit.3} parent=5 // pred_region
      %s604 = ssub.s32 %s9, 2
      // Predicated region
      $region41: #{_spos_forward_jit.3} parent=39 // pred_check
        %p605 = pneg %p106
      $region42: #{_spos_forward_jit.3} parent=39 // pred_check_branch
        %607 = sbr.rel (%p605) target = $region44
      $region43: #{_spos_forward_jit.3} parent=39 // pred_region
        %p608 = scmp.lt.s32.totalorder %s15, 1
        %s609 = scalar_select %p608, %s15, 1
        %s610 = smul.addr %s609, 32
        %s611 = smul.addr %s610, 8
        %s612 = scalar_lea.vmem %s3, %s611
      $region44: #{_spos_forward_jit.3} parent=39 // pred_fallthru
        _
    $region40: #{_spos_forward_jit.3} parent=5 // pred_fallthru
      _
  $region6: #{_spos_forward_jit.3} parent=0 // loop_footer
    %s13 = sadd.s32 1, %s9
  $region7: #{_spos_forward_jit.3} parent=0 // loop_footer_branch
    %8 = sbr.rel target = $region3
  $region8: #{_spos_forward_jit.3} parent=0 // loop_exit
    _

// kernel: _spos_forward_jit.2
$region0: #{_spos_forward_jit.2}
  #allocation0 [shape = 'u32[]', space=smem, size = 0x4, offset = 0x4, fixed_abs, tag = 'smem constant byte address 0x4 - core index']
  #allocation1 [shape = 'u32[72,128]{1,0:T(1,128)}', space=vmem, size = 0x9000, scoped, tag = 'internal scratch']
  #allocation2 [shape = 'f32[256,128]{1,0:T(8,128)}', space=vmem, size = 0x20000, scoped, tag = 'scratch operand']
  %s0 = inlined_call_operand.vmem [shape: f32[2,18,18,128], index: 0, kind: input, shape index: {}]
  %s1 = inlined_call_operand.vmem [shape: f32[9,128,128], index: 1, kind: input, shape index: {}]
  %s2 = inlined_call_operand.vmem [shape: f32[1,128], index: 2, kind: input, shape index: {}]
  %s3 = inlined_call_operand.vmem [shape: f32[2,16,16,128], index: 3, kind: output, shape index: {}]
  %s4 = sld [smem:[#allocation0]]
  $region45: #{_spos_forward_jit.2} parent=0
    _
  %s6 = ssub.s32 1, %s4
  %s7 = scalar_select 0, %s6, %s4
  loop: start=0, step=1, limit=4
  $region2: #{_spos_forward_jit.2} parent=0 // loop_pre_header
    _
  $region3: #{_spos_forward_jit.2} parent=0 // loop_header
    %s9 = sphi 0, %s13
    %p10 = scmp.ge.s32.totalorder %s9, 4
    %s19 = sphi 0, %s21
    %s22 = sphi 0, %s19
    %s23 = sphi 0, %s22
    %s39 = sphi 0, %s23
    %s43 = sphi 0, %s43
    %s45 = sphi 0, %s43
    %s46 = sphi 0, %s45
    %s60 = sphi 0, %s46
    %s64 = sphi 0, %s64
    %s66 = sphi 0, %s64
    %s67 = sphi 0, %s66
    %s81 = sphi 0, %s67
    %s87 = sphi 0, %s89
    %s90 = sphi 0, %s87
    %s91 = sphi 0, %s90
    %s107 = sphi 0, %s91
  $region4: #{_spos_forward_jit.2} parent=0 // loop_header_branch
    %12 = sbr.rel (%p10) target = $region8
  $region5: #{_spos_forward_jit.2} parent=0 // loop_body
    %s14 = ssub.s32 %s9, 1
    %s15 = ssub.s32 %s9, 2
    %s16 = sadd.s32 %s9, 1
    %s17 = ssub.s32 %s9, %s16
    %p18 = scmp.eq.s32.totalorder %s17, 0
    %s20 = sadd.s32 %s19, 1
    %s21 = scalar_select %p18, %s19, %s20
    %p24 = pneg %p18
    %p25 = scmp.eq.s32.totalorder %s9, 1
    %p26 = por %p24, %p25
    %p27 = scmp.ne.s32.totalorder %s19, %s22
    %p28 = scmp.eq.s32.totalorder %s9, 0
    %p29 = por %p27, %p28
    %p30 = scmp.ne.s32.totalorder %s19, %s22
    %p31 = scmp.eq.s32.totalorder %s14, 1
    %p32 = por %p30, %p31
    %p33 = scmp.ne.s32.totalorder %s22, %s23
    %p34 = scmp.eq.s32.totalorder %s14, 0
    %p35 = por %p33, %p34
    %p36 = scmp.ne.s32.totalorder %s22, %s23
    %p37 = scmp.eq.s32.totalorder %s15, 1
    %p38 = por %p36, %p37
    %p40 = scmp.ne.s32.totalorder %s23, %s39
    %p41 = scmp.eq.s32.totalorder %s15, 0
    %p42 = por %p40, %p41
    %s44 = sadd.s32 %s43, 1
    %p47 = scmp.eq.s32.totalorder %s9, 1
    %p48 = scmp.ne.s32.totalorder %s43, %s45
    %p49 = scmp.eq.s32.totalorder %s9, 0
    %p50 = por %p48, %p49
    %p51 = scmp.ne.s32.totalorder %s43, %s45
    %p52 = scmp.eq.s32.totalorder %s14, 1
    %p53 = por %p51, %p52
    %p54 = scmp.ne.s32.totalorder %s45, %s46
    %p55 = scmp.eq.s32.totalorder %s14, 0
    %p56 = por %p54, %p55
    %p57 = scmp.ne.s32.totalorder %s45, %s46
    %p58 = scmp.eq.s32.totalorder %s15, 1
    %p59 = por %p57, %p58
    %p61 = scmp.ne.s32.totalorder %s46, %s60
    %p62 = scmp.eq.s32.totalorder %s15, 0
    %p63 = por %p61, %p62
    %s65 = sadd.s32 %s64, 1
    %p68 = scmp.eq.s32.totalorder %s9, 1
    %p69 = scmp.ne.s32.totalorder %s64, %s66
    %p70 = scmp.eq.s32.totalorder %s9, 0
    %p71 = por %p69, %p70
    %p72 = scmp.ne.s32.totalorder %s64, %s66
    %p73 = scmp.eq.s32.totalorder %s14, 1
    %p74 = por %p72, %p73
    %p75 = scmp.ne.s32.totalorder %s66, %s67
    %p76 = scmp.eq.s32.totalorder %s14, 0
    %p77 = por %p75, %p76
    %p78 = scmp.ne.s32.totalorder %s66, %s67
    %p79 = scmp.eq.s32.totalorder %s15, 1
    %p80 = por %p78, %p79
    %p82 = scmp.ne.s32.totalorder %s67, %s81
    %p83 = scmp.eq.s32.totalorder %s15, 0
    %p84 = por %p82, %p83
    %s85 = ssub.s32 %s9, %s16
    %p86 = scmp.eq.s32.totalorder %s85, 0
    %s88 = sadd.s32 %s87, 1
    %s89 = scalar_select %p86, %s87, %s88
    %p92 = pneg %p86
    %p93 = scmp.eq.s32.totalorder %s9, 1
    %p94 = por %p92, %p93
    %p95 = scmp.ne.s32.totalorder %s87, %s90
    %p96 = scmp.eq.s32.totalorder %s9, 0
    %p97 = por %p95, %p96
    %p98 = scmp.ne.s32.totalorder %s87, %s90
    %p99 = scmp.eq.s32.totalorder %s14, 1
    %p100 = por %p98, %p99
    %p101 = scmp.ne.s32.totalorder %s90, %s91
    %p102 = scmp.eq.s32.totalorder %s14, 0
    %p103 = por %p101, %p102
    %p104 = scmp.ne.s32.totalorder %s90, %s91
    %p105 = scmp.eq.s32.totalorder %s15, 1
    %p106 = por %p104, %p105
    %p108 = scmp.ne.s32.totalorder %s91, %s107
    %p109 = scmp.eq.s32.totalorder %s15, 0
    %p110 = por %p108, %p109
    %p111 = scmp.le.s32.totalorder 1, %s9
    %p112 = scmp.lt.s32.totalorder %s9, 3
    %p113 = pnand %p111, %p112
    %p114 = pneg %p113
    // Predicated region
    $region9: #{_spos_forward_jit.2} parent=5 // pred_check
      _
    $region10: #{_spos_forward_jit.2} parent=5 // pred_check_branch
      %116 = sbr.rel (%p113) target = $region12
    $region11: #{_spos_forward_jit.2} parent=5 // pred_region
      %s117 = ssub.s32 %s9, 1
      // Predicated region
      $region13: #{_spos_forward_jit.2} parent=11 // pred_check
        %p118 = pneg %p56
      $region14: #{_spos_forward_jit.2} parent=11 // pred_check_branch
        %120 = sbr.rel (%p118) target = $region16
      $region15: #{_spos_forward_jit.2} parent=11 // pred_region
        _
      $region16: #{_spos_forward_jit.2} parent=11 // pred_fallthru
        _
      // Predicated region
      $region17: #{_spos_forward_jit.2} parent=11 // pred_check
        %p121 = pneg %p77
      $region18: #{_spos_forward_jit.2} parent=11 // pred_check_branch
        %123 = sbr.rel (%p121) target = $region20
      $region19: #{_spos_forward_jit.2} parent=11 // pred_region
        _
      $region20: #{_spos_forward_jit.2} parent=11 // pred_fallthru
        _
    $region12: #{_spos_forward_jit.2} parent=5 // pred_fallthru
      _
    %p124 = scmp.lt.s32.totalorder %s9, 2
    // Predicated region
    $region21: #{_spos_forward_jit.2} parent=5 // pred_check
      %p125 = pneg %p124
    $region22: #{_spos_forward_jit.2} parent=5 // pred_check_branch
      %127 = sbr.rel (%p125) target = $region24
    $region23: #{_spos_forward_jit.2} parent=5 // pred_region
      // Predicated region
      $region25: #{_spos_forward_jit.2} parent=23 // pred_check
        %p128 = pneg %p29
      $region26: #{_spos_forward_jit.2} parent=23 // pred_check_branch
        %130 = sbr.rel (%p128) target = $region28
      $region27: #{_spos_forward_jit.2} parent=23 // pred_region
        %p131 = scmp.lt.s32.totalorder %s9, 1
        %s132 = scalar_select %p131, %s9, 1
        %s133 = smul.addr %s132, 54
        %s134 = smul.addr %s133, 8
        %s135 = scalar_lea.vmem %s0, %s134
      $region28: #{_spos_forward_jit.2} parent=23 // pred_fallthru
        _
    $region24: #{_spos_forward_jit.2} parent=5 // pred_fallthru
      _
    %p136 = scmp.le.s32.totalorder 1, %s9
    %p137 = scmp.lt.s32.totalorder %s9, 3
    %p138 = pnand %p136, %p137
    %p139 = pneg %p138
    // Predicated region
    $region29: #{_spos_forward_jit.2} parent=5 // pred_check
      _
    $region30: #{_spos_forward_jit.2} parent=5 // pred_check_branch
      %141 = sbr.rel (%p138) target = $region32
    $region31: #{_spos_forward_jit.2} parent=5 // pred_region
      %s142 = ssub.s32 %s9, 1
      %p143 = scmp.lt.s32.totalorder %s14, 1
      %s144 = scalar_select %p143, %s14, 1
      %s145 = smul.addr %s144, 54
      %s146 = smul.addr %s145, 8
      %s147 = scalar_lea.vmem %s0, %s146
      %p148 = pneg %p35
      %p149 = pneg %p32
      %p150 = pneg %p56
      %p151 = pneg %p53
      %p152 = pneg %p77
      %p153 = pneg %p74
      %p154 = pneg %p103
      %p155 = pneg %p100
      %p156 = scmp.lt.s32.totalorder %s14, 1
      %s157 = scalar_select %p156, %s14, 1
      %s158 = smul.addr %s157, 32
      %s159 = smul.addr %s158, 8
      %s160 = scalar_lea.vmem %s3, %s159
      %p161 = scmp.lt.s32.totalorder %s14, 1
      %s162 = scalar_select %p161, %s14, 1
      %s163 = smul.addr %s162, 54
      %s164 = smul.addr %s163, 8
      %s165 = scalar_lea.vmem %s0, %s164
      %p166 = scmp.lt.s32.totalorder %s14, 1
      %s167 = scalar_select %p166, %s14, 1
      %s168 = smul.addr %s167, 32
      %s169 = smul.addr %s168, 8
      %s170 = scalar_lea.vmem %s3, %s169
      %171 = vst [vmem:[#allocation2] sm:$0xff] 0.0
      %172 = vst [vmem:[#allocation2 + $0x8] sm:$0xff] 0.0
      %173 = vst [vmem:[#allocation2 + $0x10] sm:$0xff] 0.0
      %174 = vst [vmem:[#allocation2 + $0x18] sm:$0xff] 0.0
      %175 = vst [vmem:[#allocation2 + $0x20] sm:$0xff] 0.0
      %176 = vst [vmem:[#allocation2 + $0x28] sm:$0xff] 0.0
      %177 = vst [vmem:[#allocation2 + $0x30] sm:$0xff] 0.0
      %178 = vst [vmem:[#allocation2 + $0x38] sm:$0xff] 0.0
      %179 = vst [vmem:[#allocation2 + $0x40] sm:$0xff] 0.0
      %180 = vst [vmem:[#allocation2 + $0x48] sm:$0xff] 0.0
      %181 = vst [vmem:[#allocation2 + $0x50] sm:$0xff] 0.0
      %182 = vst [vmem:[#allocation2 + $0x58] sm:$0xff] 0.0
      %183 = vst [vmem:[#allocation2 + $0x60] sm:$0xff] 0.0
      %184 = vst [vmem:[#allocation2 + $0x68] sm:$0xff] 0.0
      %185 = vst [vmem:[#allocation2 + $0x70] sm:$0xff] 0.0
      %186 = vst [vmem:[#allocation2 + $0x78] sm:$0xff] 0.0
      %187 = vst [vmem:[#allocation2 + $0x80] sm:$0xff] 0.0
      %188 = vst [vmem:[#allocation2 + $0x88] sm:$0xff] 0.0
      %189 = vst [vmem:[#allocation2 + $0x90] sm:$0xff] 0.0
      %190 = vst [vmem:[#allocation2 + $0x98] sm:$0xff] 0.0
      %191 = vst [vmem:[#allocation2 + $0xa0] sm:$0xff] 0.0
      %192 = vst [vmem:[#allocation2 + $0xa8] sm:$0xff] 0.0
      %193 = vst [vmem:[#allocation2 + $0xb0] sm:$0xff] 0.0
      %194 = vst [vmem:[#allocation2 + $0xb8] sm:$0xff] 0.0
      %195 = vst [vmem:[#allocation2 + $0xc0] sm:$0xff] 0.0
      %196 = vst [vmem:[#allocation2 + $0xc8] sm:$0xff] 0.0
      %197 = vst [vmem:[#allocation2 + $0xd0] sm:$0xff] 0.0
      %198 = vst [vmem:[#allocation2 + $0xd8] sm:$0xff] 0.0
      %199 = vst [vmem:[#allocation2 + $0xe0] sm:$0xff] 0.0
      %200 = vst [vmem:[#allocation2 + $0xe8] sm:$0xff] 0.0
      %201 = vst [vmem:[#allocation2 + $0xf0] sm:$0xff] 0.0
      %202 = vst [vmem:[#allocation2 + $0xf8] sm:$0xff] 0.0
      %v203 = vld [vmem:[%s165] sm:$0xff]
      %v204 = vld [vmem:[%s165 + $0x8] sm:$0xff]
      %v205 = vld [vmem:[%s165 + $0x18] sm:$0xff]
      %v206 = vld [vmem:[%s165 + $0x20] sm:$0xff]
      %v207 = vld [vmem:[%s165 + $0x30] sm:$0xff]
      %v208 = vld [vmem:[%s165 + $0x38] sm:$0xff]
      %v209 = vld [vmem:[%s165 + $0x48] sm:$0xff]
      %v210 = vld [vmem:[%s165 + $0x50] sm:$0xff]
      %v211 = vld [vmem:[%s165 + $0x60] sm:$0xff]
      %v212 = vld [vmem:[%s165 + $0x68] sm:$0xff]
      %v213 = vld [vmem:[%s165 + $0x78] sm:$0xff]
      %v214 = vld [vmem:[%s165 + $0x80] sm:$0xff]
      %v215 = vld [vmem:[%s165 + $0x90] sm:$0xff]
      %v216 = vld [vmem:[%s165 + $0x98] sm:$0xff]
      %v217 = vld [vmem:[%s165 + $0xa8] sm:$0xff]
      %v218 = vld [vmem:[%s165 + $0xb0] sm:$0xff]
      %v219 = vld [vmem:[%s165 + $0xc0] sm:$0xff]
      %v220 = vld [vmem:[%s165 + $0xc8] sm:$0xff]
      %v221 = vld [vmem:[%s165 + $0xd8] sm:$0xff]
      %v222 = vld [vmem:[%s165 + $0xe0] sm:$0xff]
      %v223 = vld [vmem:[%s165 + $0xf0] sm:$0xff]
      %v224 = vld [vmem:[%s165 + $0xf8] sm:$0xff]
      %v225 = vld [vmem:[%s165 + $0x108] sm:$0xff]
      %v226 = vld [vmem:[%s165 + $0x110] sm:$0xff]
      %v227 = vld [vmem:[%s165 + $0x120] sm:$0xff]
      %v228 = vld [vmem:[%s165 + $0x128] sm:$0xff]
      %v229 = vld [vmem:[%s165 + $0x138] sm:$0xff]
      %v230 = vld [vmem:[%s165 + $0x140] sm:$0xff]
      %v231 = vld [vmem:[%s165 + $0x150] sm:$0xff]
      %v232 = vld [vmem:[%s165 + $0x158] sm:$0xff]
      %v233 = vld [vmem:[%s165 + $0x168] sm:$0xff]
      %v234 = vld [vmem:[%s165 + $0x170] sm:$0xff]
      %v235 = vld [vmem:[#allocation2] sm:$0xff]
      %v236 = vld [vmem:[#allocation2 + $0x8] sm:$0xff]
      %v237 = vld [vmem:[#allocation2 + $0x10] sm:$0xff]
      %v238 = vld [vmem:[#allocation2 + $0x18] sm:$0xff]
      %v239 = vld [vmem:[#allocation2 + $0x20] sm:$0xff]
      %v240 = vld [vmem:[#allocation2 + $0x28] sm:$0xff]
      %v241 = vld [vmem:[#allocation2 + $0x30] sm:$0xff]
      %v242 = vld [vmem:[#allocation2 + $0x38] sm:$0xff]
      %v243 = vld [vmem:[#allocation2 + $0x40] sm:$0xff]
      %v244 = vld [vmem:[#allocation2 + $0x48] sm:$0xff]
      %v245 = vld [vmem:[#allocation2 + $0x50] sm:$0xff]
      %v246 = vld [vmem:[#allocation2 + $0x58] sm:$0xff]
      %v247 = vld [vmem:[#allocation2 + $0x60] sm:$0xff]
      %v248 = vld [vmem:[#allocation2 + $0x68] sm:$0xff]
      %v249 = vld [vmem:[#allocation2 + $0x70] sm:$0xff]
      %v250 = vld [vmem:[#allocation2 + $0x78] sm:$0xff]
      %v251 = vld [vmem:[#allocation2 + $0x80] sm:$0xff]
      %v252 = vld [vmem:[#allocation2 + $0x88] sm:$0xff]
      %v253 = vld [vmem:[#allocation2 + $0x90] sm:$0xff]
      %v254 = vld [vmem:[#allocation2 + $0x98] sm:$0xff]
      %v255 = vld [vmem:[#allocation2 + $0xa0] sm:$0xff]
      %v256 = vld [vmem:[#allocation2 + $0xa8] sm:$0xff]
      %v257 = vld [vmem:[#allocation2 + $0xb0] sm:$0xff]
      %v258 = vld [vmem:[#allocation2 + $0xb8] sm:$0xff]
      %v259 = vld [vmem:[#allocation2 + $0xc0] sm:$0xff]
      %v260 = vld [vmem:[#allocation2 + $0xc8] sm:$0xff]
      %v261 = vld [vmem:[#allocation2 + $0xd0] sm:$0xff]
      %v262 = vld [vmem:[#allocation2 + $0xd8] sm:$0xff]
      %v263 = vld [vmem:[#allocation2 + $0xe0] sm:$0xff]
      %v264 = vld [vmem:[#allocation2 + $0xe8] sm:$0xff]
      %v265 = vld [vmem:[#allocation2 + $0xf0] sm:$0xff]
      %v266 = vld [vmem:[#allocation2 + $0xf8] sm:$0xff]
      %v267 = vld [vmem:[%s1] sm:$0xff]
      %v268 = vld [vmem:[%s1 + $0x8] sm:$0xff]
      %v269 = vld [vmem:[%s1 + $0x10] sm:$0xff]
      %v270 = vld [vmem:[%s1 + $0x18] sm:$0xff]
      %v271 = vld [vmem:[%s1 + $0x20] sm:$0xff]
      %v272 = vld [vmem:[%s1 + $0x28] sm:$0xff]
      %v273 = vld [vmem:[%s1 + $0x30] sm:$0xff]
      %v274 = vld [vmem:[%s1 + $0x38] sm:$0xff]
      %v275 = vld [vmem:[%s1 + $0x40] sm:$0xff]
      %v276 = vld [vmem:[%s1 + $0x48] sm:$0xff]
      %v277 = vld [vmem:[%s1 + $0x50] sm:$0xff]
      %v278 = vld [vmem:[%s1 + $0x58] sm:$0xff]
      %v279 = vld [vmem:[%s1 + $0x60] sm:$0xff]
      %v280 = vld [vmem:[%s1 + $0x68] sm:$0xff]
      %v281 = vld [vmem:[%s1 + $0x70] sm:$0xff]
      %v282 = vld [vmem:[%s1 + $0x78] sm:$0xff]
      %283 = vmatpush.msra.mxu0 %v282
      %284 = vmatpush.msra.mxu0 %v281
      %285 = vmatpush.msra.mxu0 %v280
      %286 = vmatpush.msra.mxu0 %v279
      %287 = vmatpush.msra.mxu0 %v278
      %288 = vmatpush.msra.mxu0 %v277
      %289 = vmatpush.msra.mxu0 %v276
      %290 = vmatpush.msra.mxu0 %v275
      %291 = vmatpush.msra.mxu0 %v274
      %292 = vmatpush.msra.mxu0 %v273
      %293 = vmatpush.msra.mxu0 %v272
      %294 = vmatpush.msra.mxu0 %v271
      %295 = vmatpush.msra.mxu0 %v270
      %296 = vmatpush.msra.mxu0 %v269
      %297 = vmatpush.msra.mxu0 %v268
      %298 = vmatpush.msra.mxu0 %v267
      %299 = vmatmul.f32.gmra.mxu0 %v203
      %v300 = vpop.f32.mrf.mxu0
      %v301 = vadd.f32 0.0, %v300
      %302 = vmatmul.f32.gmra.mxu0 %v204
      %v303 = vpop.f32.mrf.mxu0
      %v304 = vadd.f32 0.0, %v303
      %305 = vmatmul.f32.gmra.mxu0 %v205
      %v306 = vpop.f32.mrf.mxu0
      %v307 = vadd.f32 0.0, %v306
      %308 = vmatmul.f32.gmra.mxu0 %v206
      %v309 = vpop.f32.mrf.mxu0
      %v310 = vadd.f32 0.0, %v309
      %311 = vmatmul.f32.gmra.mxu0 %v207
      %v312 = vpop.f32.mrf.mxu0
      %v313 = vadd.f32 0.0, %v312
      %314 = vmatmul.f32.gmra.mxu0 %v208
      %v315 = vpop.f32.mrf.mxu0
      %v316 = vadd.f32 0.0, %v315
      %317 = vmatmul.f32.gmra.mxu0 %v209
      %v318 = vpop.f32.mrf.mxu0
      %v319 = vadd.f32 0.0, %v318
      %320 = vmatmul.f32.gmra.mxu0 %v210
      %v321 = vpop.f32.mrf.mxu0
      %v322 = vadd.f32 0.0, %v321
      %323 = vmatmul.f32.gmra.mxu0 %v211
      %v324 = vpop.f32.mrf.mxu0
      %v325 = vadd.f32 0.0, %v324
      %326 = vmatmul.f32.gmra.mxu0 %v212
      %v327 = vpop.f32.mrf.mxu0
      %v328 = vadd.f32 0.0, %v327
      %329 = vmatmul.f32.gmra.mxu0 %v213
      %v330 = vpop.f32.mrf.mxu0
      %v331 = vadd.f32 0.0, %v330
      %332 = vmatmul.f32.gmra.mxu0 %v214
      %v333 = vpop.f32.mrf.mxu0
      %v334 = vadd.f32 0.0, %v333
      %335 = vmatmul.f32.gmra.mxu0 %v215
      %v336 = vpop.f32.mrf.mxu0
      %v337 = vadd.f32 0.0, %v336
      %338 = vmatmul.f32.gmra.mxu0 %v216
      %v339 = vpop.f32.mrf.mxu0
      %v340 = vadd.f32 0.0, %v339
      %341 = vmatmul.f32.gmra.mxu0 %v217
      %v342 = vpop.f32.mrf.mxu0
      %v343 = vadd.f32 0.0, %v342
      %344 = vmatmul.f32.gmra.mxu0 %v218
      %v345 = vpop.f32.mrf.mxu0
      %v346 = vadd.f32 0.0, %v345
      %347 = vmatmul.f32.gmra.mxu0 %v219
      %v348 = vpop.f32.mrf.mxu0
      %v349 = vadd.f32 0.0, %v348
      %350 = vmatmul.f32.gmra.mxu0 %v220
      %v351 = vpop.f32.mrf.mxu0
      %v352 = vadd.f32 0.0, %v351
      %353 = vmatmul.f32.gmra.mxu0 %v221
      %v354 = vpop.f32.mrf.mxu0
      %v355 = vadd.f32 0.0, %v354
      %356 = vmatmul.f32.gmra.mxu0 %v222
      %v357 = vpop.f32.mrf.mxu0
      %v358 = vadd.f32 0.0, %v357
      %359 = vmatmul.f32.gmra.mxu0 %v223
      %v360 = vpop.f32.mrf.mxu0
      %v361 = vadd.f32 0.0, %v360
      %362 = vmatmul.f32.gmra.mxu0 %v224
      %v363 = vpop.f32.mrf.mxu0
      %v364 = vadd.f32 0.0, %v363
      %365 = vmatmul.f32.gmra.mxu0 %v225
      %v366 = vpop.f32.mrf.mxu0
      %v367 = vadd.f32 0.0, %v366
      %368 = vmatmul.f32.gmra.mxu0 %v226
      %v369 = vpop.f32.mrf.mxu0
      %v370 = vadd.f32 0.0, %v369
      %371 = vmatmul.f32.gmra.mxu0 %v227
      %v372 = vpop.f32.mrf.mxu0
      %v373 = vadd.f32 0.0, %v372
      %374 = vmatmul.f32.gmra.mxu0 %v228
      %v375 = vpop.f32.mrf.mxu0
      %v376 = vadd.f32 0.0, %v375
      %377 = vmatmul.f32.gmra.mxu0 %v229
      %v378 = vpop.f32.mrf.mxu0
      %v379 = vadd.f32 0.0, %v378
      %380 = vmatmul.f32.gmra.mxu0 %v230
      %v381 = vpop.f32.mrf.mxu0
      %v382 = vadd.f32 0.0, %v381
      %383 = vmatmul.f32.gmra.mxu0 %v231
      %v384 = vpop.f32.mrf.mxu0
      %v385 = vadd.f32 0.0, %v384
      %386 = vmatmul.f32.gmra.mxu0 %v232
      %v387 = vpop.f32.mrf.mxu0
      %v388 = vadd.f32 0.0, %v387
      %389 = vmatmul.f32.gmra.mxu0 %v233
      %v390 = vpop.f32.mrf.mxu0
      %v391 = vadd.f32 0.0, %v390
      %392 = vmatmul.f32.gmra.mxu0 %v234
      %v393 = vpop.f32.mrf.mxu0
      %v394 = vadd.f32 0.0, %v393
      %395 = vdwg.mxu0
      %v396 = vadd.f32 %v235, %v301
      %v397 = vadd.f32 %v236, %v304
      %v398 = vadd.f32 %v237, %v307
      %v399 = vadd.f32 %v238, %v310
      %v400 = vadd.f32 %v239, %v313
      %v401 = vadd.f32 %v240, %v316
      %v402 = vadd.f32 %v241, %v319
      %v403 = vadd.f32 %v242, %v322
      %v404 = vadd.f32 %v243, %v325
      %v405 = vadd.f32 %v244, %v328
      %v406 = vadd.f32 %v245, %v331
      %v407 = vadd.f32 %v246, %v334
      %v408 = vadd.f32 %v247, %v337
      %v409 = vadd.f32 %v248, %v340
      %v410 = vadd.f32 %v249, %v343
      %v411 = vadd.f32 %v250, %v346
      %v412 = vadd.f32 %v251, %v349
      %v413 = vadd.f32 %v252, %v352
      %v414 = vadd.f32 %v253, %v355
      %v415 = vadd.f32 %v254, %v358
      %v416 = vadd.f32 %v255, %v361
      %v417 = vadd.f32 %v256, %v364
      %v418 = vadd.f32 %v257, %v367
      %v419 = vadd.f32 %v258, %v370
      %v420 = vadd.f32 %v259, %v373
      %v421 = vadd.f32 %v260, %v376
      %v422 = vadd.f32 %v261, %v379
      %v423 = vadd.f32 %v262, %v382
      %v424 = vadd.f32 %v263, %v385
      %v425 = vadd.f32 %v264, %v388
      %v426 = vadd.f32 %v265, %v391
      %v427 = vadd.f32 %v266, %v394
      %428 = vst [vmem:[#allocation2] sm:$0xff] %v396
      %429 = vst [vmem:[#allocation2 + $0x8] sm:$0xff] %v397
      %430 = vst [vmem:[#allocation2 + $0x10] sm:$0xff] %v398
      %431 = vst [vmem:[#allocation2 + $0x18] sm:$0xff] %v399
      %432 = vst [vmem:[#allocation2 + $0x20] sm:$0xff] %v400
      %433 = vst [vmem:[#allocation2 + $0x28] sm:$0xff] %v401
      %434 = vst [vmem:[#allocation2 + $0x30] sm:$0xff] %v402
      %435 = vst [vmem:[#allocation2 + $0x38] sm:$0xff] %v403
      %436 = vst [vmem:[#allocation2 + $0x40] sm:$0xff] %v404
      %437 = vst [vmem:[#allocation2 + $0x48] sm:$0xff] %v405
      %438 = vst [vmem:[#allocation2 + $0x50] sm:$0xff] %v406
      %439 = vst [vmem:[#allocation2 + $0x58] sm:$0xff] %v407
      %440 = vst [vmem:[#allocation2 + $0x60] sm:$0xff] %v408
      %441 = vst [vmem:[#allocation2 + $0x68] sm:$0xff] %v409
      %442 = vst [vmem:[#allocation2 + $0x70] sm:$0xff] %v410
      %443 = vst [vmem:[#allocation2 + $0x78] sm:$0xff] %v411
      %444 = vst [vmem:[#allocation2 + $0x80] sm:$0xff] %v412
      %445 = vst [vmem:[#allocation2 + $0x88] sm:$0xff] %v413
      %446 = vst [vmem:[#allocation2 + $0x90] sm:$0xff] %v414
      %447 = vst [vmem:[#allocation2 + $0x98] sm:$0xff] %v415
      %448 = vst [vmem:[#allocation2 + $0xa0] sm:$0xff] %v416
      %449 = vst [vmem:[#allocation2 + $0xa8] sm:$0xff] %v417
      %450 = vst [vmem:[#allocation2 + $0xb0] sm:$0xff] %v418
      %451 = vst [vmem:[#allocation2 + $0xb8] sm:$0xff] %v419
      %452 = vst [vmem:[#allocation2 + $0xc0] sm:$0xff] %v420
      %453 = vst [vmem:[#allocation2 + $0xc8] sm:$0xff] %v421
      %454 = vst [vmem:[#allocation2 + $0xd0] sm:$0xff] %v422
      %455 = vst [vmem:[#allocation2 + $0xd8] sm:$0xff] %v423
      %456 = vst [vmem:[#allocation2 + $0xe0] sm:$0xff] %v424
      %457 = vst [vmem:[#allocation2 + $0xe8] sm:$0xff] %v425
      %458 = vst [vmem:[#allocation2 + $0xf0] sm:$0xff] %v426
      %459 = vst [vmem:[#allocation2 + $0xf8] sm:$0xff] %v427
      %v460 = vld [vmem:[%s165 + $0x1] sm:$0xff]
      %v461 = vld [vmem:[%s165 + $0x9] sm:$0xff]
      %v462 = vld [vmem:[%s165 + $0x19] sm:$0xff]
      %v463 = vld [vmem:[%s165 + $0x21] sm:$0xff]
      %v464 = vld [vmem:[%s165 + $0x31] sm:$0xff]
      %v465 = vld [vmem:[%s165 + $0x39] sm:$0xff]
      %v466 = vld [vmem:[%s165 + $0x49] sm:$0xff]
      %v467 = vld [vmem:[%s165 + $0x51] sm:$0xff]
      %v468 = vld [vmem:[%s165 + $0x61] sm:$0xff]
      %v469 = vld [vmem:[%s165 + $0x69] sm:$0xff]
      %v470 = vld [vmem:[%s165 + $0x79] sm:$0xff]
      %v471 = vld [vmem:[%s165 + $0x81] sm:$0xff]
      %v472 = vld [vmem:[%s165 + $0x91] sm:$0xff]
      %v473 = vld [vmem:[%s165 + $0x99] sm:$0xff]
      %v474 = vld [vmem:[%s165 + $0xa9] sm:$0xff]
      %v475 = vld [vmem:[%s165 + $0xb1] sm:$0xff]
      %v476 = vld [vmem:[%s165 + $0xc1] sm:$0xff]
      %v477 = vld [vmem:[%s165 + $0xc9] sm:$0xff]
      %v478 = vld [vmem:[%s165 + $0xd9] sm:$0xff]
      %v479 = vld [vmem:[%s165 + $0xe1] sm:$0xff]
      %v480 = vld [vmem:[%s165 + $0xf1] sm:$0xff]
      %v481 = vld [vmem:[%s165 + $0xf9] sm:$0xff]
      %v482 = vld [vmem:[%s165 + $0x109] sm:$0xff]
      %v483 = vld [vmem:[%s165 + $0x111] sm:$0xff]
      %v484 = vld [vmem:[%s165 + $0x121] sm:$0xff]
      %v485 = vld [vmem:[%s165 + $0x129] sm:$0xff]
      %v486 = vld [vmem:[%s165 + $0x139] sm:$0xff]
      %v487 = vld [vmem:[%s165 + $0x141] sm:$0xff]
      %v488 = vld [vmem:[%s165 + $0x151] sm:$0xff]
      %v489 = vld [vmem:[%s165 + $0x159] sm:$0xff]
      %v490 = vld [vmem:[%s165 + $0x169] sm:$0xff]
      %v491 = vld [vmem:[%s165 + $0x171] sm:$0xff]
      %v492 = vld [vmem:[#allocation2] sm:$0xff]
      %v493 = vld [vmem:[#allocation2 + $0x8] sm:$0xff]
      %v494 = vld [vmem:[#allocation2 + $0x10] sm:$0xff]
      %v495 = vld [vmem:[#allocation2 + $0x18] sm:$0xff]
      %v496 = vld [vmem:[#allocation2 + $0x20] sm:$0xff]
      %v497 = vld [vmem:[#allocation2 + $0x28] sm:$0xff]
      %v498 = vld [vmem:[#allocation2 + $0x30] sm:$0xff]
      %v499 = vld [vmem:[#allocation2 + $0x38] sm:$0xff]
      %v500 = vld [vmem:[#allocation2 + $0x40] sm:$0xff]
      %v501 = vld [vmem:[#allocation2 + $0x48] sm:$0xff]
      %v502 = vld [vmem:[#allocation2 + $0x50] sm:$0xff]
      %v503 = vld [vmem:[#allocation2 + $0x58] sm:$0xff]
      %v504 = vld [vmem:[#allocation2 + $0x60] sm:$0xff]
      %v505 = vld [vmem:[#allocation2 + $0x68] sm:$0xff]
      %v506 = vld [vmem:[#allocation2 + $0x70] sm:$0xff]
      %v507 = vld [vmem:[#allocation2 + $0x78] sm:$0xff]
      %v508 = vld [vmem:[#allocation2 + $0x80] sm:$0xff]
      %v509 = vld [vmem:[#allocation2 + $0x88] sm:$0xff]
      %v510 = vld [vmem:[#allocation2 + $0x90] sm:$0xff]
      %v511 = vld [vmem:[#allocation2 + $0x98] sm:$0xff]
      %v512 = vld [vmem:[#allocation2 + $0xa0] sm:$0xff]
      %v513 = vld [vmem:[#allocation2 + $0xa8] sm:$0xff]
      %v514 = vld [vmem:[#allocation2 + $0xb0] sm:$0xff]
      %v515 = vld [vmem:[#allocation2 + $0xb8] sm:$0xff]
      %v516 = vld [vmem:[#allocation2 + $0xc0] sm:$0xff]
      %v517 = vld [vmem:[#allocation2 + $0xc8] sm:$0xff]
      %v518 = vld [vmem:[#allocation2 + $0xd0] sm:$0xff]
      %v519 = vld [vmem:[#allocation2 + $0xd8] sm:$0xff]
      %v520 = vld [vmem:[#allocation2 + $0xe0] sm:$0xff]
      %v521 = vld [vmem:[#allocation2 + $0xe8] sm:$0xff]
      %v522 = vld [vmem:[#allocation2 + $0xf0] sm:$0xff]
      %v523 = vld [vmem:[#allocation2 + $0xf8] sm:$0xff]
      %s524 = scalar_lea.vmem %s1, 128
      %v525 = vld [vmem:[%s524] sm:$0xff]
      %v526 = vld [vmem:[%s524 + $0x8] sm:$0xff]
      %v527 = vld [vmem:[%s524 + $0x10] sm:$0xff]
      %v528 = vld [vmem:[%s524 + $0x18] sm:$0xff]
      %v529 = vld [vmem:[%s524 + $0x20] sm:$0xff]
      %v530 = vld [vmem:[%s524 + $0x28] sm:$0xff]
      %v531 = vld [vmem:[%s524 + $0x30] sm:$0xff]
      %v532 = vld [vmem:[%s524 + $0x38] sm:$0xff]
      %v533 = vld [vmem:[%s524 + $0x40] sm:$0xff]
      %v534 = vld [vmem:[%s524 + $0x48] sm:$0xff]
      %v535 = vld [vmem:[%s524 + $0x50] sm:$0xff]
      %v536 = vld [vmem:[%s524 + $0x58] sm:$0xff]
      %v537 = vld [vmem:[%s524 + $0x60] sm:$0xff]
      %v538 = vld [vmem:[%s524 + $0x68] sm:$0xff]
      %v539 = vld [vmem:[%s524 + $0x70] sm:$0xff]
      %v540 = vld [vmem:[%s524 + $0x78] sm:$0xff]
      %541 = vmatpush.msra.mxu0 %v540
      %542 = vmatpush.msra.mxu0 %v539
      %543 = vmatpush.msra.mxu0 %v538
      %544 = vmatpush.msra.mxu0 %v537
      %545 = vmatpush.msra.mxu0 %v536
      %546 = vmatpush.msra.mxu0 %v535
      %547 = vmatpush.msra.mxu0 %v534
      %548 = vmatpush.msra.mxu0 %v533
      %549 = vmatpush.msra.mxu0 %v532
      %550 = vmatpush.msra.mxu0 %v531
      %551 = vmatpush.msra.mxu0 %v530
      %552 = vmatpush.msra.mxu0 %v529
      %553 = vmatpush.msra.mxu0 %v528
      %554 = vmatpush.msra.mxu0 %v527
      %555 = vmatpush.msra.mxu0 %v526
      %556 = vmatpush.msra.mxu0 %v525
      %557 = vmatmul.f32.gmra.mxu0 %v460
      %v558 = vpop.f32.mrf.mxu0
      %v559 = vadd.f32 0.0, %v558
      %560 = vmatmul.f32.gmra.mxu0 %v461
      %v561 = vpop.f32.mrf.mxu0
      %v562 = vadd.f32 0.0, %v561
      %563 = vmatmul.f32.gmra.mxu0 %v462
      %v564 = vpop.f32.mrf.mxu0
      %v565 = vadd.f32 0.0, %v564
      %566 = vmatmul.f32.gmra.mxu0 %v463
      %v567 = vpop.f32.mrf.mxu0
      %v568 = vadd.f32 0.0, %v567
      %569 = vmatmul.f32.gmra.mxu0 %v464
      %v570 = vpop.f32.mrf.mxu0
      %v571 = vadd.f32 0.0, %v570
      %572 = vmatmul.f32.gmra.mxu0 %v465
      %v573 = vpop.f32.mrf.mxu0
      %v574 = vadd.f32 0.0, %v573
      %575 = vmatmul.f32.gmra.mxu0 %v466
      %v576 = vpop.f32.mrf.mxu0
      %v577 = vadd.f32 0.0, %v576
      %578 = vmatmul.f32.gmra.mxu0 %v467
      %v579 = vpop.f32.mrf.mxu0
      %v580 = vadd.f32 0.0, %v579
      %581 = vmatmul.f32.gmra.mxu0 %v468
      %v582 = vpop.f32.mrf.mxu0
      %v583 = vadd.f32 0.0, %v582
      %584 = vmatmul.f32.gmra.mxu0 %v469
      %v585 = vpop.f32.mrf.mxu0
      %v586 = vadd.f32 0.0, %v585
      %587 = vmatmul.f32.gmra.mxu0 %v470
      %v588 = vpop.f32.mrf.mxu0
      %v589 = vadd.f32 0.0, %v588
      %590 = vmatmul.f32.gmra.mxu0 %v471
      %v591 = vpop.f32.mrf.mxu0
      %v592 = vadd.f32 0.0, %v591
      %593 = vmatmul.f32.gmra.mxu0 %v472
      %v594 = vpop.f32.mrf.mxu0
      %v595 = vadd.f32 0.0, %v594
      %596 = vmatmul.f32.gmra.mxu0 %v473
      %v597 = vpop.f32.mrf.mxu0
      %v598 = vadd.f32 0.0, %v597
      %599 = vmatmul.f32.gmra.mxu0 %v474
      %v600 = vpop.f32.mrf.mxu0
      %v601 = vadd.f32 0.0, %v600
      %602 = vmatmul.f32.gmra.mxu0 %v475
      %v603 = vpop.f32.mrf.mxu0
      %v604 = vadd.f32 0.0, %v603
      %605 = vmatmul.f32.gmra.mxu0 %v476
      %v606 = vpop.f32.mrf.mxu0
      %v607 = vadd.f32 0.0, %v606
      %608 = vmatmul.f32.gmra.mxu0 %v477
      %v609 = vpop.f32.mrf.mxu0
      %v610 = vadd.f32 0.0, %v609
      %611 = vmatmul.f32.gmra.mxu0 %v478
      %v612 = vpop.f32.mrf.mxu0
      %v613 = vadd.f32 0.0, %v612
      %614 = vmatmul.f32.gmra.mxu0 %v479
      %v615 = vpop.f32.mrf.mxu0
      %v616 = vadd.f32 0.0, %v615
      %617 = vmatmul.f32.gmra.mxu0 %v480
      %v618 = vpop.f32.mrf.mxu0
      %v619 = vadd.f32 0.0, %v618
      %620 = vmatmul.f32.gmra.mxu0 %v481
      %v621 = vpop.f32.mrf.mxu0
      %v622 = vadd.f32 0.0, %v621
      %623 = vmatmul.f32.gmra.mxu0 %v482
      %v624 = vpop.f32.mrf.mxu0
      %v625 = vadd.f32 0.0, %v624
      %626 = vmatmul.f32.gmra.mxu0 %v483
      %v627 = vpop.f32.mrf.mxu0
      %v628 = vadd.f32 0.0, %v627
      %629 = vmatmul.f32.gmra.mxu0 %v484
      %v630 = vpop.f32.mrf.mxu0
      %v631 = vadd.f32 0.0, %v630
      %632 = vmatmul.f32.gmra.mxu0 %v485
      %v633 = vpop.f32.mrf.mxu0
      %v634 = vadd.f32 0.0, %v633
      %635 = vmatmul.f32.gmra.mxu0 %v486
      %v636 = vpop.f32.mrf.mxu0
      %v637 = vadd.f32 0.0, %v636
      %638 = vmatmul.f32.gmra.mxu0 %v487
      %v639 = vpop.f32.mrf.mxu0
      %v640 = vadd.f32 0.0, %v639
      %641 = vmatmul.f32.gmra.mxu0 %v488
      %v642 = vpop.f32.mrf.mxu0
      %v643 = vadd.f32 0.0, %v642
      %644 = vmatmul.f32.gmra.mxu0 %v489
      %v645 = vpop.f32.mrf.mxu0
      %v646 = vadd.f32 0.0, %v645
      %647 = vmatmul.f32.gmra.mxu0 %v490
      %v648 = vpop.f32.mrf.mxu0
      %v649 = vadd.f32 0.0, %v648
      %650 = vmatmul.f32.gmra.mxu0 %v491
      %v651 = vpop.f32.mrf.mxu0
      %v652 = vadd.f32 0.0, %v651
      %653 = vdwg.mxu0
      %v654 = vadd.f32 %v492, %v559
      %v655 = vadd.f32 %v493, %v562
      %v656 = vadd.f32 %v494, %v565
      %v657 = vadd.f32 %v495, %v568
      %v658 = vadd.f32 %v496, %v571
      %v659 = vadd.f32 %v497, %v574
      %v660 = vadd.f32 %v498, %v577
      %v661 = vadd.f32 %v499, %v580
      %v662 = vadd.f32 %v500, %v583
      %v663 = vadd.f32 %v501, %v586
      %v664 = vadd.f32 %v502, %v589
      %v665 = vadd.f32 %v503, %v592
      %v666 = vadd.f32 %v504, %v595
      %v667 = vadd.f32 %v505, %v598
      %v668 = vadd.f32 %v506, %v601
      %v669 = vadd.f32 %v507, %v604
      %v670 = vadd.f32 %v508, %v607
      %v671 = vadd.f32 %v509, %v610
      %v672 = vadd.f32 %v510, %v613
      %v673 = vadd.f32 %v511, %v616
      %v674 = vadd.f32 %v512, %v619
      %v675 = vadd.f32 %v513, %v622
      %v676 = vadd.f32 %v514, %v625
      %v677 = vadd.f32 %v515, %v628
      %v678 = vadd.f32 %v516, %v631
      %v679 = vadd.f32 %v517, %v634
      %v680 = vadd.f32 %v518, %v637
      %v681 = vadd.f32 %v519, %v640
      %v682 = vadd.f32 %v520, %v643
      %v683 = vadd.f32 %v521, %v646
      %v684 = vadd.f32 %v522, %v649
      %v685 = vadd.f32 %v523, %v652
      %686 = vst [vmem:[#allocation2] sm:$0xff] %v654
      %687 = vst [vmem:[#allocation2 + $0x8] sm:$0xff] %v655
      %688 = vst [vmem:[#allocation2 + $0x10] sm:$0xff] %v656
      %689 = vst [vmem:[#allocation2 + $0x18] sm:$0xff] %v657
      %690 = vst [vmem:[#allocation2 + $0x20] sm:$0xff] %v658
      %691 = vst [vmem:[#allocation2 + $0x28] sm:$0xff] %v659
      %692 = vst [vmem:[#allocation2 + $0x30] sm:$0xff] %v660
      %693 = vst [vmem:[#allocation2 + $0x38] sm:$0xff] %v661
      %694 = vst [vmem:[#allocation2 + $0x40] sm:$0xff] %v662
      %695 = vst [vmem:[#allocation2 + $0x48] sm:$0xff] %v663
      %696 = vst [vmem:[#allocation2 + $0x50] sm:$0xff] %v664
      %697 = vst [vmem:[#allocation2 + $0x58] sm:$0xff] %v665
      %698 = vst [vmem:[#allocation2 + $0x60] sm:$0xff] %v666
      %699 = vst [vmem:[#allocation2 + $0x68] sm:$0xff] %v667
      %700 = vst [vmem:[#allocation2 + $0x70] sm:$0xff] %v668
      %701 = vst [vmem:[#allocation2 + $0x78] sm:$0xff] %v669
      %702 = vst [vmem:[#allocation2 + $0x80] sm:$0xff] %v670
      %703 = vst [vmem:[#allocation2 + $0x88] sm:$0xff] %v671
      %704 = vst [vmem:[#allocation2 + $0x90] sm:$0xff] %v672
      %705 = vst [vmem:[#allocation2 + $0x98] sm:$0xff] %v673
      %706 = vst [vmem:[#allocation2 + $0xa0] sm:$0xff] %v674
      %707 = vst [vmem:[#allocation2 + $0xa8] sm:$0xff] %v675
      %708 = vst [vmem:[#allocation2 + $0xb0] sm:$0xff] %v676
      %709 = vst [vmem:[#allocation2 + $0xb8] sm:$0xff] %v677
      %710 = vst [vmem:[#allocation2 + $0xc0] sm:$0xff] %v678
      %711 = vst [vmem:[#allocation2 + $0xc8] sm:$0xff] %v679
      %712 = vst [vmem:[#allocation2 + $0xd0] sm:$0xff] %v680
      %713 = vst [vmem:[#allocation2 + $0xd8] sm:$0xff] %v681
      %714 = vst [vmem:[#allocation2 + $0xe0] sm:$0xff] %v682
      %715 = vst [vmem:[#allocation2 + $0xe8] sm:$0xff] %v683
      %716 = vst [vmem:[#allocation2 + $0xf0] sm:$0xff] %v684
      %717 = vst [vmem:[#allocation2 + $0xf8] sm:$0xff] %v685
      %v718 = vld [vmem:[%s165 + $0x2] sm:$0xff]
      %v719 = vld [vmem:[%s165 + $0xa] sm:$0xff]
      %v720 = vld [vmem:[%s165 + $0x1a] sm:$0xff]
      %v721 = vld [vmem:[%s165 + $0x22] sm:$0xff]
      %v722 = vld [vmem:[%s165 + $0x32] sm:$0xff]
      %v723 = vld [vmem:[%s165 + $0x3a] sm:$0xff]
      %v724 = vld [vmem:[%s165 + $0x4a] sm:$0xff]
      %v725 = vld [vmem:[%s165 + $0x52] sm:$0xff]
      %v726 = vld [vmem:[%s165 + $0x62] sm:$0xff]
      %v727 = vld [vmem:[%s165 + $0x6a] sm:$0xff]
      %v728 = vld [vmem:[%s165 + $0x7a] sm:$0xff]
      %v729 = vld [vmem:[%s165 + $0x82] sm:$0xff]
      %v730 = vld [vmem:[%s165 + $0x92] sm:$0xff]
      %v731 = vld [vmem:[%s165 + $0x9a] sm:$0xff]
      %v732 = vld [vmem:[%s165 + $0xaa] sm:$0xff]
      %v733 = vld [vmem:[%s165 + $0xb2] sm:$0xff]
      %v734 = vld [vmem:[%s165 + $0xc2] sm:$0xff]
      %v735 = vld [vmem:[%s165 + $0xca] sm:$0xff]
      %v736 = vld [vmem:[%s165 + $0xda] sm:$0xff]
      %v737 = vld [vmem:[%s165 + $0xe2] sm:$0xff]
      %v738 = vld [vmem:[%s165 + $0xf2] sm:$0xff]
      %v739 = vld [vmem:[%s165 + $0xfa] sm:$0xff]
      %v740 = vld [vmem:[%s165 + $0x10a] sm:$0xff]
      %v741 = vld [vmem:[%s165 + $0x112] sm:$0xff]
      %v742 = vld [vmem:[%s165 + $0x122] sm:$0xff]
      %v743 = vld [vmem:[%s165 + $0x12a] sm:$0xff]
      %v744 = vld [vmem:[%s165 + $0x13a] sm:$0xff]
      %v745 = vld [vmem:[%s165 + $0x142] sm:$0xff]
      %v746 = vld [vmem:[%s165 + $0x152] sm:$0xff]
      %v747 = vld [vmem:[%s165 + $0x15a] sm:$0xff]
      %v748 = vld [vmem:[%s165 + $0x16a] sm:$0xff]
      %v749 = vld [vmem:[%s165 + $0x172] sm:$0xff]
      %v750 = vld [vmem:[#allocation2] sm:$0xff]
      %v751 = vld [vmem:[#allocation2 + $0x8] sm:$0xff]
      %v752 = vld [vmem:[#allocation2 + $0x10] sm:$0xff]
      %v753 = vld [vmem:[#allocation2 + $0x18] sm:$0xff]
      %v754 = vld [vmem:[#allocation2 + $0x20] sm:$0xff]
      %v755 = vld [vmem:[#allocation2 + $0x28] sm:$0xff]
      %v756 = vld [vmem:[#allocation2 + $0x30] sm:$0xff]
      %v757 = vld [vmem:[#allocation2 + $0x38] sm:$0xff]
      %v758 = vld [vmem:[#allocation2 + $0x40] sm:$0xff]
      %v759 = vld [vmem:[#allocation2 + $0x48] sm:$0xff]
      %v760 = vld [vmem:[#allocation2 + $0x50] sm:$0xff]
      %v761 = vld [vmem:[#allocation2 + $0x58] sm:$0xff]
      %v762 = vld [vmem:[#allocation2 + $0x60] sm:$0xff]
      %v763 = vld [vmem:[#allocation2 + $0x68] sm:$0xff]
      %v764 = vld [vmem:[#allocation2 + $0x70] sm:$0xff]
      %v765 = vld [vmem:[#allocation2 + $0x78] sm:$0xff]
      %v766 = vld [vmem:[#allocation2 + $0x80] sm:$0xff]
      %v767 = vld [vmem:[#allocation2 + $0x88] sm:$0xff]
      %v768 = vld [vmem:[#allocation2 + $0x90] sm:$0xff]
      %v769 = vld [vmem:[#allocation2 + $0x98] sm:$0xff]
      %v770 = vld [vmem:[#allocation2 + $0xa0] sm:$0xff]
      %v771 = vld [vmem:[#allocation2 + $0xa8] sm:$0xff]
      %v772 = vld [vmem:[#allocation2 + $0xb0] sm:$0xff]
      %v773 = vld [vmem:[#allocation2 + $0xb8] sm:$0xff]
      %v774 = vld [vmem:[#allocation2 + $0xc0] sm:$0xff]
      %v775 = vld [vmem:[#allocation2 + $0xc8] sm:$0xff]
      %v776 = vld [vmem:[#allocation2 + $0xd0] sm:$0xff]
      %v777 = vld [vmem:[#allocation2 + $0xd8] sm:$0xff]
      %v778 = vld [vmem:[#allocation2 + $0xe0] sm:$0xff]
      %v779 = vld [vmem:[#allocation2 + $0xe8] sm:$0xff]
      %v780 = vld [vmem:[#allocation2 + $0xf0] sm:$0xff]
      %v781 = vld [vmem:[#allocation2 + $0xf8] sm:$0xff]
      %s782 = scalar_lea.vmem %s1, 256
      %v783 = vld [vmem:[%s782] sm:$0xff]
      %v784 = vld [vmem:[%s782 + $0x8] sm:$0xff]
      %v785 = vld [vmem:[%s782 + $0x10] sm:$0xff]
      %v786 = vld [vmem:[%s782 + $0x18] sm:$0xff]
      %v787 = vld [vmem:[%s782 + $0x20] sm:$0xff]
      %v788 = vld [vmem:[%s782 + $0x28] sm:$0xff]
      %v789 = vld [vmem:[%s782 + $0x30] sm:$0xff]
      %v790 = vld [vmem:[%s782 + $0x38] sm:$0xff]
      %v791 = vld [vmem:[%s782 + $0x40] sm:$0xff]
      %v792 = vld [vmem:[%s782 + $0x48] sm:$0xff]
      %v793 = vld [vmem:[%s782 + $0x50] sm:$0xff]
      %v794 = vld [vmem:[%s782 + $0x58] sm:$0xff]
      %v795 = vld [vmem:[%s782 + $0x60] sm:$0xff]
      %v796 = vld [vmem:[%s782 + $0x68] sm:$0xff]
      %v797 = vld [vmem:[%s782 + $0x70] sm:$0xff]
      %v798 = vld [vmem:[%s782 + $0x78] sm:$0xff]
      %799 = vmatpush.msra.mxu0 %v798
      %800 = vmatpush.msra.mxu0 %v797
      %801 = vmatpush.msra.mxu0 %v796
      %802 = vmatpush.msra.mxu0 %v795
      %803 = vmatpush.msra.mxu0 %v794
      %804 = vmatpush.msra.mxu0 %v793
      %805 = vmatpush.msra.mxu0 %v792
      %806 = vmatpush.msra.mxu0 %v791
      %807 = vmatpush.msra.mxu0 %v790
      %808 = vmatpush.msra.mxu0 %v789
      %809 = vmatpush.msra.mxu0 %v788
      %810 = vmatpush.msra.mxu0 %v787
      %811 = vmatpush.msra.mxu0 %v786
      %812 = vmatpush.msra.mxu0 %v785
      %813 = vmatpush.msra.mxu0 %v784
      %814 = vmatpush.msra.mxu0 %v783
      %815 = vmatmul.f32.gmra.mxu0 %v718
      %v816 = vpop.f32.mrf.mxu0
      %v817 = vadd.f32 0.0, %v816
      %818 = vmatmul.f32.gmra.mxu0 %v719
      %v819 = vpop.f32.mrf.mxu0
      %v820 = vadd.f32 0.0, %v819
      %821 = vmatmul.f32.gmra.mxu0 %v720
      %v822 = vpop.f32.mrf.mxu0
      %v823 = vadd.f32 0.0, %v822
      %824 = vmatmul.f32.gmra.mxu0 %v721
      %v825 = vpop.f32.mrf.mxu0
      %v826 = vadd.f32 0.0, %v825
      %827 = vmatmul.f32.gmra.mxu0 %v722
      %v828 = vpop.f32.mrf.mxu0
      %v829 = vadd.f32 0.0, %v828
      %830 = vmatmul.f32.gmra.mxu0 %v723
      %v831 = vpop.f32.mrf.mxu0
      %v832 = vadd.f32 0.0, %v831
      %833 = vmatmul.f32.gmra.mxu0 %v724
      %v834 = vpop.f32.mrf.mxu0
      %v835 = vadd.f32 0.0, %v834
      %836 = vmatmul.f32.gmra.mxu0 %v725
      %v837 = vpop.f32.mrf.mxu0
      %v838 = vadd.f32 0.0, %v837
      %839 = vmatmul.f32.gmra.mxu0 %v726
      %v840 = vpop.f32.mrf.mxu0
      %v841 = vadd.f32 0.0, %v840
      %842 = vmatmul.f32.gmra.mxu0 %v727
      %v843 = vpop.f32.mrf.mxu0
      %v844 = vadd.f32 0.0, %v843
      %845 = vmatmul.f32.gmra.mxu0 %v728
      %v846 = vpop.f32.mrf.mxu0
      %v847 = vadd.f32 0.0, %v846
      %848 = vmatmul.f32.gmra.mxu0 %v729
      %v849 = vpop.f32.mrf.mxu0
      %v850 = vadd.f32 0.0, %v849
      %851 = vmatmul.f32.gmra.mxu0 %v730
      %v852 = vpop.f32.mrf.mxu0
      %v853 = vadd.f32 0.0, %v852
      %854 = vmatmul.f32.gmra.mxu0 %v731
      %v855 = vpop.f32.mrf.mxu0
      %v856 = vadd.f32 0.0, %v855
      %857 = vmatmul.f32.gmra.mxu0 %v732
      %v858 = vpop.f32.mrf.mxu0
      %v859 = vadd.f32 0.0, %v858
      %860 = vmatmul.f32.gmra.mxu0 %v733
      %v861 = vpop.f32.mrf.mxu0
      %v862 = vadd.f32 0.0, %v861
      %863 = vmatmul.f32.gmra.mxu0 %v734
      %v864 = vpop.f32.mrf.mxu0
      %v865 = vadd.f32 0.0, %v864
      %866 = vmatmul.f32.gmra.mxu0 %v735
      %v867 = vpop.f32.mrf.mxu0
      %v868 = vadd.f32 0.0, %v867
      %869 = vmatmul.f32.gmra.mxu0 %v736
      %v870 = vpop.f32.mrf.mxu0
      %v871 = vadd.f32 0.0, %v870
      %872 = vmatmul.f32.gmra.mxu0 %v737
      %v873 = vpop.f32.mrf.mxu0
      %v874 = vadd.f32 0.0, %v873
      %875 = vmatmul.f32.gmra.mxu0 %v738
      %v876 = vpop.f32.mrf.mxu0
      %v877 = vadd.f32 0.0, %v876
      %878 = vmatmul.f32.gmra.mxu0 %v739
      %v879 = vpop.f32.mrf.mxu0
      %v880 = vadd.f32 0.0, %v879
      %881 = vmatmul.f32.gmra.mxu0 %v740
      %v882 = vpop.f32.mrf.mxu0
      %v883 = vadd.f32 0.0, %v882
      %884 = vmatmul.f32.gmra.mxu0 %v741
      %v885 = vpop.f32.mrf.mxu0
      %v886 = vadd.f32 0.0, %v885
      %887 = vmatmul.f32.gmra.mxu0 %v742
      %v888 = vpop.f32.mrf.mxu0
      %v889 = vadd.f32 0.0, %v888
      %890 = vmatmul.f32.gmra.mxu0 %v743
      %v891 = vpop.f32.mrf.mxu0
      %v892 = vadd.f32 0.0, %v891
      %893 = vmatmul.f32.gmra.mxu0 %v744
      %v894 = vpop.f32.mrf.mxu0
      %v895 = vadd.f32 0.0, %v894
      %896 = vmatmul.f32.gmra.mxu0 %v745
      %v897 = vpop.f32.mrf.mxu0
      %v898 = vadd.f32 0.0, %v897
      %899 = vmatmul.f32.gmra.mxu0 %v746
      %v900 = vpop.f32.mrf.mxu0
      %v901 = vadd.f32 0.0, %v900
      %902 = vmatmul.f32.gmra.mxu0 %v747
      %v903 = vpop.f32.mrf.mxu0
      %v904 = vadd.f32 0.0, %v903
      %905 = vmatmul.f32.gmra.mxu0 %v748
      %v906 = vpop.f32.mrf.mxu0
      %v907 = vadd.f32 0.0, %v906
      %908 = vmatmul.f32.gmra.mxu0 %v749
      %v909 = vpop.f32.mrf.mxu0
      %v910 = vadd.f32 0.0, %v909
      %911 = vdwg.mxu0
      %v912 = vadd.f32 %v750, %v817
      %v913 = vadd.f32 %v751, %v820
      %v914 = vadd.f32 %v752, %v823
      %v915 = vadd.f32 %v753, %v826
      %v916 = vadd.f32 %v754, %v829
      %v917 = vadd.f32 %v755, %v832
      %v918 = vadd.f32 %v756, %v835
      %v919 = vadd.f32 %v757, %v838
      %v920 = vadd.f32 %v758, %v841
      %v921 = vadd.f32 %v759, %v844
      %v922 = vadd.f32 %v760, %v847
      %v923 = vadd.f32 %v761, %v850
      %v924 = vadd.f32 %v762, %v853
      %v925 = vadd.f32 %v763, %v856
      %v926 = vadd.f32 %v764, %v859
      %v927 = vadd.f32 %v765, %v862
      %v928 = vadd.f32 %v766, %v865
      %v929 = vadd.f32 %v767, %v868
      %v930 = vadd.f32 %v768, %v871
      %v931 = vadd.f32 %v769, %v874
      %v932 = vadd.f32 %v770, %v877
      %v933 = vadd.f32 %v771, %v880
      %v934 = vadd.f32 %v772, %v883
      %v935 = vadd.f32 %v773, %v886
      %v936 = vadd.f32 %v774, %v889
      %v937 = vadd.f32 %v775, %v892
      %v938 = vadd.f32 %v776, %v895
      %v939 = vadd.f32 %v777, %v898
      %v940 = vadd.f32 %v778, %v901
      %v941 = vadd.f32 %v779, %v904
      %v942 = vadd.f32 %v780, %v907
      %v943 = vadd.f32 %v781, %v910
      %944 = vst [vmem:[#allocation2] sm:$0xff] %v912
      %945 = vst [vmem:[#allocation2 + $0x8] sm:$0xff] %v913
      %946 = vst [vmem:[#allocation2 + $0x10] sm:$0xff] %v914
      %947 = vst [vmem:[#allocation2 + $0x18] sm:$0xff] %v915
      %948 = vst [vmem:[#allocation2 + $0x20] sm:$0xff] %v916
      %949 = vst [vmem:[#allocation2 + $0x28] sm:$0xff] %v917
      %950 = vst [vmem:[#allocation2 + $0x30] sm:$0xff] %v918
      %951 = vst [vmem:[#allocation2 + $0x38] sm:$0xff] %v919
      %952 = vst [vmem:[#allocation2 + $0x40] sm:$0xff] %v920
      %953 = vst [vmem:[#allocation2 + $0x48] sm:$0xff] %v921
      %954 = vst [vmem:[#allocation2 + $0x50] sm:$0xff] %v922
      %955 = vst [vmem:[#allocation2 + $0x58] sm:$0xff] %v923
      %956 = vst [vmem:[#allocation2 + $0x60] sm:$0xff] %v924
      %957 = vst [vmem:[#allocation2 + $0x68] sm:$0xff] %v925
      %958 = vst [vmem:[#allocation2 + $0x70] sm:$0xff] %v926
      %959 = vst [vmem:[#allocation2 + $0x78] sm:$0xff] %v927
      %960 = vst [vmem:[#allocation2 + $0x80] sm:$0xff] %v928
      %961 = vst [vmem:[#allocation2 + $0x88] sm:$0xff] %v929
      %962 = vst [vmem:[#allocation2 + $0x90] sm:$0xff] %v930
      %963 = vst [vmem:[#allocation2 + $0x98] sm:$0xff] %v931
      %964 = vst [vmem:[#allocation2 + $0xa0] sm:$0xff] %v932
      %965 = vst [vmem:[#allocation2 + $0xa8] sm:$0xff] %v933
      %966 = vst [vmem:[#allocation2 + $0xb0] sm:$0xff] %v934
      %967 = vst [vmem:[#allocation2 + $0xb8] sm:$0xff] %v935
      %968 = vst [vmem:[#allocation2 + $0xc0] sm:$0xff] %v936
      %969 = vst [vmem:[#allocation2 + $0xc8] sm:$0xff] %v937
      %970 = vst [vmem:[#allocation2 + $0xd0] sm:$0xff] %v938
      %971 = vst [vmem:[#allocation2 + $0xd8] sm:$0xff] %v939
      %972 = vst [vmem:[#allocation2 + $0xe0] sm:$0xff] %v940
      %973 = vst [vmem:[#allocation2 + $0xe8] sm:$0xff] %v941
      %974 = vst [vmem:[#allocation2 + $0xf0] sm:$0xff] %v942
      %975 = vst [vmem:[#allocation2 + $0xf8] sm:$0xff] %v943
      %s976 = scalar_lea.vmem %s165, 24
      %v977 = vld [vmem:[%s976] sm:$0xff]
      %v978 = vld [vmem:[%s976 + $0x8] sm:$0xff]
      %v979 = vld [vmem:[%s976 + $0x18] sm:$0xff]
      %v980 = vld [vmem:[%s976 + $0x20] sm:$0xff]
      %v981 = vld [vmem:[%s976 + $0x30] sm:$0xff]
      %v982 = vld [vmem:[%s976 + $0x38] sm:$0xff]
      %v983 = vld [vmem:[%s976 + $0x48] sm:$0xff]
      %v984 = vld [vmem:[%s976 + $0x50] sm:$0xff]
      %v985 = vld [vmem:[%s976 + $0x60] sm:$0xff]
      %v986 = vld [vmem:[%s976 + $0x68] sm:$0xff]
      %v987 = vld [vmem:[%s976 + $0x78] sm:$0xff]
      %v988 = vld [vmem:[%s976 + $0x80] sm:$0xff]
      %v989 = vld [vmem:[%s976 + $0x90] sm:$0xff]
      %v990 = vld [vmem:[%s976 + $0x98] sm:$0xff]
      %v991 = vld [vmem:[%s976 + $0xa8] sm:$0xff]
      %v992 = vld [vmem:[%s976 + $0xb0] sm:$0xff]
      %v993 = vld [vmem:[%s976 + $0xc0] sm:$0xff]
      %v994 = vld [vmem:[%s976 + $0xc8] sm:$0xff]
      %v995 = vld [vmem:[%s976 + $0xd8] sm:$0xff]
      %v996 = vld [vmem:[%s976 + $0xe0] sm:$0xff]
      %v997 = vld [vmem:[%s976 + $0xf0] sm:$0xff]
      %v998 = vld [vmem:[%s976 + $0xf8] sm:$0xff]
      %v999 = vld [vmem:[%s976 + $0x108] sm:$0xff]
      %v1000 = vld [vmem:[%s976 + $0x110] sm:$0xff]
      %v1001 = vld [vmem:[%s976 + $0x120] sm:$0xff]
      %v1002 = vld [vmem:[%s976 + $0x128] sm:$0xff]
      %v1003 = vld [vmem:[%s976 + $0x138] sm:$0xff]
      %v1004 = vld [vmem:[%s976 + $0x140] sm:$0xff]
      %v1005 = vld [vmem:[%s976 + $0x150] sm:$0xff]
      %v1006 = vld [vmem:[%s976 + $0x158] sm:$0xff]
      %v1007 = vld [vmem:[%s976 + $0x168] sm:$0xff]
      %v1008 = vld [vmem:[%s976 + $0x170] sm:$0xff]
      %v1009 = vld [vmem:[#allocation2] sm:$0xff]
      %v1010 = vld [vmem:[#allocation2 + $0x8] sm:$0xff]
      %v1011 = vld [vmem:[#allocation2 + $0x10] sm:$0xff]
      %v1012 = vld [vmem:[#allocation2 + $0x18] sm:$0xff]
      %v1013 = vld [vmem:[#allocation2 + $0x20] sm:$0xff]
      %v1014 = vld [vmem:[#allocation2 + $0x28] sm:$0xff]
      %v1015 = vld [vmem:[#allocation2 + $0x30] sm:$0xff]
      %v1016 = vld [vmem:[#allocation2 + $0x38] sm:$0xff]
      %v1017 = vld [vmem:[#allocation2 + $0x40] sm:$0xff]
      %v1018 = vld [vmem:[#allocation2 + $0x48] sm:$0xff]
      %v1019 = vld [vmem:[#allocation2 + $0x50] sm:$0xff]
      %v1020 = vld [vmem:[#allocation2 + $0x58] sm:$0xff]
      %v1021 = vld [vmem:[#allocation2 + $0x60] sm:$0xff]
      %v1022 = vld [vmem:[#allocation2 + $0x68] sm:$0xff]
      %v1023 = vld [vmem:[#allocation2 + $0x70] sm:$0xff]
      %v1024 = vld [vmem:[#allocation2 + $0x78] sm:$0xff]
      %v1025 = vld [vmem:[#allocation2 + $0x80] sm:$0xff]
      %v1026 = vld [vmem:[#allocation2 + $0x88] sm:$0xff]
      %v1027 = vld [vmem:[#allocation2 + $0x90] sm:$0xff]
      %v1028 = vld [vmem:[#allocation2 + $0x98] sm:$0xff]
      %v1029 = vld [vmem:[#allocation2 + $0xa0] sm:$0xff]
      %v1030 = vld [vmem:[#allocation2 + $0xa8] sm:$0xff]
      %v1031 = vld [vmem:[#allocation2 + $0xb0] sm:$0xff]
      %v1032 = vld [vmem:[#allocation2 + $0xb8] sm:$0xff]
      %v1033 = vld [vmem:[#allocation2 + $0xc0] sm:$0xff]
      %v1034 = vld [vmem:[#allocation2 + $0xc8] sm:$0xff]
      %v1035 = vld [vmem:[#allocation2 + $0xd0] sm:$0xff]
      %v1036 = vld [vmem:[#allocation2 + $0xd8] sm:$0xff]
      %v1037 = vld [vmem:[#allocation2 + $0xe0] sm:$0xff]
      %v1038 = vld [vmem:[#allocation2 + $0xe8] sm:$0xff]
      %v1039 = vld [vmem:[#allocation2 + $0xf0] sm:$0xff]
      %v1040 = vld [vmem:[#allocation2 + $0xf8] sm:$0xff]
      %s1041 = scalar_lea.vmem %s1, 384
      %v1042 = vld [vmem:[%s1041] sm:$0xff]
      %v1043 = vld [vmem:[%s1041 + $0x8] sm:$0xff]
      %v1044 = vld [vmem:[%s1041 + $0x10] sm:$0xff]
      %v1045 = vld [vmem:[%s1041 + $0x18] sm:$0xff]
      %v1046 = vld [vmem:[%s1041 + $0x20] sm:$0xff]
      %v1047 = vld [vmem:[%s1041 + $0x28] sm:$0xff]
      %v1048 = vld [vmem:[%s1041 + $0x30] sm:$0xff]
      %v1049 = vld [vmem:[%s1041 + $0x38] sm:$0xff]
      %v1050 = vld [vmem:[%s1041 + $0x40] sm:$0xff]
      %v1051 = vld [vmem:[%s1041 + $0x48] sm:$0xff]
      %v1052 = vld [vmem:[%s1041 + $0x50] sm:$0xff]
      %v1053 = vld [vmem:[%s1041 + $0x58] sm:$0xff]
      %v1054 = vld [vmem:[%s1041 + $0x60] sm:$0xff]
      %v1055 = vld [vmem:[%s1041 + $0x68] sm:$0xff]
      %v1056 = vld [vmem:[%s1041 + $0x70] sm:$0xff]
      %v1057 = vld [vmem:[%s1041 + $0x78] sm:$0xff]
      %1058 = vmatpush.msra.mxu0 %v1057
      %1059 = vmatpush.msra.mxu0 %v1056
      %1060 = vmatpush.msra.mxu0 %v1055
      %1061 = vmatpush.msra.mxu0 %v1054
      %1062 = vmatpush.msra.mxu0 %v1053
      %1063 = vmatpush.msra.mxu0 %v1052
      %1064 = vmatpush.msra.mxu0 %v1051
      %1065 = vmatpush.msra.mxu0 %v1050
      %1066 = vmatpush.msra.mxu0 %v1049
      %1067 = vmatpush.msra.mxu0 %v1048
      %1068 = vmatpush.msra.mxu0 %v1047
      %1069 = vmatpush.msra.mxu0 %v1046
      %1070 = vmatpush.msra.mxu0 %v1045
      %1071 = vmatpush.msra.mxu0 %v1044
      %1072 = vmatpush.msra.mxu0 %v1043
      %1073 = vmatpush.msra.mxu0 %v1042
      %1074 = vmatmul.f32.gmra.mxu0 %v977
      %v1075 = vpop.f32.mrf.mxu0
      %v1076 = vadd.f32 0.0, %v1075
      %1077 = vmatmul.f32.gmra.mxu0 %v978
      %v1078 = vpop.f32.mrf.mxu0
      %v1079 = vadd.f32 0.0, %v1078
      %1080 = vmatmul.f32.gmra.mxu0 %v979
      %v1081 = vpop.f32.mrf.mxu0
      %v1082 = vadd.f32 0.0, %v1081
      %1083 = vmatmul.f32.gmra.mxu0 %v980
      %v1084 = vpop.f32.mrf.mxu0
      %v1085 = vadd.f32 0.0, %v1084
      %1086 = vmatmul.f32.gmra.mxu0 %v981
      %v1087 = vpop.f32.mrf.mxu0
      %v1088 = vadd.f32 0.0, %v1087
      %1089 = vmatmul.f32.gmra.mxu0 %v982
      %v1090 = vpop.f32.mrf.mxu0
      %v1091 = vadd.f32 0.0, %v1090
      %1092 = vmatmul.f32.gmra.mxu0 %v983
      %v1093 = vpop.f32.mrf.mxu0
      %v1094 = vadd.f32 0.0, %v1093
      %1095 = vmatmul.f32.gmra.mxu0 %v984
      %v1096 = vpop.f32.mrf.mxu0
      %v1097 = vadd.f32 0.0, %v1096
      %1098 = vmatmul.f32.gmra.mxu0 %v985
      %v1099 = vpop.f32.mrf.mxu0
      %v1100 = vadd.f32 0.0, %v1099
      %1101 = vmatmul.f32.gmra.mxu0 %v986
      %v1102 = vpop.f32.mrf.mxu0
      %v1103 = vadd.f32 0.0, %v1102
      %1104 = vmatmul.f32.gmra.mxu0 %v987
      %v1105 = vpop.f32.mrf.mxu0
      %v1106 = vadd.f32 0.0, %v1105
      %1107 = vmatmul.f32.gmra.mxu0 %v988
      %v1108 = vpop.f32.mrf.mxu0
      %v1109 = vadd.f32 0.0, %v1108
      %1110 = vmatmul.f32.gmra.mxu0 %v989
      %v1111 = vpop.f32.mrf.mxu0
      %v1112 = vadd.f32 0.0, %v1111
      %1113 = vmatmul.f32.gmra.mxu0 %v990
      %v1114 = vpop.f32.mrf.mxu0
      %v1115 = vadd.f32 0.0, %v1114
      %1116 = vmatmul.f32.gmra.mxu0 %v991
      %v1117 = vpop.f32.mrf.mxu0
      %v1118 = vadd.f32 0.0, %v1117
      %1119 = vmatmul.f32.gmra.mxu0 %v992
      %v1120 = vpop.f32.mrf.mxu0
      %v1121 = vadd.f32 0.0, %v1120
      %1122 = vmatmul.f32.gmra.mxu0 %v993
      %v1123 = vpop.f32.mrf.mxu0
      %v1124 = vadd.f32 0.0, %v1123
      %1125 = vmatmul.f32.gmra.mxu0 %v994
      %v1126 = vpop.f32.mrf.mxu0
      %v1127 = vadd.f32 0.0, %v1126
      %1128 = vmatmul.f32.gmra.mxu0 %v995
      %v1129 = vpop.f32.mrf.mxu0
      %v1130 = vadd.f32 0.0, %v1129
      %1131 = vmatmul.f32.gmra.mxu0 %v996
      %v1132 = vpop.f32.mrf.mxu0
      %v1133 = vadd.f32 0.0, %v1132
      %1134 = vmatmul.f32.gmra.mxu0 %v997
      %v1135 = vpop.f32.mrf.mxu0
      %v1136 = vadd.f32 0.0, %v1135
      %1137 = vmatmul.f32.gmra.mxu0 %v998
      %v1138 = vpop.f32.mrf.mxu0
      %v1139 = vadd.f32 0.0, %v1138
      %1140 = vmatmul.f32.gmra.mxu0 %v999
      %v1141 = vpop.f32.mrf.mxu0
      %v1142 = vadd.f32 0.0, %v1141
      %1143 = vmatmul.f32.gmra.mxu0 %v1000
      %v1144 = vpop.f32.mrf.mxu0
      %v1145 = vadd.f32 0.0, %v1144
      %1146 = vmatmul.f32.gmra.mxu0 %v1001
      %v1147 = vpop.f32.mrf.mxu0
      %v1148 = vadd.f32 0.0, %v1147
      %1149 = vmatmul.f32.gmra.mxu0 %v1002
      %v1150 = vpop.f32.mrf.mxu0
      %v1151 = vadd.f32 0.0, %v1150
      %1152 = vmatmul.f32.gmra.mxu0 %v1003
      %v1153 = vpop.f32.mrf.mxu0
      %v1154 = vadd.f32 0.0, %v1153
      %1155 = vmatmul.f32.gmra.mxu0 %v1004
      %v1156 = vpop.f32.mrf.mxu0
      %v1157 = vadd.f32 0.0, %v1156
      %1158 = vmatmul.f32.gmra.mxu0 %v1005
      %v1159 = vpop.f32.mrf.mxu0
      %v1160 = vadd.f32 0.0, %v1159
      %1161 = vmatmul.f32.gmra.mxu0 %v1006
      %v1162 = vpop.f32.mrf.mxu0
      %v1163 = vadd.f32 0.0, %v1162
      %1164 = vmatmul.f32.gmra.mxu0 %v1007
      %v1165 = vpop.f32.mrf.mxu0
      %v1166 = vadd.f32 0.0, %v1165
      %1167 = vmatmul.f32.gmra.mxu0 %v1008
      %v1168 = vpop.f32.mrf.mxu0
      %v1169 = vadd.f32 0.0, %v1168
      %1170 = vdwg.mxu0
      %v1171 = vadd.f32 %v1009, %v1076
      %v1172 = vadd.f32 %v1010, %v1079
      %v1173 = vadd.f32 %v1011, %v1082
      %v1174 = vadd.f32 %v1012, %v1085
      %v1175 = vadd.f32 %v1013, %v1088
      %v1176 = vadd.f32 %v1014, %v1091
      %v1177 = vadd.f32 %v1015, %v1094
      %v1178 = vadd.f32 %v1016, %v1097
      %v1179 = vadd.f32 %v1017, %v1100
      %v1180 = vadd.f32 %v1018, %v1103
      %v1181 = vadd.f32 %v1019, %v1106
      %v1182 = vadd.f32 %v1020, %v1109
      %v1183 = vadd.f32 %v1021, %v1112
      %v1184 = vadd.f32 %v1022, %v1115
      %v1185 = vadd.f32 %v1023, %v1118
      %v1186 = vadd.f32 %v1024, %v1121
      %v1187 = vadd.f32 %v1025, %v1124
      %v1188 = vadd.f32 %v1026, %v1127
      %v1189 = vadd.f32 %v1027, %v1130
      %v1190 = vadd.f32 %v1028, %v1133
      %v1191 = vadd.f32 %v1029, %v1136
      %v1192 = vadd.f32 %v1030, %v1139
      %v1193 = vadd.f32 %v1031, %v1142
      %v1194 = vadd.f32 %v1032, %v1145
      %v1195 = vadd.f32 %v1033, %v1148
      %v1196 = vadd.f32 %v1034, %v1151
      %v1197 = vadd.f32 %v1035, %v1154
      %v1198 = vadd.f32 %v1036, %v1157
      %v1199 = vadd.f32 %v1037, %v1160
      %v1200 = vadd.f32 %v1038, %v1163
      %v1201 = vadd.f32 %v1039, %v1166
      %v1202 = vadd.f32 %v1040, %v1169
      %1203 = vst [vmem:[#allocation2] sm:$0xff] %v1171
      %1204 = vst [vmem:[#allocation2 + $0x8] sm:$0xff] %v1172
      %1205 = vst [vmem:[#allocation2 + $0x10] sm:$0xff] %v1173
      %1206 = vst [vmem:[#allocation2 + $0x18] sm:$0xff] %v1174
      %1207 = vst [vmem:[#allocation2 + $0x20] sm:$0xff] %v1175
      %1208 = vst [vmem:[#allocation2 + $0x28] sm:$0xff] %v1176
      %1209 = vst [vmem:[#allocation2 + $0x30] sm:$0xff] %v1177
      %1210 = vst [vmem:[#allocation2 + $0x38] sm:$0xff] %v1178
      %1211 = vst [vmem:[#allocation2 + $0x40] sm:$0xff] %v1179
      %1212 = vst [vmem:[#allocation2 + $0x48] sm:$0xff] %v1180
      %1213 = vst [vmem:[#allocation2 + $0x50] sm:$0xff] %v1181
      %1214 = vst [vmem:[#allocation2 + $0x58] sm:$0xff] %v1182
      %1215 = vst [vmem:[#allocation2 + $0x60] sm:$0xff] %v1183
      %1216 = vst [vmem:[#allocation2 + $0x68] sm:$0xff] %v1184
      %1217 = vst [vmem:[#allocation2 + $0x70] sm:$0xff] %v1185
      %1218 = vst [vmem:[#allocation2 + $0x78] sm:$0xff] %v1186
      %1219 = vst [vmem:[#allocation2 + $0x80] sm:$0xff] %v1187
      %1220 = vst [vmem:[#allocation2 + $0x88] sm:$0xff] %v1188
      %1221 = vst [vmem:[#allocation2 + $0x90] sm:$0xff] %v1189
      %1222 = vst [vmem:[#allocation2 + $0x98] sm:$0xff] %v1190
      %1223 = vst [vmem:[#allocation2 + $0xa0] sm:$0xff] %v1191
      %1224 = vst [vmem:[#allocation2 + $0xa8] sm:$0xff] %v1192
      %1225 = vst [vmem:[#allocation2 + $0xb0] sm:$0xff] %v1193
      %1226 = vst [vmem:[#allocation2 + $0xb8] sm:$0xff] %v1194
      %1227 = vst [vmem:[#allocation2 + $0xc0] sm:$0xff] %v1195
      %1228 = vst [vmem:[#allocation2 + $0xc8] sm:$0xff] %v1196
      %1229 = vst [vmem:[#allocation2 + $0xd0] sm:$0xff] %v1197
      %1230 = vst [vmem:[#allocation2 + $0xd8] sm:$0xff] %v1198
      %1231 = vst [vmem:[#allocation2 + $0xe0] sm:$0xff] %v1199
      %1232 = vst [vmem:[#allocation2 + $0xe8] sm:$0xff] %v1200
      %1233 = vst [vmem:[#allocation2 + $0xf0] sm:$0xff] %v1201
      %1234 = vst [vmem:[#allocation2 + $0xf8] sm:$0xff] %v1202
      %v1235 = vld [vmem:[%s976 + $0x1] sm:$0xff]
      %v1236 = vld [vmem:[%s976 + $0x9] sm:$0xff]
      %v1237 = vld [vmem:[%s976 + $0x19] sm:$0xff]
      %v1238 = vld [vmem:[%s976 + $0x21] sm:$0xff]
      %v1239 = vld [vmem:[%s976 + $0x31] sm:$0xff]
      %v1240 = vld [vmem:[%s976 + $0x39] sm:$0xff]
      %v1241 = vld [vmem:[%s976 + $0x49] sm:$0xff]
      %v1242 = vld [vmem:[%s976 + $0x51] sm:$0xff]
      %v1243 = vld [vmem:[%s976 + $0x61] sm:$0xff]
      %v1244 = vld [vmem:[%s976 + $0x69] sm:$0xff]
      %v1245 = vld [vmem:[%s976 + $0x79] sm:$0xff]
      %v1246 = vld [vmem:[%s976 + $0x81] sm:$0xff]
      %v1247 = vld [vmem:[%s976 + $0x91] sm:$0xff]
      %v1248 = vld [vmem:[%s976 + $0x99] sm:$0xff]
      %v1249 = vld [vmem:[%s976 + $0xa9] sm:$0xff]
      %v1250 = vld [vmem:[%s976 + $0xb1] sm:$0xff]
      %v1251 = vld [vmem:[%s976 + $0xc1] sm:$0xff]
      %v1252 = vld [vmem:[%s976 + $0xc9] sm:$0xff]
      %v1253 = vld [vmem:[%s976 + $0xd9] sm:$0xff]
      %v1254 = vld [vmem:[%s976 + $0xe1] sm:$0xff]
      %v1255 = vld [vmem:[%s976 + $0xf1] sm:$0xff]
      %v1256 = vld [vmem:[%s976 + $0xf9] sm:$0xff]
      %v1257 = vld [vmem:[%s976 + $0x109] sm:$0xff]
      %v1258 = vld [vmem:[%s976 + $0x111] sm:$0xff]
      %v1259 = vld [vmem:[%s976 + $0x121] sm:$0xff]
      %v1260 = vld [vmem:[%s976 + $0x129] sm:$0xff]
      %v1261 = vld [vmem:[%s976 + $0x139] sm:$0xff]
      %v1262 = vld [vmem:[%s976 + $0x141] sm:$0xff]
      %v1263 = vld [vmem:[%s976 + $0x151] sm:$0xff]
      %v1264 = vld [vmem:[%s976 + $0x159] sm:$0xff]
      %v1265 = vld [vmem:[%s976 + $0x169] sm:$0xff]
      %v1266 = vld [vmem:[%s976 + $0x171] sm:$0xff]
      %v1267 = vld [vmem:[#allocation2] sm:$0xff]
      %v1268 = vld [vmem:[#allocation2 + $0x8] sm:$0xff]
      %v1269 = vld [vmem:[#allocation2 + $0x10] sm:$0xff]
      %v1270 = vld [vmem:[#allocation2 + $0x18] sm:$0xff]
      %v1271 = vld [vmem:[#allocation2 + $0x20] sm:$0xff]
      %v1272 = vld [vmem:[#allocation2 + $0x28] sm:$0xff]
      %v1273 = vld [vmem:[#allocation2 + $0x30] sm:$0xff]
      %v1274 = vld [vmem:[#allocation2 + $0x38] sm:$0xff]
      %v1275 = vld [vmem:[#allocation2 + $0x40] sm:$0xff]
      %v1276 = vld [vmem:[#allocation2 + $0x48] sm:$0xff]
      %v1277 = vld [vmem:[#allocation2 + $0x50] sm:$0xff]
      %v1278 = vld [vmem:[#allocation2 + $0x58] sm:$0xff]
      %v1279 = vld [vmem:[#allocation2 + $0x60] sm:$0xff]
      %v1280 = vld [vmem:[#allocation2 + $0x68] sm:$0xff]
      %v1281 = vld [vmem:[#allocation2 + $0x70] sm:$0xff]
      %v1282 = vld [vmem:[#allocation2 + $0x78] sm:$0xff]
      %v1283 = vld [vmem:[#allocation2 + $0x80] sm:$0xff]
      %v1284 = vld [vmem:[#allocation2 + $0x88] sm:$0xff]
      %v1285 = vld [vmem:[#allocation2 + $0x90] sm:$0xff]
      %v1286 = vld [vmem:[#allocation2 + $0x98] sm:$0xff]
      %v1287 = vld [vmem:[#allocation2 + $0xa0] sm:$0xff]
      %v1288 = vld [vmem:[#allocation2 + $0xa8] sm:$0xff]
      %v1289 = vld [vmem:[#allocation2 + $0xb0] sm:$0xff]
      %v1290 = vld [vmem:[#allocation2 + $0xb8] sm:$0xff]
      %v1291 = vld [vmem:[#allocation2 + $0xc0] sm:$0xff]
      %v1292 = vld [vmem:[#allocation2 + $0xc8] sm:$0xff]
      %v1293 = vld [vmem:[#allocation2 + $0xd0] sm:$0xff]
      %v1294 = vld [vmem:[#allocation2 + $0xd8] sm:$0xff]
      %v1295 = vld [vmem:[#allocation2 + $0xe0] sm:$0xff]
      %v1296 = vld [vmem:[#allocation2 + $0xe8] sm:$0xff]
      %v1297 = vld [vmem:[#allocation2 + $0xf0] sm:$0xff]
      %v1298 = vld [vmem:[#allocation2 + $0xf8] sm:$0xff]
      %s1299 = scalar_lea.vmem %s1, 512
      %v1300 = vld [vmem:[%s1299] sm:$0xff]
      %v1301 = vld [vmem:[%s1299 + $0x8] sm:$0xff]
      %v1302 = vld [vmem:[%s1299 + $0x10] sm:$0xff]
      %v1303 = vld [vmem:[%s1299 + $0x18] sm:$0xff]
      %v1304 = vld [vmem:[%s1299 + $0x20] sm:$0xff]
      %v1305 = vld [vmem:[%s1299 + $0x28] sm:$0xff]
      %v1306 = vld [vmem:[%s1299 + $0x30] sm:$0xff]
      %v1307 = vld [vmem:[%s1299 + $0x38] sm:$0xff]
      %v1308 = vld [vmem:[%s1299 + $0x40] sm:$0xff]
      %v1309 = vld [vmem:[%s1299 + $0x48] sm:$0xff]
      %v1310 = vld [vmem:[%s1299 + $0x50] sm:$0xff]
      %v1311 = vld [vmem:[%s1299 + $0x58] sm:$0xff]
      %v1312 = vld [vmem:[%s1299 + $0x60] sm:$0xff]
      %v1313 = vld [vmem:[%s1299 + $0x68] sm:$0xff]
      %v1314 = vld [vmem:[%s1299 + $0x70] sm:$0xff]
      %v1315 = vld [vmem:[%s1299 + $0x78] sm:$0xff]
      %1316 = vmatpush.msra.mxu0 %v1315
      %1317 = vmatpush.msra.mxu0 %v1314
      %1318 = vmatpush.msra.mxu0 %v1313
      %1319 = vmatpush.msra.mxu0 %v1312
      %1320 = vmatpush.msra.mxu0 %v1311
      %1321 = vmatpush.msra.mxu0 %v1310
      %1322 = vmatpush.msra.mxu0 %v1309
      %1323 = vmatpush.msra.mxu0 %v1308
      %1324 = vmatpush.msra.mxu0 %v1307
      %1325 = vmatpush.msra.mxu0 %v1306
      %1326 = vmatpush.msra.mxu0 %v1305
      %1327 = vmatpush.msra.mxu0 %v1304
      %1328 = vmatpush.msra.mxu0 %v1303
      %1329 = vmatpush.msra.mxu0 %v1302
      %1330 = vmatpush.msra.mxu0 %v1301
      %1331 = vmatpush.msra.mxu0 %v1300
      %1332 = vmatmul.f32.gmra.mxu0 %v1235
      %v1333 = vpop.f32.mrf.mxu0
      %v1334 = vadd.f32 0.0, %v1333
      %1335 = vmatmul.f32.gmra.mxu0 %v1236
      %v1336 = vpop.f32.mrf.mxu0
      %v1337 = vadd.f32 0.0, %v1336
      %1338 = vmatmul.f32.gmra.mxu0 %v1237
      %v1339 = vpop.f32.mrf.mxu0
      %v1340 = vadd.f32 0.0, %v1339
      %1341 = vmatmul.f32.gmra.mxu0 %v1238
      %v1342 = vpop.f32.mrf.mxu0
      %v1343 = vadd.f32 0.0, %v1342
      %1344 = vmatmul.f32.gmra.mxu0 %v1239
      %v1345 = vpop.f32.mrf.mxu0
      %v1346 = vadd.f32 0.0, %v1345
      %1347 = vmatmul.f32.gmra.mxu0 %v1240
      %v1348 = vpop.f32.mrf.mxu0
      %v1349 = vadd.f32 0.0, %v1348
      %1350 = vmatmul.f32.gmra.mxu0 %v1241
      %v1351 = vpop.f32.mrf.mxu0
      %v1352 = vadd.f32 0.0, %v1351
      %1353 = vmatmul.f32.gmra.mxu0 %v1242
      %v1354 = vpop.f32.mrf.mxu0
      %v1355 = vadd.f32 0.0, %v1354
      %1356 = vmatmul.f32.gmra.mxu0 %v1243
      %v1357 = vpop.f32.mrf.mxu0
      %v1358 = vadd.f32 0.0, %v1357
      %1359 = vmatmul.f32.gmra.mxu0 %v1244
      %v1360 = vpop.f32.mrf.mxu0
      %v1361 = vadd.f32 0.0, %v1360
      %1362 = vmatmul.f32.gmra.mxu0 %v1245
      %v1363 = vpop.f32.mrf.mxu0
      %v1364 = vadd.f32 0.0, %v1363
      %1365 = vmatmul.f32.gmra.mxu0 %v1246
      %v1366 = vpop.f32.mrf.mxu0
      %v1367 = vadd.f32 0.0, %v1366
      %1368 = vmatmul.f32.gmra.mxu0 %v1247
      %v1369 = vpop.f32.mrf.mxu0
      %v1370 = vadd.f32 0.0, %v1369
      %1371 = vmatmul.f32.gmra.mxu0 %v1248
      %v1372 = vpop.f32.mrf.mxu0
      %v1373 = vadd.f32 0.0, %v1372
      %1374 = vmatmul.f32.gmra.mxu0 %v1249
      %v1375 = vpop.f32.mrf.mxu0
      %v1376 = vadd.f32 0.0, %v1375
      %1377 = vmatmul.f32.gmra.mxu0 %v1250
      %v1378 = vpop.f32.mrf.mxu0
      %v1379 = vadd.f32 0.0, %v1378
      %1380 = vmatmul.f32.gmra.mxu0 %v1251
      %v1381 = vpop.f32.mrf.mxu0
      %v1382 = vadd.f32 0.0, %v1381
      %1383 = vmatmul.f32.gmra.mxu0 %v1252
      %v1384 = vpop.f32.mrf.mxu0
      %v1385 = vadd.f32 0.0, %v1384
      %1386 = vmatmul.f32.gmra.mxu0 %v1253
      %v1387 = vpop.f32.mrf.mxu0
      %v1388 = vadd.f32 0.0, %v1387
      %1389 = vmatmul.f32.gmra.mxu0 %v1254
      %v1390 = vpop.f32.mrf.mxu0
      %v1391 = vadd.f32 0.0, %v1390
      %1392 = vmatmul.f32.gmra.mxu0 %v1255
      %v1393 = vpop.f32.mrf.mxu0
      %v1394 = vadd.f32 0.0, %v1393
      %1395 = vmatmul.f32.gmra.mxu0 %v1256
      %v1396 = vpop.f32.mrf.mxu0
      %v1397 = vadd.f32 0.0, %v1396
      %1398 = vmatmul.f32.gmra.mxu0 %v1257
      %v1399 = vpop.f32.mrf.mxu0
      %v1400 = vadd.f32 0.0, %v1399
      %1401 = vmatmul.f32.gmra.mxu0 %v1258
      %v1402 = vpop.f32.mrf.mxu0
      %v1403 = vadd.f32 0.0, %v1402
      %1404 = vmatmul.f32.gmra.mxu0 %v1259
      %v1405 = vpop.f32.mrf.mxu0
      %v1406 = vadd.f32 0.0, %v1405
      %1407 = vmatmul.f32.gmra.mxu0 %v1260
      %v1408 = vpop.f32.mrf.mxu0
      %v1409 = vadd.f32 0.0, %v1408
      %1410 = vmatmul.f32.gmra.mxu0 %v1261
      %v1411 = vpop.f32.mrf.mxu0
      %v1412 = vadd.f32 0.0, %v1411
      %1413 = vmatmul.f32.gmra.mxu0 %v1262
      %v1414 = vpop.f32.mrf.mxu0
      %v1415 = vadd.f32 0.0, %v1414
      %1416 = vmatmul.f32.gmra.mxu0 %v1263
      %v1417 = vpop.f32.mrf.mxu0
      %v1418 = vadd.f32 0.0, %v1417
      %1419 = vmatmul.f32.gmra.mxu0 %v1264
      %v1420 = vpop.f32.mrf.mxu0
      %v1421 = vadd.f32 0.0, %v1420
      %1422 = vmatmul.f32.gmra.mxu0 %v1265
      %v1423 = vpop.f32.mrf.mxu0
      %v1424 = vadd.f32 0.0, %v1423
      %1425 = vmatmul.f32.gmra.mxu0 %v1266
      %v1426 = vpop.f32.mrf.mxu0
      %v1427 = vadd.f32 0.0, %v1426
      %1428 = vdwg.mxu0
      %v1429 = vadd.f32 %v1267, %v1334
      %v1430 = vadd.f32 %v1268, %v1337
      %v1431 = vadd.f32 %v1269, %v1340
      %v1432 = vadd.f32 %v1270, %v1343
      %v1433 = vadd.f32 %v1271, %v1346
      %v1434 = vadd.f32 %v1272, %v1349
      %v1435 = vadd.f32 %v1273, %v1352
      %v1436 = vadd.f32 %v1274, %v1355
      %v1437 = vadd.f32 %v1275, %v1358
      %v1438 = vadd.f32 %v1276, %v1361
      %v1439 = vadd.f32 %v1277, %v1364
      %v1440 = vadd.f32 %v1278, %v1367
      %v1441 = vadd.f32 %v1279, %v1370
      %v1442 = vadd.f32 %v1280, %v1373
      %v1443 = vadd.f32 %v1281, %v1376
      %v1444 = vadd.f32 %v1282, %v1379
      %v1445 = vadd.f32 %v1283, %v1382
      %v1446 = vadd.f32 %v1284, %v1385
      %v1447 = vadd.f32 %v1285, %v1388
      %v1448 = vadd.f32 %v1286, %v1391
      %v1449 = vadd.f32 %v1287, %v1394
      %v1450 = vadd.f32 %v1288, %v1397
      %v1451 = vadd.f32 %v1289, %v1400
      %v1452 = vadd.f32 %v1290, %v1403
      %v1453 = vadd.f32 %v1291, %v1406
      %v1454 = vadd.f32 %v1292, %v1409
      %v1455 = vadd.f32 %v1293, %v1412
      %v1456 = vadd.f32 %v1294, %v1415
      %v1457 = vadd.f32 %v1295, %v1418
      %v1458 = vadd.f32 %v1296, %v1421
      %v1459 = vadd.f32 %v1297, %v1424
      %v1460 = vadd.f32 %v1298, %v1427
      %1461 = vst [vmem:[#allocation2] sm:$0xff] %v1429
      %1462 = vst [vmem:[#allocation2 + $0x8] sm:$0xff] %v1430
      %1463 = vst [vmem:[#allocation2 + $0x10] sm:$0xff] %v1431
      %1464 = vst [vmem:[#allocation2 + $0x18] sm:$0xff] %v1432
      %1465 = vst [vmem:[#allocation2 + $0x20] sm:$0xff] %v1433
      %1466 = vst [vmem:[#allocation2 + $0x28] sm:$0xff] %v1434
      %1467 = vst [vmem:[#allocation2 + $0x30] sm:$0xff] %v1435
      %1468 = vst [vmem:[#allocation2 + $0x38] sm:$0xff] %v1436
      %1469 = vst [vmem:[#allocation2 + $0x40] sm:$0xff] %v1437
      %1470 = vst [vmem:[#allocation2 + $0x48] sm:$0xff] %v1438
      %1471 = vst [vmem:[#allocation2 + $0x50] sm:$0xff] %v1439
      %1472 = vst [vmem:[#allocation2 + $0x58] sm:$0xff] %v1440
      %1473 = vst [vmem:[#allocation2 + $0x60] sm:$0xff] %v1441
      %1474 = vst [vmem:[#allocation2 + $0x68] sm:$0xff] %v1442
      %1475 = vst [vmem:[#allocation2 + $0x70] sm:$0xff] %v1443
      %1476 = vst [vmem:[#allocation2 + $0x78] sm:$0xff] %v1444
      %1477 = vst [vmem:[#allocation2 + $0x80] sm:$0xff] %v1445
      %1478 = vst [vmem:[#allocation2 + $0x88] sm:$0xff] %v1446
      %1479 = vst [vmem:[#allocation2 + $0x90] sm:$0xff] %v1447
      %1480 = vst [vmem:[#allocation2 + $0x98] sm:$0xff] %v1448
      %1481 = vst [vmem:[#allocation2 + $0xa0] sm:$0xff] %v1449
      %1482 = vst [vmem:[#allocation2 + $0xa8] sm:$0xff] %v1450
      %1483 = vst [vmem:[#allocation2 + $0xb0] sm:$0xff] %v1451
      %1484 = vst [vmem:[#allocation2 + $0xb8] sm:$0xff] %v1452
      %1485 = vst [vmem:[#allocation2 + $0xc0] sm:$0xff] %v1453
      %1486 = vst [vmem:[#allocation2 + $0xc8] sm:$0xff] %v1454
      %1487 = vst [vmem:[#allocation2 + $0xd0] sm:$0xff] %v1455
      %1488 = vst [vmem:[#allocation2 + $0xd8] sm:$0xff] %v1456
      %1489 = vst [vmem:[#allocation2 + $0xe0] sm:$0xff] %v1457
      %1490 = vst [vmem:[#allocation2 + $0xe8] sm:$0xff] %v1458
      %1491 = vst [vmem:[#allocation2 + $0xf0] sm:$0xff] %v1459
      %1492 = vst [vmem:[#allocation2 + $0xf8] sm:$0xff] %v1460
      %v1493 = vld [vmem:[%s976 + $0x2] sm:$0xff]
      %v1494 = vld [vmem:[%s976 + $0xa] sm:$0xff]
      %v1495 = vld [vmem:[%s976 + $0x1a] sm:$0xff]
      %v1496 = vld [vmem:[%s976 + $0x22] sm:$0xff]
      %v1497 = vld [vmem:[%s976 + $0x32] sm:$0xff]
      %v1498 = vld [vmem:[%s976 + $0x3a] sm:$0xff]
      %v1499 = vld [vmem:[%s976 + $0x4a] sm:$0xff]
      %v1500 = vld [vmem:[%s976 + $0x52] sm:$0xff]
      %v1501 = vld [vmem:[%s976 + $0x62] sm:$0xff]
      %v1502 = vld [vmem:[%s976 + $0x6a] sm:$0xff]
      %v1503 = vld [vmem:[%s976 + $0x7a] sm:$0xff]
      %v1504 = vld [vmem:[%s976 + $0x82] sm:$0xff]
      %v1505 = vld [vmem:[%s976 + $0x92] sm:$0xff]
      %v1506 = vld [vmem:[%s976 + $0x9a] sm:$0xff]
      %v1507 = vld [vmem:[%s976 + $0xaa] sm:$0xff]
      %v1508 = vld [vmem:[%s976 + $0xb2] sm:$0xff]
      %v1509 = vld [vmem:[%s976 + $0xc2] sm:$0xff]
      %v1510 = vld [vmem:[%s976 + $0xca] sm:$0xff]
      %v1511 = vld [vmem:[%s976 + $0xda] sm:$0xff]
      %v1512 = vld [vmem:[%s976 + $0xe2] sm:$0xff]
      %v1513 = vld [vmem:[%s976 + $0xf2] sm:$0xff]
      %v1514 = vld [vmem:[%s976 + $0xfa] sm:$0xff]
      %v1515 = vld [vmem:[%s976 + $0x10a] sm:$0xff]
      %v1516 = vld [vmem:[%s976 + $0x112] sm:$0xff]
      %v1517 = vld [vmem:[%s976 + $0x122] sm:$0xff]
      %v1518 = vld [vmem:[%s976 + $0x12a] sm:$0xff]
      %v1519 = vld [vmem:[%s976 + $0x13a] sm:$0xff]
      %v1520 = vld [vmem:[%s976 + $0x142] sm:$0xff]
      %v1521 = vld [vmem:[%s976 + $0x152] sm:$0xff]
      %v1522 = vld [vmem:[%s976 + $0x15a] sm:$0xff]
      %v1523 = vld [vmem:[%s976 + $0x16a] sm:$0xff]
      %v1524 = vld [vmem:[%s976 + $0x172] sm:$0xff]
      %v1525 = vld [vmem:[#allocation2] sm:$0xff]
      %v1526 = vld [vmem:[#allocation2 + $0x8] sm:$0xff]
      %v1527 = vld [vmem:[#allocation2 + $0x10] sm:$0xff]
      %v1528 = vld [vmem:[#allocation2 + $0x18] sm:$0xff]
      %v1529 = vld [vmem:[#allocation2 + $0x20] sm:$0xff]
      %v1530 = vld [vmem:[#allocation2 + $0x28] sm:$0xff]
      %v1531 = vld [vmem:[#allocation2 + $0x30] sm:$0xff]
      %v1532 = vld [vmem:[#allocation2 + $0x38] sm:$0xff]
      %v1533 = vld [vmem:[#allocation2 + $0x40] sm:$0xff]
      %v1534 = vld [vmem:[#allocation2 + $0x48] sm:$0xff]
      %v1535 = vld [vmem:[#allocation2 + $0x50] sm:$0xff]
      %v1536 = vld [vmem:[#allocation2 + $0x58] sm:$0xff]
      %v1537 = vld [vmem:[#allocation2 + $0x60] sm:$0xff]
      %v1538 = vld [vmem:[#allocation2 + $0x68] sm:$0xff]
      %v1539 = vld [vmem:[#allocation2 + $0x70] sm:$0xff]
      %v1540 = vld [vmem:[#allocation2 + $0x78] sm:$0xff]
      %v1541 = vld [vmem:[#allocation2 + $0x80] sm:$0xff]
      %v1542 = vld [vmem:[#allocation2 + $0x88] sm:$0xff]
      %v1543 = vld [vmem:[#allocation2 + $0x90] sm:$0xff]
      %v1544 = vld [vmem:[#allocation2 + $0x98] sm:$0xff]
      %v1545 = vld [vmem:[#allocation2 + $0xa0] sm:$0xff]
      %v1546 = vld [vmem:[#allocation2 + $0xa8] sm:$0xff]
      %v1547 = vld [vmem:[#allocation2 + $0xb0] sm:$0xff]
      %v1548 = vld [vmem:[#allocation2 + $0xb8] sm:$0xff]
      %v1549 = vld [vmem:[#allocation2 + $0xc0] sm:$0xff]
      %v1550 = vld [vmem:[#allocation2 + $0xc8] sm:$0xff]
      %v1551 = vld [vmem:[#allocation2 + $0xd0] sm:$0xff]
      %v1552 = vld [vmem:[#allocation2 + $0xd8] sm:$0xff]
      %v1553 = vld [vmem:[#allocation2 + $0xe0] sm:$0xff]
      %v1554 = vld [vmem:[#allocation2 + $0xe8] sm:$0xff]
      %v1555 = vld [vmem:[#allocation2 + $0xf0] sm:$0xff]
      %v1556 = vld [vmem:[#allocation2 + $0xf8] sm:$0xff]
      %s1557 = scalar_lea.vmem %s1, 640
      %v1558 = vld [vmem:[%s1557] sm:$0xff]
      %v1559 = vld [vmem:[%s1557 + $0x8] sm:$0xff]
      %v1560 = vld [vmem:[%s1557 + $0x10] sm:$0xff]
      %v1561 = vld [vmem:[%s1557 + $0x18] sm:$0xff]
      %v1562 = vld [vmem:[%s1557 + $0x20] sm:$0xff]
      %v1563 = vld [vmem:[%s1557 + $0x28] sm:$0xff]
      %v1564 = vld [vmem:[%s1557 + $0x30] sm:$0xff]
      %v1565 = vld [vmem:[%s1557 + $0x38] sm:$0xff]
      %v1566 = vld [vmem:[%s1557 + $0x40] sm:$0xff]
      %v1567 = vld [vmem:[%s1557 + $0x48] sm:$0xff]
      %v1568 = vld [vmem:[%s1557 + $0x50] sm:$0xff]
      %v1569 = vld [vmem:[%s1557 + $0x58] sm:$0xff]
      %v1570 = vld [vmem:[%s1557 + $0x60] sm:$0xff]
      %v1571 = vld [vmem:[%s1557 + $0x68] sm:$0xff]
      %v1572 = vld [vmem:[%s1557 + $0x70] sm:$0xff]
      %v1573 = vld [vmem:[%s1557 + $0x78] sm:$0xff]
      %1574 = vmatpush.msra.mxu0 %v1573
      %1575 = vmatpush.msra.mxu0 %v1572
      %1576 = vmatpush.msra.mxu0 %v1571
      %1577 = vmatpush.msra.mxu0 %v1570
      %1578 = vmatpush.msra.mxu0 %v1569
      %1579 = vmatpush.msra.mxu0 %v1568
      %1580 = vmatpush.msra.mxu0 %v1567
      %1581 = vmatpush.msra.mxu0 %v1566
      %1582 = vmatpush.msra.mxu0 %v1565
      %1583 = vmatpush.msra.mxu0 %v1564
      %1584 = vmatpush.msra.mxu0 %v1563
      %1585 = vmatpush.msra.mxu0 %v1562
      %1586 = vmatpush.msra.mxu0 %v1561
      %1587 = vmatpush.msra.mxu0 %v1560
      %1588 = vmatpush.msra.mxu0 %v1559
      %1589 = vmatpush.msra.mxu0 %v1558
      %1590 = vmatmul.f32.gmra.mxu0 %v1493
      %v1591 = vpop.f32.mrf.mxu0
      %v1592 = vadd.f32 0.0, %v1591
      %1593 = vmatmul.f32.gmra.mxu0 %v1494
      %v1594 = vpop.f32.mrf.mxu0
      %v1595 = vadd.f32 0.0, %v1594
      %1596 = vmatmul.f32.gmra.mxu0 %v1495
      %v1597 = vpop.f32.mrf.mxu0
      %v1598 = vadd.f32 0.0, %v1597
      %1599 = vmatmul.f32.gmra.mxu0 %v1496
      %v1600 = vpop.f32.mrf.mxu0
      %v1601 = vadd.f32 0.0, %v1600
      %1602 = vmatmul.f32.gmra.mxu0 %v1497
      %v1603 = vpop.f32.mrf.mxu0
      %v1604 = vadd.f32 0.0, %v1603
      %1605 = vmatmul.f32.gmra.mxu0 %v1498
      %v1606 = vpop.f32.mrf.mxu0
      %v1607 = vadd.f32 0.0, %v1606
      %1608 = vmatmul.f32.gmra.mxu0 %v1499
      %v1609 = vpop.f32.mrf.mxu0
      %v1610 = vadd.f32 0.0, %v1609
      %1611 = vmatmul.f32.gmra.mxu0 %v1500
      %v1612 = vpop.f32.mrf.mxu0
      %v1613 = vadd.f32 0.0, %v1612
      %1614 = vmatmul.f32.gmra.mxu0 %v1501
      %v1615 = vpop.f32.mrf.mxu0
      %v1616 = vadd.f32 0.0, %v1615
      %1617 = vmatmul.f32.gmra.mxu0 %v1502
      %v1618 = vpop.f32.mrf.mxu0
      %v1619 = vadd.f32 0.0, %v1618
      %1620 = vmatmul.f32.gmra.mxu0 %v1503
      %v1621 = vpop.f32.mrf.mxu0
      %v1622 = vadd.f32 0.0, %v1621
      %1623 = vmatmul.f32.gmra.mxu0 %v1504
      %v1624 = vpop.f32.mrf.mxu0
      %v1625 = vadd.f32 0.0, %v1624
      %1626 = vmatmul.f32.gmra.mxu0 %v1505
      %v1627 = vpop.f32.mrf.mxu0
      %v1628 = vadd.f32 0.0, %v1627
      %1629 = vmatmul.f32.gmra.mxu0 %v1506
      %v1630 = vpop.f32.mrf.mxu0
      %v1631 = vadd.f32 0.0, %v1630
      %1632 = vmatmul.f32.gmra.mxu0 %v1507
      %v1633 = vpop.f32.mrf.mxu0
      %v1634 = vadd.f32 0.0, %v1633
      %1635 = vmatmul.f32.gmra.mxu0 %v1508
      %v1636 = vpop.f32.mrf.mxu0
      %v1637 = vadd.f32 0.0, %v1636
      %1638 = vmatmul.f32.gmra.mxu0 %v1509
      %v1639 = vpop.f32.mrf.mxu0
      %v1640 = vadd.f32 0.0, %v1639
      %1641 = vmatmul.f32.gmra.mxu0 %v1510
      %v1642 = vpop.f32.mrf.mxu0
      %v1643 = vadd.f32 0.0, %v1642
      %1644 = vmatmul.f32.gmra.mxu0 %v1511
      %v1645 = vpop.f32.mrf.mxu0
      %v1646 = vadd.f32 0.0, %v1645
      %1647 = vmatmul.f32.gmra.mxu0 %v1512
      %v1648 = vpop.f32.mrf.mxu0
      %v1649 = vadd.f32 0.0, %v1648
      %1650 = vmatmul.f32.gmra.mxu0 %v1513
      %v1651 = vpop.f32.mrf.mxu0
      %v1652 = vadd.f32 0.0, %v1651
      %1653 = vmatmul.f32.gmra.mxu0 %v1514
      %v1654 = vpop.f32.mrf.mxu0
      %v1655 = vadd.f32 0.0, %v1654
      %1656 = vmatmul.f32.gmra.mxu0 %v1515
      %v1657 = vpop.f32.mrf.mxu0
      %v1658 = vadd.f32 0.0, %v1657
      %1659 = vmatmul.f32.gmra.mxu0 %v1516
      %v1660 = vpop.f32.mrf.mxu0
      %v1661 = vadd.f32 0.0, %v1660
      %1662 = vmatmul.f32.gmra.mxu0 %v1517
      %v1663 = vpop.f32.mrf.mxu0
      %v1664 = vadd.f32 0.0, %v1663
      %1665 = vmatmul.f32.gmra.mxu0 %v1518
      %v1666 = vpop.f32.mrf.mxu0
      %v1667 = vadd.f32 0.0, %v1666
      %1668 = vmatmul.f32.gmra.mxu0 %v1519
      %v1669 = vpop.f32.mrf.mxu0
      %v1670 = vadd.f32 0.0, %v1669
      %1671 = vmatmul.f32.gmra.mxu0 %v1520
      %v1672 = vpop.f32.mrf.mxu0
      %v1673 = vadd.f32 0.0, %v1672
      %1674 = vmatmul.f32.gmra.mxu0 %v1521
      %v1675 = vpop.f32.mrf.mxu0
      %v1676 = vadd.f32 0.0, %v1675
      %1677 = vmatmul.f32.gmra.mxu0 %v1522
      %v1678 = vpop.f32.mrf.mxu0
      %v1679 = vadd.f32 0.0, %v1678
      %1680 = vmatmul.f32.gmra.mxu0 %v1523
      %v1681 = vpop.f32.mrf.mxu0
      %v1682 = vadd.f32 0.0, %v1681
      %1683 = vmatmul.f32.gmra.mxu0 %v1524
      %v1684 = vpop.f32.mrf.mxu0
      %v1685 = vadd.f32 0.0, %v1684
      %1686 = vdwg.mxu0
      %v1687 = vadd.f32 %v1525, %v1592
      %v1688 = vadd.f32 %v1526, %v1595
      %v1689 = vadd.f32 %v1527, %v1598
      %v1690 = vadd.f32 %v1528, %v1601
      %v1691 = vadd.f32 %v1529, %v1604
      %v1692 = vadd.f32 %v1530, %v1607
      %v1693 = vadd.f32 %v1531, %v1610
      %v1694 = vadd.f32 %v1532, %v1613
      %v1695 = vadd.f32 %v1533, %v1616
      %v1696 = vadd.f32 %v1534, %v1619
      %v1697 = vadd.f32 %v1535, %v1622
      %v1698 = vadd.f32 %v1536, %v1625
      %v1699 = vadd.f32 %v1537, %v1628
      %v1700 = vadd.f32 %v1538, %v1631
      %v1701 = vadd.f32 %v1539, %v1634
      %v1702 = vadd.f32 %v1540, %v1637
      %v1703 = vadd.f32 %v1541, %v1640
      %v1704 = vadd.f32 %v1542, %v1643
      %v1705 = vadd.f32 %v1543, %v1646
      %v1706 = vadd.f32 %v1544, %v1649
      %v1707 = vadd.f32 %v1545, %v1652
      %v1708 = vadd.f32 %v1546, %v1655
      %v1709 = vadd.f32 %v1547, %v1658
      %v1710 = vadd.f32 %v1548, %v1661
      %v1711 = vadd.f32 %v1549, %v1664
      %v1712 = vadd.f32 %v1550, %v1667
      %v1713 = vadd.f32 %v1551, %v1670
      %v1714 = vadd.f32 %v1552, %v1673
      %v1715 = vadd.f32 %v1553, %v1676
      %v1716 = vadd.f32 %v1554, %v1679
      %v1717 = vadd.f32 %v1555, %v1682
      %v1718 = vadd.f32 %v1556, %v1685
      %1719 = vst [vmem:[#allocation2] sm:$0xff] %v1687
      %1720 = vst [vmem:[#allocation2 + $0x8] sm:$0xff] %v1688
      %1721 = vst [vmem:[#allocation2 + $0x10] sm:$0xff] %v1689
      %1722 = vst [vmem:[#allocation2 + $0x18] sm:$0xff] %v1690
      %1723 = vst [vmem:[#allocation2 + $0x20] sm:$0xff] %v1691
      %1724 = vst [vmem:[#allocation2 + $0x28] sm:$0xff] %v1692
      %1725 = vst [vmem:[#allocation2 + $0x30] sm:$0xff] %v1693
      %1726 = vst [vmem:[#allocation2 + $0x38] sm:$0xff] %v1694
      %1727 = vst [vmem:[#allocation2 + $0x40] sm:$0xff] %v1695
      %1728 = vst [vmem:[#allocation2 + $0x48] sm:$0xff] %v1696
      %1729 = vst [vmem:[#allocation2 + $0x50] sm:$0xff] %v1697
      %1730 = vst [vmem:[#allocation2 + $0x58] sm:$0xff] %v1698
      %1731 = vst [vmem:[#allocation2 + $0x60] sm:$0xff] %v1699
      %1732 = vst [vmem:[#allocation2 + $0x68] sm:$0xff] %v1700
      %1733 = vst [vmem:[#allocation2 + $0x70] sm:$0xff] %v1701
      %1734 = vst [vmem:[#allocation2 + $0x78] sm:$0xff] %v1702
      %1735 = vst [vmem:[#allocation2 + $0x80] sm:$0xff] %v1703
      %1736 = vst [vmem:[#allocation2 + $0x88] sm:$0xff] %v1704
      %1737 = vst [vmem:[#allocation2 + $0x90] sm:$0xff] %v1705
      %1738 = vst [vmem:[#allocation2 + $0x98] sm:$0xff] %v1706
      %1739 = vst [vmem:[#allocation2 + $0xa0] sm:$0xff] %v1707
      %1740 = vst [vmem:[#allocation2 + $0xa8] sm:$0xff] %v1708
      %1741 = vst [vmem:[#allocation2 + $0xb0] sm:$0xff] %v1709
      %1742 = vst [vmem:[#allocation2 + $0xb8] sm:$0xff] %v1710
      %1743 = vst [vmem:[#allocation2 + $0xc0] sm:$0xff] %v1711
      %1744 = vst [vmem:[#allocation2 + $0xc8] sm:$0xff] %v1712
      %1745 = vst [vmem:[#allocation2 + $0xd0] sm:$0xff] %v1713
      %1746 = vst [vmem:[#allocation2 + $0xd8] sm:$0xff] %v1714
      %1747 = vst [vmem:[#allocation2 + $0xe0] sm:$0xff] %v1715
      %1748 = vst [vmem:[#allocation2 + $0xe8] sm:$0xff] %v1716
      %1749 = vst [vmem:[#allocation2 + $0xf0] sm:$0xff] %v1717
      %1750 = vst [vmem:[#allocation2 + $0xf8] sm:$0xff] %v1718
      %s1751 = scalar_lea.vmem %s165, 48
      %v1752 = vld [vmem:[%s1751] sm:$0xff]
      %v1753 = vld [vmem:[%s1751 + $0x8] sm:$0xff]
      %v1754 = vld [vmem:[%s1751 + $0x18] sm:$0xff]
      %v1755 = vld [vmem:[%s1751 + $0x20] sm:$0xff]
      %v1756 = vld [vmem:[%s1751 + $0x30] sm:$0xff]
      %v1757 = vld [vmem:[%s1751 + $0x38] sm:$0xff]
      %v1758 = vld [vmem:[%s1751 + $0x48] sm:$0xff]
      %v1759 = vld [vmem:[%s1751 + $0x50] sm:$0xff]
      %v1760 = vld [vmem:[%s1751 + $0x60] sm:$0xff]
      %v1761 = vld [vmem:[%s1751 + $0x68] sm:$0xff]
      %v1762 = vld [vmem:[%s1751 + $0x78] sm:$0xff]
      %v1763 = vld [vmem:[%s1751 + $0x80] sm:$0xff]
      %v1764 = vld [vmem:[%s1751 + $0x90] sm:$0xff]
      %v1765 = vld [vmem:[%s1751 + $0x98] sm:$0xff]
      %v1766 = vld [vmem:[%s1751 + $0xa8] sm:$0xff]
      %v1767 = vld [vmem:[%s1751 + $0xb0] sm:$0xff]
      %v1768 = vld [vmem:[%s1751 + $0xc0] sm:$0xff]
      %v1769 = vld [vmem:[%s1751 + $0xc8] sm:$0xff]
      %v1770 = vld [vmem:[%s1751 + $0xd8] sm:$0xff]
      %v1771 = vld [vmem:[%s1751 + $0xe0] sm:$0xff]
      %v1772 = vld [vmem:[%s1751 + $0xf0] sm:$0xff]
      %v1773 = vld [vmem:[%s1751 + $0xf8] sm:$0xff]
      %v1774 = vld [vmem:[%s1751 + $0x108] sm:$0xff]
      %v1775 = vld [vmem:[%s1751 + $0x110] sm:$0xff]
      %v1776 = vld [vmem:[%s1751 + $0x120] sm:$0xff]
      %v1777 = vld [vmem:[%s1751 + $0x128] sm:$0xff]
      %v1778 = vld [vmem:[%s1751 + $0x138] sm:$0xff]
      %v1779 = vld [vmem:[%s1751 + $0x140] sm:$0xff]
      %v1780 = vld [vmem:[%s1751 + $0x150] sm:$0xff]
      %v1781 = vld [vmem:[%s1751 + $0x158] sm:$0xff]
      %v1782 = vld [vmem:[%s1751 + $0x168] sm:$0xff]
      %v1783 = vld [vmem:[%s1751 + $0x170] sm:$0xff]
      %v1784 = vld [vmem:[#allocation2] sm:$0xff]
      %v1785 = vld [vmem:[#allocation2 + $0x8] sm:$0xff]
      %v1786 = vld [vmem:[#allocation2 + $0x10] sm:$0xff]
      %v1787 = vld [vmem:[#allocation2 + $0x18] sm:$0xff]
      %v1788 = vld [vmem:[#allocation2 + $0x20] sm:$0xff]
      %v1789 = vld [vmem:[#allocation2 + $0x28] sm:$0xff]
      %v1790 = vld [vmem:[#allocation2 + $0x30] sm:$0xff]
      %v1791 = vld [vmem:[#allocation2 + $0x38] sm:$0xff]
      %v1792 = vld [vmem:[#allocation2 + $0x40] sm:$0xff]
      %v1793 = vld [vmem:[#allocation2 + $0x48] sm:$0xff]
      %v1794 = vld [vmem:[#allocation2 + $0x50] sm:$0xff]
      %v1795 = vld [vmem:[#allocation2 + $0x58] sm:$0xff]
      %v1796 = vld [vmem:[#allocation2 + $0x60] sm:$0xff]
      %v1797 = vld [vmem:[#allocation2 + $0x68] sm:$0xff]
      %v1798 = vld [vmem:[#allocation2 + $0x70] sm:$0xff]
      %v1799 = vld [vmem:[#allocation2 + $0x78] sm:$0xff]
      %v1800 = vld [vmem:[#allocation2 + $0x80] sm:$0xff]
      %v1801 = vld [vmem:[#allocation2 + $0x88] sm:$0xff]
      %v1802 = vld [vmem:[#allocation2 + $0x90] sm:$0xff]
      %v1803 = vld [vmem:[#allocation2 + $0x98] sm:$0xff]
      %v1804 = vld [vmem:[#allocation2 + $0xa0] sm:$0xff]
      %v1805 = vld [vmem:[#allocation2 + $0xa8] sm:$0xff]
      %v1806 = vld [vmem:[#allocation2 + $0xb0] sm:$0xff]
      %v1807 = vld [vmem:[#allocation2 + $0xb8] sm:$0xff]
      %v1808 = vld [vmem:[#allocation2 + $0xc0] sm:$0xff]
      %v1809 = vld [vmem:[#allocation2 + $0xc8] sm:$0xff]
      %v1810 = vld [vmem:[#allocation2 + $0xd0] sm:$0xff]
      %v1811 = vld [vmem:[#allocation2 + $0xd8] sm:$0xff]
      %v1812 = vld [vmem:[#allocation2 + $0xe0] sm:$0xff]
      %v1813 = vld [vmem:[#allocation2 + $0xe8] sm:$0xff]
      %v1814 = vld [vmem:[#allocation2 + $0xf0] sm:$0xff]
      %v1815 = vld [vmem:[#allocation2 + $0xf8] sm:$0xff]
      %s1816 = scalar_lea.vmem %s1, 768
      %v1817 = vld [vmem:[%s1816] sm:$0xff]
      %v1818 = vld [vmem:[%s1816 + $0x8] sm:$0xff]
      %v1819 = vld [vmem:[%s1816 + $0x10] sm:$0xff]
      %v1820 = vld [vmem:[%s1816 + $0x18] sm:$0xff]
      %v1821 = vld [vmem:[%s1816 + $0x20] sm:$0xff]
      %v1822 = vld [vmem:[%s1816 + $0x28] sm:$0xff]
      %v1823 = vld [vmem:[%s1816 + $0x30] sm:$0xff]
      %v1824 = vld [vmem:[%s1816 + $0x38] sm:$0xff]
      %v1825 = vld [vmem:[%s1816 + $0x40] sm:$0xff]
      %v1826 = vld [vmem:[%s1816 + $0x48] sm:$0xff]
      %v1827 = vld [vmem:[%s1816 + $0x50] sm:$0xff]
      %v1828 = vld [vmem:[%s1816 + $0x58] sm:$0xff]
      %v1829 = vld [vmem:[%s1816 + $0x60] sm:$0xff]
      %v1830 = vld [vmem:[%s1816 + $0x68] sm:$0xff]
      %v1831 = vld [vmem:[%s1816 + $0x70] sm:$0xff]
      %v1832 = vld [vmem:[%s1816 + $0x78] sm:$0xff]
      %1833 = vmatpush.msra.mxu0 %v1832
      %1834 = vmatpush.msra.mxu0 %v1831
      %1835 = vmatpush.msra.mxu0 %v1830
      %1836 = vmatpush.msra.mxu0 %v1829
      %1837 = vmatpush.msra.mxu0 %v1828
      %1838 = vmatpush.msra.mxu0 %v1827
      %1839 = vmatpush.msra.mxu0 %v1826
      %1840 = vmatpush.msra.mxu0 %v1825
      %1841 = vmatpush.msra.mxu0 %v1824
      %1842 = vmatpush.msra.mxu0 %v1823
      %1843 = vmatpush.msra.mxu0 %v1822
      %1844 = vmatpush.msra.mxu0 %v1821
      %1845 = vmatpush.msra.mxu0 %v1820
      %1846 = vmatpush.msra.mxu0 %v1819
      %1847 = vmatpush.msra.mxu0 %v1818
      %1848 = vmatpush.msra.mxu0 %v1817
      %1849 = vmatmul.f32.gmra.mxu0 %v1752
      %v1850 = vpop.f32.mrf.mxu0
      %v1851 = vadd.f32 0.0, %v1850
      %1852 = vmatmul.f32.gmra.mxu0 %v1753
      %v1853 = vpop.f32.mrf.mxu0
      %v1854 = vadd.f32 0.0, %v1853
      %1855 = vmatmul.f32.gmra.mxu0 %v1754
      %v1856 = vpop.f32.mrf.mxu0
      %v1857 = vadd.f32 0.0, %v1856
      %1858 = vmatmul.f32.gmra.mxu0 %v1755
      %v1859 = vpop.f32.mrf.mxu0
      %v1860 = vadd.f32 0.0, %v1859
      %1861 = vmatmul.f32.gmra.mxu0 %v1756
      %v1862 = vpop.f32.mrf.mxu0
      %v1863 = vadd.f32 0.0, %v1862
      %1864 = vmatmul.f32.gmra.mxu0 %v1757
      %v1865 = vpop.f32.mrf.mxu0
      %v1866 = vadd.f32 0.0, %v1865
      %1867 = vmatmul.f32.gmra.mxu0 %v1758
      %v1868 = vpop.f32.mrf.mxu0
      %v1869 = vadd.f32 0.0, %v1868
      %1870 = vmatmul.f32.gmra.mxu0 %v1759
      %v1871 = vpop.f32.mrf.mxu0
      %v1872 = vadd.f32 0.0, %v1871
      %1873 = vmatmul.f32.gmra.mxu0 %v1760
      %v1874 = vpop.f32.mrf.mxu0
      %v1875 = vadd.f32 0.0, %v1874
      %1876 = vmatmul.f32.gmra.mxu0 %v1761
      %v1877 = vpop.f32.mrf.mxu0
      %v1878 = vadd.f32 0.0, %v1877
      %1879 = vmatmul.f32.gmra.mxu0 %v1762
      %v1880 = vpop.f32.mrf.mxu0
      %v1881 = vadd.f32 0.0, %v1880
      %1882 = vmatmul.f32.gmra.mxu0 %v1763
      %v1883 = vpop.f32.mrf.mxu0
      %v1884 = vadd.f32 0.0, %v1883
      %1885 = vmatmul.f32.gmra.mxu0 %v1764
      %v1886 = vpop.f32.mrf.mxu0
      %v1887 = vadd.f32 0.0, %v1886
      %1888 = vmatmul.f32.gmra.mxu0 %v1765
      %v1889 = vpop.f32.mrf.mxu0
      %v1890 = vadd.f32 0.0, %v1889
      %1891 = vmatmul.f32.gmra.mxu0 %v1766
      %v1892 = vpop.f32.mrf.mxu0
      %v1893 = vadd.f32 0.0, %v1892
      %1894 = vmatmul.f32.gmra.mxu0 %v1767
      %v1895 = vpop.f32.mrf.mxu0
      %v1896 = vadd.f32 0.0, %v1895
      %1897 = vmatmul.f32.gmra.mxu0 %v1768
      %v1898 = vpop.f32.mrf.mxu0
      %v1899 = vadd.f32 0.0, %v1898
      %1900 = vmatmul.f32.gmra.mxu0 %v1769
      %v1901 = vpop.f32.mrf.mxu0
      %v1902 = vadd.f32 0.0, %v1901
      %1903 = vmatmul.f32.gmra.mxu0 %v1770
      %v1904 = vpop.f32.mrf.mxu0
      %v1905 = vadd.f32 0.0, %v1904
      %1906 = vmatmul.f32.gmra.mxu0 %v1771
      %v1907 = vpop.f32.mrf.mxu0
      %v1908 = vadd.f32 0.0, %v1907
      %1909 = vmatmul.f32.gmra.mxu0 %v1772
      %v1910 = vpop.f32.mrf.mxu0
      %v1911 = vadd.f32 0.0, %v1910
      %1912 = vmatmul.f32.gmra.mxu0 %v1773
      %v1913 = vpop.f32.mrf.mxu0
      %v1914 = vadd.f32 0.0, %v1913
      %1915 = vmatmul.f32.gmra.mxu0 %v1774
      %v1916 = vpop.f32.mrf.mxu0
      %v1917 = vadd.f32 0.0, %v1916
      %1918 = vmatmul.f32.gmra.mxu0 %v1775
      %v1919 = vpop.f32.mrf.mxu0
      %v1920 = vadd.f32 0.0, %v1919
      %1921 = vmatmul.f32.gmra.mxu0 %v1776
      %v1922 = vpop.f32.mrf.mxu0
      %v1923 = vadd.f32 0.0, %v1922
      %1924 = vmatmul.f32.gmra.mxu0 %v1777
      %v1925 = vpop.f32.mrf.mxu0
      %v1926 = vadd.f32 0.0, %v1925
      %1927 = vmatmul.f32.gmra.mxu0 %v1778
      %v1928 = vpop.f32.mrf.mxu0
      %v1929 = vadd.f32 0.0, %v1928
      %1930 = vmatmul.f32.gmra.mxu0 %v1779
      %v1931 = vpop.f32.mrf.mxu0
      %v1932 = vadd.f32 0.0, %v1931
      %1933 = vmatmul.f32.gmra.mxu0 %v1780
      %v1934 = vpop.f32.mrf.mxu0
      %v1935 = vadd.f32 0.0, %v1934
      %1936 = vmatmul.f32.gmra.mxu0 %v1781
      %v1937 = vpop.f32.mrf.mxu0
      %v1938 = vadd.f32 0.0, %v1937
      %1939 = vmatmul.f32.gmra.mxu0 %v1782
      %v1940 = vpop.f32.mrf.mxu0
      %v1941 = vadd.f32 0.0, %v1940
      %1942 = vmatmul.f32.gmra.mxu0 %v1783
      %v1943 = vpop.f32.mrf.mxu0
      %v1944 = vadd.f32 0.0, %v1943
      %1945 = vdwg.mxu0
      %v1946 = vadd.f32 %v1784, %v1851
      %v1947 = vadd.f32 %v1785, %v1854
      %v1948 = vadd.f32 %v1786, %v1857
      %v1949 = vadd.f32 %v1787, %v1860
      %v1950 = vadd.f32 %v1788, %v1863
      %v1951 = vadd.f32 %v1789, %v1866
      %v1952 = vadd.f32 %v1790, %v1869
      %v1953 = vadd.f32 %v1791, %v1872
      %v1954 = vadd.f32 %v1792, %v1875
      %v1955 = vadd.f32 %v1793, %v1878
      %v1956 = vadd.f32 %v1794, %v1881
      %v1957 = vadd.f32 %v1795, %v1884
      %v1958 = vadd.f32 %v1796, %v1887
      %v1959 = vadd.f32 %v1797, %v1890
      %v1960 = vadd.f32 %v1798, %v1893
      %v1961 = vadd.f32 %v1799, %v1896
      %v1962 = vadd.f32 %v1800, %v1899
      %v1963 = vadd.f32 %v1801, %v1902
      %v1964 = vadd.f32 %v1802, %v1905
      %v1965 = vadd.f32 %v1803, %v1908
      %v1966 = vadd.f32 %v1804, %v1911
      %v1967 = vadd.f32 %v1805, %v1914
      %v1968 = vadd.f32 %v1806, %v1917
      %v1969 = vadd.f32 %v1807, %v1920
      %v1970 = vadd.f32 %v1808, %v1923
      %v1971 = vadd.f32 %v1809, %v1926
      %v1972 = vadd.f32 %v1810, %v1929
      %v1973 = vadd.f32 %v1811, %v1932
      %v1974 = vadd.f32 %v1812, %v1935
      %v1975 = vadd.f32 %v1813, %v1938
      %v1976 = vadd.f32 %v1814, %v1941
      %v1977 = vadd.f32 %v1815, %v1944
      %1978 = vst [vmem:[#allocation2] sm:$0xff] %v1946
      %1979 = vst [vmem:[#allocation2 + $0x8] sm:$0xff] %v1947
      %1980 = vst [vmem:[#allocation2 + $0x10] sm:$0xff] %v1948
      %1981 = vst [vmem:[#allocation2 + $0x18] sm:$0xff] %v1949
      %1982 = vst [vmem:[#allocation2 + $0x20] sm:$0xff] %v1950
      %1983 = vst [vmem:[#allocation2 + $0x28] sm:$0xff] %v1951
      %1984 = vst [vmem:[#allocation2 + $0x30] sm:$0xff] %v1952
      %1985 = vst [vmem:[#allocation2 + $0x38] sm:$0xff] %v1953
      %1986 = vst [vmem:[#allocation2 + $0x40] sm:$0xff] %v1954
      %1987 = vst [vmem:[#allocation2 + $0x48] sm:$0xff] %v1955
      %1988 = vst [vmem:[#allocation2 + $0x50] sm:$0xff] %v1956
      %1989 = vst [vmem:[#allocation2 + $0x58] sm:$0xff] %v1957
      %1990 = vst [vmem:[#allocation2 + $0x60] sm:$0xff] %v1958
      %1991 = vst [vmem:[#allocation2 + $0x68] sm:$0xff] %v1959
      %1992 = vst [vmem:[#allocation2 + $0x70] sm:$0xff] %v1960
      %1993 = vst [vmem:[#allocation2 + $0x78] sm:$0xff] %v1961
      %1994 = vst [vmem:[#allocation2 + $0x80] sm:$0xff] %v1962
      %1995 = vst [vmem:[#allocation2 + $0x88] sm:$0xff] %v1963
      %1996 = vst [vmem:[#allocation2 + $0x90] sm:$0xff] %v1964
      %1997 = vst [vmem:[#allocation2 + $0x98] sm:$0xff] %v1965
      %1998 = vst [vmem:[#allocation2 + $0xa0] sm:$0xff] %v1966
      %1999 = vst [vmem:[#allocation2 + $0xa8] sm:$0xff] %v1967
      %2000 = vst [vmem:[#allocation2 + $0xb0] sm:$0xff] %v1968
      %2001 = vst [vmem:[#allocation2 + $0xb8] sm:$0xff] %v1969
      %2002 = vst [vmem:[#allocation2 + $0xc0] sm:$0xff] %v1970
      %2003 = vst [vmem:[#allocation2 + $0xc8] sm:$0xff] %v1971
      %2004 = vst [vmem:[#allocation2 + $0xd0] sm:$0xff] %v1972
      %2005 = vst [vmem:[#allocation2 + $0xd8] sm:$0xff] %v1973
      %2006 = vst [vmem:[#allocation2 + $0xe0] sm:$0xff] %v1974
      %2007 = vst [vmem:[#allocation2 + $0xe8] sm:$0xff] %v1975
      %2008 = vst [vmem:[#allocation2 + $0xf0] sm:$0xff] %v1976
      %2009 = vst [vmem:[#allocation2 + $0xf8] sm:$0xff] %v1977
      %v2010 = vld [vmem:[%s1751 + $0x1] sm:$0xff]
      %v2011 = vld [vmem:[%s1751 + $0x9] sm:$0xff]
      %v2012 = vld [vmem:[%s1751 + $0x19] sm:$0xff]
      %v2013 = vld [vmem:[%s1751 + $0x21] sm:$0xff]
      %v2014 = vld [vmem:[%s1751 + $0x31] sm:$0xff]
      %v2015 = vld [vmem:[%s1751 + $0x39] sm:$0xff]
      %v2016 = vld [vmem:[%s1751 + $0x49] sm:$0xff]
      %v2017 = vld [vmem:[%s1751 + $0x51] sm:$0xff]
      %v2018 = vld [vmem:[%s1751 + $0x61] sm:$0xff]
      %v2019 = vld [vmem:[%s1751 + $0x69] sm:$0xff]
      %v2020 = vld [vmem:[%s1751 + $0x79] sm:$0xff]
      %v2021 = vld [vmem:[%s1751 + $0x81] sm:$0xff]
      %v2022 = vld [vmem:[%s1751 + $0x91] sm:$0xff]
      %v2023 = vld [vmem:[%s1751 + $0x99] sm:$0xff]
      %v2024 = vld [vmem:[%s1751 + $0xa9] sm:$0xff]
      %v2025 = vld [vmem:[%s1751 + $0xb1] sm:$0xff]
      %v2026 = vld [vmem:[%s1751 + $0xc1] sm:$0xff]
      %v2027 = vld [vmem:[%s1751 + $0xc9] sm:$0xff]
      %v2028 = vld [vmem:[%s1751 + $0xd9] sm:$0xff]
      %v2029 = vld [vmem:[%s1751 + $0xe1] sm:$0xff]
      %v2030 = vld [vmem:[%s1751 + $0xf1] sm:$0xff]
      %v2031 = vld [vmem:[%s1751 + $0xf9] sm:$0xff]
      %v2032 = vld [vmem:[%s1751 + $0x109] sm:$0xff]
      %v2033 = vld [vmem:[%s1751 + $0x111] sm:$0xff]
      %v2034 = vld [vmem:[%s1751 + $0x121] sm:$0xff]
      %v2035 = vld [vmem:[%s1751 + $0x129] sm:$0xff]
      %v2036 = vld [vmem:[%s1751 + $0x139] sm:$0xff]
      %v2037 = vld [vmem:[%s1751 + $0x141] sm:$0xff]
      %v2038 = vld [vmem:[%s1751 + $0x151] sm:$0xff]
      %v2039 = vld [vmem:[%s1751 + $0x159] sm:$0xff]
      %v2040 = vld [vmem:[%s1751 + $0x169] sm:$0xff]
      %v2041 = vld [vmem:[%s1751 + $0x171] sm:$0xff]
      %v2042 = vld [vmem:[#allocation2] sm:$0xff]
      %v2043 = vld [vmem:[#allocation2 + $0x8] sm:$0xff]
      %v2044 = vld [vmem:[#allocation2 + $0x10] sm:$0xff]
      %v2045 = vld [vmem:[#allocation2 + $0x18] sm:$0xff]
      %v2046 = vld [vmem:[#allocation2 + $0x20] sm:$0xff]
      %v2047 = vld [vmem:[#allocation2 + $0x28] sm:$0xff]
      %v2048 = vld [vmem:[#allocation2 + $0x30] sm:$0xff]
      %v2049 = vld [vmem:[#allocation2 + $0x38] sm:$0xff]
      %v2050 = vld [vmem:[#allocation2 + $0x40] sm:$0xff]
      %v2051 = vld [vmem:[#allocation2 + $0x48] sm:$0xff]
      %v2052 = vld [vmem:[#allocation2 + $0x50] sm:$0xff]
      %v2053 = vld [vmem:[#allocation2 + $0x58] sm:$0xff]
      %v2054 = vld [vmem:[#allocation2 + $0x60] sm:$0xff]
      %v2055 = vld [vmem:[#allocation2 + $0x68] sm:$0xff]
      %v2056 = vld [vmem:[#allocation2 + $0x70] sm:$0xff]
      %v2057 = vld [vmem:[#allocation2 + $0x78] sm:$0xff]
      %v2058 = vld [vmem:[#allocation2 + $0x80] sm:$0xff]
      %v2059 = vld [vmem:[#allocation2 + $0x88] sm:$0xff]
      %v2060 = vld [vmem:[#allocation2 + $0x90] sm:$0xff]
      %v2061 = vld [vmem:[#allocation2 + $0x98] sm:$0xff]
      %v2062 = vld [vmem:[#allocation2 + $0xa0] sm:$0xff]
      %v2063 = vld [vmem:[#allocation2 + $0xa8] sm:$0xff]
      %v2064 = vld [vmem:[#allocation2 + $0xb0] sm:$0xff]
      %v2065 = vld [vmem:[#allocation2 + $0xb8] sm:$0xff]
      %v2066 = vld [vmem:[#allocation2 + $0xc0] sm:$0xff]
      %v2067 = vld [vmem:[#allocation2 + $0xc8] sm:$0xff]
      %v2068 = vld [vmem:[#allocation2 + $0xd0] sm:$0xff]
      %v2069 = vld [vmem:[#allocation2 + $0xd8] sm:$0xff]
      %v2070 = vld [vmem:[#allocation2 + $0xe0] sm:$0xff]
      %v2071 = vld [vmem:[#allocation2 + $0xe8] sm:$0xff]
      %v2072 = vld [vmem:[#allocation2 + $0xf0] sm:$0xff]
      %v2073 = vld [vmem:[#allocation2 + $0xf8] sm:$0xff]
      %s2074 = scalar_lea.vmem %s1, 896
      %v2075 = vld [vmem:[%s2074] sm:$0xff]
      %v2076 = vld [vmem:[%s2074 + $0x8] sm:$0xff]
      %v2077 = vld [vmem:[%s2074 + $0x10] sm:$0xff]
      %v2078 = vld [vmem:[%s2074 + $0x18] sm:$0xff]
      %v2079 = vld [vmem:[%s2074 + $0x20] sm:$0xff]
      %v2080 = vld [vmem:[%s2074 + $0x28] sm:$0xff]
      %v2081 = vld [vmem:[%s2074 + $0x30] sm:$0xff]
      %v2082 = vld [vmem:[%s2074 + $0x38] sm:$0xff]
      %v2083 = vld [vmem:[%s2074 + $0x40] sm:$0xff]
      %v2084 = vld [vmem:[%s2074 + $0x48] sm:$0xff]
      %v2085 = vld [vmem:[%s2074 + $0x50] sm:$0xff]
      %v2086 = vld [vmem:[%s2074 + $0x58] sm:$0xff]
      %v2087 = vld [vmem:[%s2074 + $0x60] sm:$0xff]
      %v2088 = vld [vmem:[%s2074 + $0x68] sm:$0xff]
      %v2089 = vld [vmem:[%s2074 + $0x70] sm:$0xff]
      %v2090 = vld [vmem:[%s2074 + $0x78] sm:$0xff]
      %2091 = vmatpush.msra.mxu0 %v2090
      %2092 = vmatpush.msra.mxu0 %v2089
      %2093 = vmatpush.msra.mxu0 %v2088
      %2094 = vmatpush.msra.mxu0 %v2087
      %2095 = vmatpush.msra.mxu0 %v2086
      %2096 = vmatpush.msra.mxu0 %v2085
      %2097 = vmatpush.msra.mxu0 %v2084
      %2098 = vmatpush.msra.mxu0 %v2083
      %2099 = vmatpush.msra.mxu0 %v2082
      %2100 = vmatpush.msra.mxu0 %v2081
      %2101 = vmatpush.msra.mxu0 %v2080
      %2102 = vmatpush.msra.mxu0 %v2079
      %2103 = vmatpush.msra.mxu0 %v2078
      %2104 = vmatpush.msra.mxu0 %v2077
      %2105 = vmatpush.msra.mxu0 %v2076
      %2106 = vmatpush.msra.mxu0 %v2075
      %2107 = vmatmul.f32.gmra.mxu0 %v2010
      %v2108 = vpop.f32.mrf.mxu0
      %v2109 = vadd.f32 0.0, %v2108
      %2110 = vmatmul.f32.gmra.mxu0 %v2011
      %v2111 = vpop.f32.mrf.mxu0
      %v2112 = vadd.f32 0.0, %v2111
      %2113 = vmatmul.f32.gmra.mxu0 %v2012
      %v2114 = vpop.f32.mrf.mxu0
      %v2115 = vadd.f32 0.0, %v2114
      %2116 = vmatmul.f32.gmra.mxu0 %v2013
      %v2117 = vpop.f32.mrf.mxu0
      %v2118 = vadd.f32 0.0, %v2117
      %2119 = vmatmul.f32.gmra.mxu0 %v2014
      %v2120 = vpop.f32.mrf.mxu0
      %v2121 = vadd.f32 0.0, %v2120
      %2122 = vmatmul.f32.gmra.mxu0 %v2015
      %v2123 = vpop.f32.mrf.mxu0
      %v2124 = vadd.f32 0.0, %v2123
      %2125 = vmatmul.f32.gmra.mxu0 %v2016
      %v2126 = vpop.f32.mrf.mxu0
      %v2127 = vadd.f32 0.0, %v2126
      %2128 = vmatmul.f32.gmra.mxu0 %v2017
      %v2129 = vpop.f32.mrf.mxu0
      %v2130 = vadd.f32 0.0, %v2129
      %2131 = vmatmul.f32.gmra.mxu0 %v2018
      %v2132 = vpop.f32.mrf.mxu0
      %v2133 = vadd.f32 0.0, %v2132
      %2134 = vmatmul.f32.gmra.mxu0 %v2019
      %v2135 = vpop.f32.mrf.mxu0
      %v2136 = vadd.f32 0.0, %v2135
      %2137 = vmatmul.f32.gmra.mxu0 %v2020
      %v2138 = vpop.f32.mrf.mxu0
      %v2139 = vadd.f32 0.0, %v2138
      %2140 = vmatmul.f32.gmra.mxu0 %v2021
      %v2141 = vpop.f32.mrf.mxu0
      %v2142 = vadd.f32 0.0, %v2141
      %2143 = vmatmul.f32.gmra.mxu0 %v2022
      %v2144 = vpop.f32.mrf.mxu0
      %v2145 = vadd.f32 0.0, %v2144
      %2146 = vmatmul.f32.gmra.mxu0 %v2023
      %v2147 = vpop.f32.mrf.mxu0
      %v2148 = vadd.f32 0.0, %v2147
      %2149 = vmatmul.f32.gmra.mxu0 %v2024
      %v2150 = vpop.f32.mrf.mxu0
      %v2151 = vadd.f32 0.0, %v2150
      %2152 = vmatmul.f32.gmra.mxu0 %v2025
      %v2153 = vpop.f32.mrf.mxu0
      %v2154 = vadd.f32 0.0, %v2153
      %2155 = vmatmul.f32.gmra.mxu0 %v2026
      %v2156 = vpop.f32.mrf.mxu0
      %v2157 = vadd.f32 0.0, %v2156
      %2158 = vmatmul.f32.gmra.mxu0 %v2027
      %v2159 = vpop.f32.mrf.mxu0
      %v2160 = vadd.f32 0.0, %v2159
      %2161 = vmatmul.f32.gmra.mxu0 %v2028
      %v2162 = vpop.f32.mrf.mxu0
      %v2163 = vadd.f32 0.0, %v2162
      %2164 = vmatmul.f32.gmra.mxu0 %v2029
      %v2165 = vpop.f32.mrf.mxu0
      %v2166 = vadd.f32 0.0, %v2165
      %2167 = vmatmul.f32.gmra.mxu0 %v2030
      %v2168 = vpop.f32.mrf.mxu0
      %v2169 = vadd.f32 0.0, %v2168
      %2170 = vmatmul.f32.gmra.mxu0 %v2031
      %v2171 = vpop.f32.mrf.mxu0
      %v2172 = vadd.f32 0.0, %v2171
      %2173 = vmatmul.f32.gmra.mxu0 %v2032
      %v2174 = vpop.f32.mrf.mxu0
      %v2175 = vadd.f32 0.0, %v2174
      %2176 = vmatmul.f32.gmra.mxu0 %v2033
      %v2177 = vpop.f32.mrf.mxu0
      %v2178 = vadd.f32 0.0, %v2177
      %2179 = vmatmul.f32.gmra.mxu0 %v2034
      %v2180 = vpop.f32.mrf.mxu0
      %v2181 = vadd.f32 0.0, %v2180
      %2182 = vmatmul.f32.gmra.mxu0 %v2035
      %v2183 = vpop.f32.mrf.mxu0
      %v2184 = vadd.f32 0.0, %v2183
      %2185 = vmatmul.f32.gmra.mxu0 %v2036
      %v2186 = vpop.f32.mrf.mxu0
      %v2187 = vadd.f32 0.0, %v2186
      %2188 = vmatmul.f32.gmra.mxu0 %v2037
      %v2189 = vpop.f32.mrf.mxu0
      %v2190 = vadd.f32 0.0, %v2189
      %2191 = vmatmul.f32.gmra.mxu0 %v2038
      %v2192 = vpop.f32.mrf.mxu0
      %v2193 = vadd.f32 0.0, %v2192
      %2194 = vmatmul.f32.gmra.mxu0 %v2039
      %v2195 = vpop.f32.mrf.mxu0
      %v2196 = vadd.f32 0.0, %v2195
      %2197 = vmatmul.f32.gmra.mxu0 %v2040
      %v2198 = vpop.f32.mrf.mxu0
      %v2199 = vadd.f32 0.0, %v2198
      %2200 = vmatmul.f32.gmra.mxu0 %v2041
      %v2201 = vpop.f32.mrf.mxu0
      %v2202 = vadd.f32 0.0, %v2201
      %2203 = vdwg.mxu0
      %v2204 = vadd.f32 %v2042, %v2109
      %v2205 = vadd.f32 %v2043, %v2112
      %v2206 = vadd.f32 %v2044, %v2115
      %v2207 = vadd.f32 %v2045, %v2118
      %v2208 = vadd.f32 %v2046, %v2121
      %v2209 = vadd.f32 %v2047, %v2124
      %v2210 = vadd.f32 %v2048, %v2127
      %v2211 = vadd.f32 %v2049, %v2130
      %v2212 = vadd.f32 %v2050, %v2133
      %v2213 = vadd.f32 %v2051, %v2136
      %v2214 = vadd.f32 %v2052, %v2139
      %v2215 = vadd.f32 %v2053, %v2142
      %v2216 = vadd.f32 %v2054, %v2145
      %v2217 = vadd.f32 %v2055, %v2148
      %v2218 = vadd.f32 %v2056, %v2151
      %v2219 = vadd.f32 %v2057, %v2154
      %v2220 = vadd.f32 %v2058, %v2157
      %v2221 = vadd.f32 %v2059, %v2160
      %v2222 = vadd.f32 %v2060, %v2163
      %v2223 = vadd.f32 %v2061, %v2166
      %v2224 = vadd.f32 %v2062, %v2169
      %v2225 = vadd.f32 %v2063, %v2172
      %v2226 = vadd.f32 %v2064, %v2175
      %v2227 = vadd.f32 %v2065, %v2178
      %v2228 = vadd.f32 %v2066, %v2181
      %v2229 = vadd.f32 %v2067, %v2184
      %v2230 = vadd.f32 %v2068, %v2187
      %v2231 = vadd.f32 %v2069, %v2190
      %v2232 = vadd.f32 %v2070, %v2193
      %v2233 = vadd.f32 %v2071, %v2196
      %v2234 = vadd.f32 %v2072, %v2199
      %v2235 = vadd.f32 %v2073, %v2202
      %2236 = vst [vmem:[#allocation2] sm:$0xff] %v2204
      %2237 = vst [vmem:[#allocation2 + $0x8] sm:$0xff] %v2205
      %2238 = vst [vmem:[#allocation2 + $0x10] sm:$0xff] %v2206
      %2239 = vst [vmem:[#allocation2 + $0x18] sm:$0xff] %v2207
      %2240 = vst [vmem:[#allocation2 + $0x20] sm:$0xff] %v2208
      %2241 = vst [vmem:[#allocation2 + $0x28] sm:$0xff] %v2209
      %2242 = vst [vmem:[#allocation2 + $0x30] sm:$0xff] %v2210
      %2243 = vst [vmem:[#allocation2 + $0x38] sm:$0xff] %v2211
      %2244 = vst [vmem:[#allocation2 + $0x40] sm:$0xff] %v2212
      %2245 = vst [vmem:[#allocation2 + $0x48] sm:$0xff] %v2213
      %2246 = vst [vmem:[#allocation2 + $0x50] sm:$0xff] %v2214
      %2247 = vst [vmem:[#allocation2 + $0x58] sm:$0xff] %v2215
      %2248 = vst [vmem:[#allocation2 + $0x60] sm:$0xff] %v2216
      %2249 = vst [vmem:[#allocation2 + $0x68] sm:$0xff] %v2217
      %2250 = vst [vmem:[#allocation2 + $0x70] sm:$0xff] %v2218
      %2251 = vst [vmem:[#allocation2 + $0x78] sm:$0xff] %v2219
      %2252 = vst [vmem:[#allocation2 + $0x80] sm:$0xff] %v2220
      %2253 = vst [vmem:[#allocation2 + $0x88] sm:$0xff] %v2221
      %2254 = vst [vmem:[#allocation2 + $0x90] sm:$0xff] %v2222
      %2255 = vst [vmem:[#allocation2 + $0x98] sm:$0xff] %v2223
      %2256 = vst [vmem:[#allocation2 + $0xa0] sm:$0xff] %v2224
      %2257 = vst [vmem:[#allocation2 + $0xa8] sm:$0xff] %v2225
      %2258 = vst [vmem:[#allocation2 + $0xb0] sm:$0xff] %v2226
      %2259 = vst [vmem:[#allocation2 + $0xb8] sm:$0xff] %v2227
      %2260 = vst [vmem:[#allocation2 + $0xc0] sm:$0xff] %v2228
      %2261 = vst [vmem:[#allocation2 + $0xc8] sm:$0xff] %v2229
      %2262 = vst [vmem:[#allocation2 + $0xd0] sm:$0xff] %v2230
      %2263 = vst [vmem:[#allocation2 + $0xd8] sm:$0xff] %v2231
      %2264 = vst [vmem:[#allocation2 + $0xe0] sm:$0xff] %v2232
      %2265 = vst [vmem:[#allocation2 + $0xe8] sm:$0xff] %v2233
      %2266 = vst [vmem:[#allocation2 + $0xf0] sm:$0xff] %v2234
      %2267 = vst [vmem:[#allocation2 + $0xf8] sm:$0xff] %v2235
      %v2268 = vld [vmem:[%s1751 + $0x2] sm:$0xff]
      %v2269 = vld [vmem:[%s1751 + $0xa] sm:$0xff]
      %v2270 = vld [vmem:[%s1751 + $0x1a] sm:$0xff]
      %v2271 = vld [vmem:[%s1751 + $0x22] sm:$0xff]
      %v2272 = vld [vmem:[%s1751 + $0x32] sm:$0xff]
      %v2273 = vld [vmem:[%s1751 + $0x3a] sm:$0xff]
      %v2274 = vld [vmem:[%s1751 + $0x4a] sm:$0xff]
      %v2275 = vld [vmem:[%s1751 + $0x52] sm:$0xff]
      %v2276 = vld [vmem:[%s1751 + $0x62] sm:$0xff]
      %v2277 = vld [vmem:[%s1751 + $0x6a] sm:$0xff]
      %v2278 = vld [vmem:[%s1751 + $0x7a] sm:$0xff]
      %v2279 = vld [vmem:[%s1751 + $0x82] sm:$0xff]
      %v2280 = vld [vmem:[%s1751 + $0x92] sm:$0xff]
      %v2281 = vld [vmem:[%s1751 + $0x9a] sm:$0xff]
      %v2282 = vld [vmem:[%s1751 + $0xaa] sm:$0xff]
      %v2283 = vld [vmem:[%s1751 + $0xb2] sm:$0xff]
      %v2284 = vld [vmem:[%s1751 + $0xc2] sm:$0xff]
      %v2285 = vld [vmem:[%s1751 + $0xca] sm:$0xff]
      %v2286 = vld [vmem:[%s1751 + $0xda] sm:$0xff]
      %v2287 = vld [vmem:[%s1751 + $0xe2] sm:$0xff]
      %v2288 = vld [vmem:[%s1751 + $0xf2] sm:$0xff]
      %v2289 = vld [vmem:[%s1751 + $0xfa] sm:$0xff]
      %v2290 = vld [vmem:[%s1751 + $0x10a] sm:$0xff]
      %v2291 = vld [vmem:[%s1751 + $0x112] sm:$0xff]
      %v2292 = vld [vmem:[%s1751 + $0x122] sm:$0xff]
      %v2293 = vld [vmem:[%s1751 + $0x12a] sm:$0xff]
      %v2294 = vld [vmem:[%s1751 + $0x13a] sm:$0xff]
      %v2295 = vld [vmem:[%s1751 + $0x142] sm:$0xff]
      %v2296 = vld [vmem:[%s1751 + $0x152] sm:$0xff]
      %v2297 = vld [vmem:[%s1751 + $0x15a] sm:$0xff]
      %v2298 = vld [vmem:[%s1751 + $0x16a] sm:$0xff]
      %v2299 = vld [vmem:[%s1751 + $0x172] sm:$0xff]
      %v2300 = vld [vmem:[#allocation2] sm:$0xff]
      %v2301 = vld [vmem:[#allocation2 + $0x8] sm:$0xff]
      %v2302 = vld [vmem:[#allocation2 + $0x10] sm:$0xff]
      %v2303 = vld [vmem:[#allocation2 + $0x18] sm:$0xff]
      %v2304 = vld [vmem:[#allocation2 + $0x20] sm:$0xff]
      %v2305 = vld [vmem:[#allocation2 + $0x28] sm:$0xff]
      %v2306 = vld [vmem:[#allocation2 + $0x30] sm:$0xff]
      %v2307 = vld [vmem:[#allocation2 + $0x38] sm:$0xff]
      %v2308 = vld [vmem:[#allocation2 + $0x40] sm:$0xff]
      %v2309 = vld [vmem:[#allocation2 + $0x48] sm:$0xff]
      %v2310 = vld [vmem:[#allocation2 + $0x50] sm:$0xff]
      %v2311 = vld [vmem:[#allocation2 + $0x58] sm:$0xff]
      %v2312 = vld [vmem:[#allocation2 + $0x60] sm:$0xff]
      %v2313 = vld [vmem:[#allocation2 + $0x68] sm:$0xff]
      %v2314 = vld [vmem:[#allocation2 + $0x70] sm:$0xff]
      %v2315 = vld [vmem:[#allocation2 + $0x78] sm:$0xff]
      %v2316 = vld [vmem:[#allocation2 + $0x80] sm:$0xff]
      %v2317 = vld [vmem:[#allocation2 + $0x88] sm:$0xff]
      %v2318 = vld [vmem:[#allocation2 + $0x90] sm:$0xff]
      %v2319 = vld [vmem:[#allocation2 + $0x98] sm:$0xff]
      %v2320 = vld [vmem:[#allocation2 + $0xa0] sm:$0xff]
      %v2321 = vld [vmem:[#allocation2 + $0xa8] sm:$0xff]
      %v2322 = vld [vmem:[#allocation2 + $0xb0] sm:$0xff]
      %v2323 = vld [vmem:[#allocation2 + $0xb8] sm:$0xff]
      %v2324 = vld [vmem:[#allocation2 + $0xc0] sm:$0xff]
      %v2325 = vld [vmem:[#allocation2 + $0xc8] sm:$0xff]
      %v2326 = vld [vmem:[#allocation2 + $0xd0] sm:$0xff]
      %v2327 = vld [vmem:[#allocation2 + $0xd8] sm:$0xff]
      %v2328 = vld [vmem:[#allocation2 + $0xe0] sm:$0xff]
      %v2329 = vld [vmem:[#allocation2 + $0xe8] sm:$0xff]
      %v2330 = vld [vmem:[#allocation2 + $0xf0] sm:$0xff]
      %v2331 = vld [vmem:[#allocation2 + $0xf8] sm:$0xff]
      %s2332 = scalar_lea.vmem %s1, 1024
      %v2333 = vld [vmem:[%s2332] sm:$0xff]
      %v2334 = vld [vmem:[%s2332 + $0x8] sm:$0xff]
      %v2335 = vld [vmem:[%s2332 + $0x10] sm:$0xff]
      %v2336 = vld [vmem:[%s2332 + $0x18] sm:$0xff]
      %v2337 = vld [vmem:[%s2332 + $0x20] sm:$0xff]
      %v2338 = vld [vmem:[%s2332 + $0x28] sm:$0xff]
      %v2339 = vld [vmem:[%s2332 + $0x30] sm:$0xff]
      %v2340 = vld [vmem:[%s2332 + $0x38] sm:$0xff]
      %v2341 = vld [vmem:[%s2332 + $0x40] sm:$0xff]
      %v2342 = vld [vmem:[%s2332 + $0x48] sm:$0xff]
      %v2343 = vld [vmem:[%s2332 + $0x50] sm:$0xff]
      %v2344 = vld [vmem:[%s2332 + $0x58] sm:$0xff]
      %v2345 = vld [vmem:[%s2332 + $0x60] sm:$0xff]
      %v2346 = vld [vmem:[%s2332 + $0x68] sm:$0xff]
      %v2347 = vld [vmem:[%s2332 + $0x70] sm:$0xff]
      %v2348 = vld [vmem:[%s2332 + $0x78] sm:$0xff]
      %2349 = vmatpush.msra.mxu0 %v2348
      %2350 = vmatpush.msra.mxu0 %v2347
      %2351 = vmatpush.msra.mxu0 %v2346
      %2352 = vmatpush.msra.mxu0 %v2345
      %2353 = vmatpush.msra.mxu0 %v2344
      %2354 = vmatpush.msra.mxu0 %v2343
      %2355 = vmatpush.msra.mxu0 %v2342
      %2356 = vmatpush.msra.mxu0 %v2341
      %2357 = vmatpush.msra.mxu0 %v2340
      %2358 = vmatpush.msra.mxu0 %v2339
      %2359 = vmatpush.msra.mxu0 %v2338
      %2360 = vmatpush.msra.mxu0 %v2337
      %2361 = vmatpush.msra.mxu0 %v2336
      %2362 = vmatpush.msra.mxu0 %v2335
      %2363 = vmatpush.msra.mxu0 %v2334
      %2364 = vmatpush.msra.mxu0 %v2333
      %2365 = vmatmul.f32.gmra.mxu0 %v2268
      %v2366 = vpop.f32.mrf.mxu0
      %v2367 = vadd.f32 0.0, %v2366
      %2368 = vmatmul.f32.gmra.mxu0 %v2269
      %v2369 = vpop.f32.mrf.mxu0
      %v2370 = vadd.f32 0.0, %v2369
      %2371 = vmatmul.f32.gmra.mxu0 %v2270
      %v2372 = vpop.f32.mrf.mxu0
      %v2373 = vadd.f32 0.0, %v2372
      %2374 = vmatmul.f32.gmra.mxu0 %v2271
      %v2375 = vpop.f32.mrf.mxu0
      %v2376 = vadd.f32 0.0, %v2375
      %2377 = vmatmul.f32.gmra.mxu0 %v2272
      %v2378 = vpop.f32.mrf.mxu0
      %v2379 = vadd.f32 0.0, %v2378
      %2380 = vmatmul.f32.gmra.mxu0 %v2273
      %v2381 = vpop.f32.mrf.mxu0
      %v2382 = vadd.f32 0.0, %v2381
      %2383 = vmatmul.f32.gmra.mxu0 %v2274
      %v2384 = vpop.f32.mrf.mxu0
      %v2385 = vadd.f32 0.0, %v2384
      %2386 = vmatmul.f32.gmra.mxu0 %v2275
      %v2387 = vpop.f32.mrf.mxu0
      %v2388 = vadd.f32 0.0, %v2387
      %2389 = vmatmul.f32.gmra.mxu0 %v2276
      %v2390 = vpop.f32.mrf.mxu0
      %v2391 = vadd.f32 0.0, %v2390
      %2392 = vmatmul.f32.gmra.mxu0 %v2277
      %v2393 = vpop.f32.mrf.mxu0
      %v2394 = vadd.f32 0.0, %v2393
      %2395 = vmatmul.f32.gmra.mxu0 %v2278
      %v2396 = vpop.f32.mrf.mxu0
      %v2397 = vadd.f32 0.0, %v2396
      %2398 = vmatmul.f32.gmra.mxu0 %v2279
      %v2399 = vpop.f32.mrf.mxu0
      %v2400 = vadd.f32 0.0, %v2399
      %2401 = vmatmul.f32.gmra.mxu0 %v2280
      %v2402 = vpop.f32.mrf.mxu0
      %v2403 = vadd.f32 0.0, %v2402
      %2404 = vmatmul.f32.gmra.mxu0 %v2281
      %v2405 = vpop.f32.mrf.mxu0
      %v2406 = vadd.f32 0.0, %v2405
      %2407 = vmatmul.f32.gmra.mxu0 %v2282
      %v2408 = vpop.f32.mrf.mxu0
      %v2409 = vadd.f32 0.0, %v2408
      %2410 = vmatmul.f32.gmra.mxu0 %v2283
      %v2411 = vpop.f32.mrf.mxu0
      %v2412 = vadd.f32 0.0, %v2411
      %2413 = vmatmul.f32.gmra.mxu0 %v2284
      %v2414 = vpop.f32.mrf.mxu0
      %v2415 = vadd.f32 0.0, %v2414
      %2416 = vmatmul.f32.gmra.mxu0 %v2285
      %v2417 = vpop.f32.mrf.mxu0
      %v2418 = vadd.f32 0.0, %v2417
      %2419 = vmatmul.f32.gmra.mxu0 %v2286
      %v2420 = vpop.f32.mrf.mxu0
      %v2421 = vadd.f32 0.0, %v2420
      %2422 = vmatmul.f32.gmra.mxu0 %v2287
      %v2423 = vpop.f32.mrf.mxu0
      %v2424 = vadd.f32 0.0, %v2423
      %2425 = vmatmul.f32.gmra.mxu0 %v2288
      %v2426 = vpop.f32.mrf.mxu0
      %v2427 = vadd.f32 0.0, %v2426
      %2428 = vmatmul.f32.gmra.mxu0 %v2289
      %v2429 = vpop.f32.mrf.mxu0
      %v2430 = vadd.f32 0.0, %v2429
      %2431 = vmatmul.f32.gmra.mxu0 %v2290
      %v2432 = vpop.f32.mrf.mxu0
      %v2433 = vadd.f32 0.0, %v2432
      %2434 = vmatmul.f32.gmra.mxu0 %v2291
      %v2435 = vpop.f32.mrf.mxu0
      %v2436 = vadd.f32 0.0, %v2435
      %2437 = vmatmul.f32.gmra.mxu0 %v2292
      %v2438 = vpop.f32.mrf.mxu0
      %v2439 = vadd.f32 0.0, %v2438
      %2440 = vmatmul.f32.gmra.mxu0 %v2293
      %v2441 = vpop.f32.mrf.mxu0
      %v2442 = vadd.f32 0.0, %v2441
      %2443 = vmatmul.f32.gmra.mxu0 %v2294
      %v2444 = vpop.f32.mrf.mxu0
      %v2445 = vadd.f32 0.0, %v2444
      %2446 = vmatmul.f32.gmra.mxu0 %v2295
      %v2447 = vpop.f32.mrf.mxu0
      %v2448 = vadd.f32 0.0, %v2447
      %2449 = vmatmul.f32.gmra.mxu0 %v2296
      %v2450 = vpop.f32.mrf.mxu0
      %v2451 = vadd.f32 0.0, %v2450
      %2452 = vmatmul.f32.gmra.mxu0 %v2297
      %v2453 = vpop.f32.mrf.mxu0
      %v2454 = vadd.f32 0.0, %v2453
      %2455 = vmatmul.f32.gmra.mxu0 %v2298
      %v2456 = vpop.f32.mrf.mxu0
      %v2457 = vadd.f32 0.0, %v2456
      %2458 = vmatmul.f32.gmra.mxu0 %v2299
      %v2459 = vpop.f32.mrf.mxu0
      %v2460 = vadd.f32 0.0, %v2459
      %2461 = vdwg.mxu0
      %v2462 = vadd.f32 %v2300, %v2367
      %v2463 = vadd.f32 %v2301, %v2370
      %v2464 = vadd.f32 %v2302, %v2373
      %v2465 = vadd.f32 %v2303, %v2376
      %v2466 = vadd.f32 %v2304, %v2379
      %v2467 = vadd.f32 %v2305, %v2382
      %v2468 = vadd.f32 %v2306, %v2385
      %v2469 = vadd.f32 %v2307, %v2388
      %v2470 = vadd.f32 %v2308, %v2391
      %v2471 = vadd.f32 %v2309, %v2394
      %v2472 = vadd.f32 %v2310, %v2397
      %v2473 = vadd.f32 %v2311, %v2400
      %v2474 = vadd.f32 %v2312, %v2403
      %v2475 = vadd.f32 %v2313, %v2406
      %v2476 = vadd.f32 %v2314, %v2409
      %v2477 = vadd.f32 %v2315, %v2412
      %v2478 = vadd.f32 %v2316, %v2415
      %v2479 = vadd.f32 %v2317, %v2418
      %v2480 = vadd.f32 %v2318, %v2421
      %v2481 = vadd.f32 %v2319, %v2424
      %v2482 = vadd.f32 %v2320, %v2427
      %v2483 = vadd.f32 %v2321, %v2430
      %v2484 = vadd.f32 %v2322, %v2433
      %v2485 = vadd.f32 %v2323, %v2436
      %v2486 = vadd.f32 %v2324, %v2439
      %v2487 = vadd.f32 %v2325, %v2442
      %v2488 = vadd.f32 %v2326, %v2445
      %v2489 = vadd.f32 %v2327, %v2448
      %v2490 = vadd.f32 %v2328, %v2451
      %v2491 = vadd.f32 %v2329, %v2454
      %v2492 = vadd.f32 %v2330, %v2457
      %v2493 = vadd.f32 %v2331, %v2460
      %2494 = vst [vmem:[#allocation2] sm:$0xff] %v2462
      %2495 = vst [vmem:[#allocation2 + $0x8] sm:$0xff] %v2463
      %2496 = vst [vmem:[#allocation2 + $0x10] sm:$0xff] %v2464
      %2497 = vst [vmem:[#allocation2 + $0x18] sm:$0xff] %v2465
      %2498 = vst [vmem:[#allocation2 + $0x20] sm:$0xff] %v2466
      %2499 = vst [vmem:[#allocation2 + $0x28] sm:$0xff] %v2467
      %2500 = vst [vmem:[#allocation2 + $0x30] sm:$0xff] %v2468
      %2501 = vst [vmem:[#allocation2 + $0x38] sm:$0xff] %v2469
      %2502 = vst [vmem:[#allocation2 + $0x40] sm:$0xff] %v2470
      %2503 = vst [vmem:[#allocation2 + $0x48] sm:$0xff] %v2471
      %2504 = vst [vmem:[#allocation2 + $0x50] sm:$0xff] %v2472
      %2505 = vst [vmem:[#allocation2 + $0x58] sm:$0xff] %v2473
      %2506 = vst [vmem:[#allocation2 + $0x60] sm:$0xff] %v2474
      %2507 = vst [vmem:[#allocation2 + $0x68] sm:$0xff] %v2475
      %2508 = vst [vmem:[#allocation2 + $0x70] sm:$0xff] %v2476
      %2509 = vst [vmem:[#allocation2 + $0x78] sm:$0xff] %v2477
      %2510 = vst [vmem:[#allocation2 + $0x80] sm:$0xff] %v2478
      %2511 = vst [vmem:[#allocation2 + $0x88] sm:$0xff] %v2479
      %2512 = vst [vmem:[#allocation2 + $0x90] sm:$0xff] %v2480
      %2513 = vst [vmem:[#allocation2 + $0x98] sm:$0xff] %v2481
      %2514 = vst [vmem:[#allocation2 + $0xa0] sm:$0xff] %v2482
      %2515 = vst [vmem:[#allocation2 + $0xa8] sm:$0xff] %v2483
      %2516 = vst [vmem:[#allocation2 + $0xb0] sm:$0xff] %v2484
      %2517 = vst [vmem:[#allocation2 + $0xb8] sm:$0xff] %v2485
      %2518 = vst [vmem:[#allocation2 + $0xc0] sm:$0xff] %v2486
      %2519 = vst [vmem:[#allocation2 + $0xc8] sm:$0xff] %v2487
      %2520 = vst [vmem:[#allocation2 + $0xd0] sm:$0xff] %v2488
      %2521 = vst [vmem:[#allocation2 + $0xd8] sm:$0xff] %v2489
      %2522 = vst [vmem:[#allocation2 + $0xe0] sm:$0xff] %v2490
      %2523 = vst [vmem:[#allocation2 + $0xe8] sm:$0xff] %v2491
      %2524 = vst [vmem:[#allocation2 + $0xf0] sm:$0xff] %v2492
      %2525 = vst [vmem:[#allocation2 + $0xf8] sm:$0xff] %v2493
      %v2526 = vld [vmem:[#allocation2] sm:$0xff]
      %v2527 = vld [vmem:[#allocation2 + $0x8] sm:$0xff]
      %v2528 = vld [vmem:[#allocation2 + $0x10] sm:$0xff]
      %v2529 = vld [vmem:[#allocation2 + $0x18] sm:$0xff]
      %v2530 = vld [vmem:[#allocation2 + $0x20] sm:$0xff]
      %v2531 = vld [vmem:[#allocation2 + $0x28] sm:$0xff]
      %v2532 = vld [vmem:[#allocation2 + $0x30] sm:$0xff]
      %v2533 = vld [vmem:[#allocation2 + $0x38] sm:$0xff]
      %v2534 = vld [vmem:[#allocation2 + $0x40] sm:$0xff]
      %v2535 = vld [vmem:[#allocation2 + $0x48] sm:$0xff]
      %v2536 = vld [vmem:[#allocation2 + $0x50] sm:$0xff]
      %v2537 = vld [vmem:[#allocation2 + $0x58] sm:$0xff]
      %v2538 = vld [vmem:[#allocation2 + $0x60] sm:$0xff]
      %v2539 = vld [vmem:[#allocation2 + $0x68] sm:$0xff]
      %v2540 = vld [vmem:[#allocation2 + $0x70] sm:$0xff]
      %v2541 = vld [vmem:[#allocation2 + $0x78] sm:$0xff]
      %v2542 = vld [vmem:[#allocation2 + $0x80] sm:$0xff]
      %v2543 = vld [vmem:[#allocation2 + $0x88] sm:$0xff]
      %v2544 = vld [vmem:[#allocation2 + $0x90] sm:$0xff]
      %v2545 = vld [vmem:[#allocation2 + $0x98] sm:$0xff]
      %v2546 = vld [vmem:[#allocation2 + $0xa0] sm:$0xff]
      %v2547 = vld [vmem:[#allocation2 + $0xa8] sm:$0xff]
      %v2548 = vld [vmem:[#allocation2 + $0xb0] sm:$0xff]
      %v2549 = vld [vmem:[#allocation2 + $0xb8] sm:$0xff]
      %v2550 = vld [vmem:[#allocation2 + $0xc0] sm:$0xff]
      %v2551 = vld [vmem:[#allocation2 + $0xc8] sm:$0xff]
      %v2552 = vld [vmem:[#allocation2 + $0xd0] sm:$0xff]
      %v2553 = vld [vmem:[#allocation2 + $0xd8] sm:$0xff]
      %v2554 = vld [vmem:[#allocation2 + $0xe0] sm:$0xff]
      %v2555 = vld [vmem:[#allocation2 + $0xe8] sm:$0xff]
      %v2556 = vld [vmem:[#allocation2 + $0xf0] sm:$0xff]
      %v2557 = vld [vmem:[#allocation2 + $0xf8] sm:$0xff]
      %v2558 = vld [vmem:[%s2] sm:$0x1]
      %v2560 = vperm.slane %v2558, 0
      %v2562 = vadd.f32 %v2526, %v2560
      %v2563 = vadd.f32 %v2527, %v2560
      %v2564 = vadd.f32 %v2528, %v2560
      %v2565 = vadd.f32 %v2529, %v2560
      %v2566 = vadd.f32 %v2530, %v2560
      %v2567 = vadd.f32 %v2531, %v2560
      %v2568 = vadd.f32 %v2532, %v2560
      %v2569 = vadd.f32 %v2533, %v2560
      %v2570 = vadd.f32 %v2534, %v2560
      %v2571 = vadd.f32 %v2535, %v2560
      %v2572 = vadd.f32 %v2536, %v2560
      %v2573 = vadd.f32 %v2537, %v2560
      %v2574 = vadd.f32 %v2538, %v2560
      %v2575 = vadd.f32 %v2539, %v2560
      %v2576 = vadd.f32 %v2540, %v2560
      %v2577 = vadd.f32 %v2541, %v2560
      %v2578 = vadd.f32 %v2542, %v2560
      %v2579 = vadd.f32 %v2543, %v2560
      %v2580 = vadd.f32 %v2544, %v2560
      %v2581 = vadd.f32 %v2545, %v2560
      %v2582 = vadd.f32 %v2546, %v2560
      %v2583 = vadd.f32 %v2547, %v2560
      %v2584 = vadd.f32 %v2548, %v2560
      %v2585 = vadd.f32 %v2549, %v2560
      %v2586 = vadd.f32 %v2550, %v2560
      %v2587 = vadd.f32 %v2551, %v2560
      %v2588 = vadd.f32 %v2552, %v2560
      %v2589 = vadd.f32 %v2553, %v2560
      %v2590 = vadd.f32 %v2554, %v2560
      %v2591 = vadd.f32 %v2555, %v2560
      %v2592 = vadd.f32 %v2556, %v2560
      %v2593 = vadd.f32 %v2557, %v2560
      %v2594 = vmax.f32 %v2562, 0.0
      %v2595 = vmax.f32 %v2563, 0.0
      %v2596 = vmax.f32 %v2564, 0.0
      %v2597 = vmax.f32 %v2565, 0.0
      %v2598 = vmax.f32 %v2566, 0.0
      %v2599 = vmax.f32 %v2567, 0.0
      %v2600 = vmax.f32 %v2568, 0.0
      %v2601 = vmax.f32 %v2569, 0.0
      %v2602 = vmax.f32 %v2570, 0.0
      %v2603 = vmax.f32 %v2571, 0.0
      %v2604 = vmax.f32 %v2572, 0.0
      %v2605 = vmax.f32 %v2573, 0.0
      %v2606 = vmax.f32 %v2574, 0.0
      %v2607 = vmax.f32 %v2575, 0.0
      %v2608 = vmax.f32 %v2576, 0.0
      %v2609 = vmax.f32 %v2577, 0.0
      %v2610 = vmax.f32 %v2578, 0.0
      %v2611 = vmax.f32 %v2579, 0.0
      %v2612 = vmax.f32 %v2580, 0.0
      %v2613 = vmax.f32 %v2581, 0.0
      %v2614 = vmax.f32 %v2582, 0.0
      %v2615 = vmax.f32 %v2583, 0.0
      %v2616 = vmax.f32 %v2584, 0.0
      %v2617 = vmax.f32 %v2585, 0.0
      %v2618 = vmax.f32 %v2586, 0.0
      %v2619 = vmax.f32 %v2587, 0.0
      %v2620 = vmax.f32 %v2588, 0.0
      %v2621 = vmax.f32 %v2589, 0.0
      %v2622 = vmax.f32 %v2590, 0.0
      %v2623 = vmax.f32 %v2591, 0.0
      %v2624 = vmax.f32 %v2592, 0.0
      %v2625 = vmax.f32 %v2593, 0.0
      %2626 = vst [vmem:[%s170] sm:$0xff] %v2594
      %2627 = vst [vmem:[%s170 + $0x8] sm:$0xff] %v2595
      %2628 = vst [vmem:[%s170 + $0x10] sm:$0xff] %v2596
      %2629 = vst [vmem:[%s170 + $0x18] sm:$0xff] %v2597
      %2630 = vst [vmem:[%s170 + $0x20] sm:$0xff] %v2598
      %2631 = vst [vmem:[%s170 + $0x28] sm:$0xff] %v2599
      %2632 = vst [vmem:[%s170 + $0x30] sm:$0xff] %v2600
      %2633 = vst [vmem:[%s170 + $0x38] sm:$0xff] %v2601
      %2634 = vst [vmem:[%s170 + $0x40] sm:$0xff] %v2602
      %2635 = vst [vmem:[%s170 + $0x48] sm:$0xff] %v2603
      %2636 = vst [vmem:[%s170 + $0x50] sm:$0xff] %v2604
      %2637 = vst [vmem:[%s170 + $0x58] sm:$0xff] %v2605
      %2638 = vst [vmem:[%s170 + $0x60] sm:$0xff] %v2606
      %2639 = vst [vmem:[%s170 + $0x68] sm:$0xff] %v2607
      %2640 = vst [vmem:[%s170 + $0x70] sm:$0xff] %v2608
      %2641 = vst [vmem:[%s170 + $0x78] sm:$0xff] %v2609
      %2642 = vst [vmem:[%s170 + $0x80] sm:$0xff] %v2610
      %2643 = vst [vmem:[%s170 + $0x88] sm:$0xff] %v2611
      %2644 = vst [vmem:[%s170 + $0x90] sm:$0xff] %v2612
      %2645 = vst [vmem:[%s170 + $0x98] sm:$0xff] %v2613
      %2646 = vst [vmem:[%s170 + $0xa0] sm:$0xff] %v2614
      %2647 = vst [vmem:[%s170 + $0xa8] sm:$0xff] %v2615
      %2648 = vst [vmem:[%s170 + $0xb0] sm:$0xff] %v2616
      %2649 = vst [vmem:[%s170 + $0xb8] sm:$0xff] %v2617
      %2650 = vst [vmem:[%s170 + $0xc0] sm:$0xff] %v2618
      %2651 = vst [vmem:[%s170 + $0xc8] sm:$0xff] %v2619
      %2652 = vst [vmem:[%s170 + $0xd0] sm:$0xff] %v2620
      %2653 = vst [vmem:[%s170 + $0xd8] sm:$0xff] %v2621
      %2654 = vst [vmem:[%s170 + $0xe0] sm:$0xff] %v2622
      %2655 = vst [vmem:[%s170 + $0xe8] sm:$0xff] %v2623
      %2656 = vst [vmem:[%s170 + $0xf0] sm:$0xff] %v2624
      %2657 = vst [vmem:[%s170 + $0xf8] sm:$0xff] %v2625
      %p2658 = scmp.lt.s32.totalorder %s14, 1
      %s2659 = scalar_select %p2658, %s14, 1
      %s2660 = smul.addr %s2659, 32
      %s2661 = smul.addr %s2660, 8
      %s2662 = scalar_lea.vmem %s3, %s2661
      // Predicated region
      $region33: #{_spos_forward_jit.2} parent=31 // pred_check
        %p2663 = pneg %p100
      $region34: #{_spos_forward_jit.2} parent=31 // pred_check_branch
        %2665 = sbr.rel (%p2663) target = $region36
      $region35: #{_spos_forward_jit.2} parent=31 // pred_region
        _
      $region36: #{_spos_forward_jit.2} parent=31 // pred_fallthru
        _
    $region32: #{_spos_forward_jit.2} parent=5 // pred_fallthru
      _
    %p2666 = scmp.le.s32.totalorder 2, %s9
    // Predicated region
    $region37: #{_spos_forward_jit.2} parent=5 // pred_check
      %p2667 = pneg %p2666
    $region38: #{_spos_forward_jit.2} parent=5 // pred_check_branch
      %2669 = sbr.rel (%p2667) target = $region40
    $region39: #{_spos_forward_jit.2} parent=5 // pred_region
      %s2670 = ssub.s32 %s9, 2
      // Predicated region
      $region41: #{_spos_forward_jit.2} parent=39 // pred_check
        %p2671 = pneg %p106
      $region42: #{_spos_forward_jit.2} parent=39 // pred_check_branch
        %2673 = sbr.rel (%p2671) target = $region44
      $region43: #{_spos_forward_jit.2} parent=39 // pred_region
        %p2674 = scmp.lt.s32.totalorder %s15, 1
        %s2675 = scalar_select %p2674, %s15, 1
        %s2676 = smul.addr %s2675, 32
        %s2677 = smul.addr %s2676, 8
        %s2678 = scalar_lea.vmem %s3, %s2677
      $region44: #{_spos_forward_jit.2} parent=39 // pred_fallthru
        _
    $region40: #{_spos_forward_jit.2} parent=5 // pred_fallthru
      _
  $region6: #{_spos_forward_jit.2} parent=0 // loop_footer
    %s13 = sadd.s32 1, %s9
  $region7: #{_spos_forward_jit.2} parent=0 // loop_footer_branch
    %8 = sbr.rel target = $region3
  $region8: #{_spos_forward_jit.2} parent=0 // loop_exit
    _

</llo_original>
